<compile_context>
chip_gen: v6e
topology: v6e:2x2x1
jax: 0.10.0
libtpu: 0.0.40
codegen_flags: <defaults>
</compile_context>

<pallas_src>
import functools

import jax
import jax.numpy as jnp
from jax.experimental import pallas as pl
from jax.experimental.pallas import tpu as pltpu

N_IN = 32 * 32 * 3   # 3072
H1 = 512
H2 = 256
N_OUT = 43
N_OUT_PAD = 128      # lane-dense classifier head; sliced back to 43 outside
MAX_TB = 256         # batch-tile rows (multiple of 16 for bf16 sublane packing)


def _mlp_kernel(x_ref, w1_ref, b1_ref, w2_ref, b2_ref, w3_ref, b3_ref, o_ref):
    # fc1 + relu  (bf16 operands, f32 accumulation)
    h1 = jnp.dot(x_ref[...], w1_ref[...], preferred_element_type=jnp.float32)
    h1 = jnp.maximum(h1 + b1_ref[...], 0.0).astype(jnp.bfloat16)
    # rbf_layer (a plain Linear in the reference module) + relu
    h2 = jnp.dot(h1, w2_ref[...], preferred_element_type=jnp.float32)
    h2 = jnp.maximum(h2 + b2_ref[...], 0.0).astype(jnp.bfloat16)
    # fc2 (no activation)
    out = jnp.dot(h2, w3_ref[...], preferred_element_type=jnp.float32)
    o_ref[...] = (out + b3_ref[...]).astype(o_ref.dtype)


def prepare_params(params):
    """One-time parameter prep (hoisted out of the forward hot path):
    cast weights to bf16, reshape biases to (1, H) f32, and zero-pad the
    classifier head to N_OUT_PAD lanes."""
    w1, b1, w2, b2, w3, b3 = params
    w3p = jnp.zeros((H2, N_OUT_PAD), jnp.float32).at[:, :N_OUT].set(w3)
    b3p = jnp.zeros((1, N_OUT_PAD), jnp.float32).at[:, :N_OUT].set(b3)
    return (
        w1.astype(jnp.bfloat16),
        b1.reshape(1, H1).astype(jnp.float32),
        w2.astype(jnp.bfloat16),
        b2.reshape(1, H2).astype(jnp.float32),
        w3p.astype(jnp.bfloat16),
        b3p,
    )


def _round_up(n, m):
    return ((n + m - 1) // m) * m


@functools.partial(jax.jit, static_argnames=())
def rbf_classifier_forward(x_nchw, prepared):
    """x_nchw: (B, 3, 32, 32) float32 -> logits (B, 43) float32."""
    w1, b1, w2, b2, w3p, b3p = prepared
    B = x_nchw.shape[0]
    x = x_nchw.reshape(B, N_IN)  # row-major flatten, same as torch .view

    # Batch tile: multiple of 16 sublanes (bf16), capped at MAX_TB.
    TB = MAX_TB if B >= MAX_TB else _round_up(max(B, 1), 16)
    B_pad = _round_up(B, TB)
    if B_pad != B:
        x = jnp.pad(x, ((0, B_pad - B), (0, 0)))
    x = x.astype(jnp.bfloat16)
    n_tiles = B_pad // TB

    bytes_accessed = (
        B_pad * N_IN * 2                       # x (bf16)
        + (N_IN * H1 + H1 * H2 + H2 * N_OUT_PAD) * 2   # weights (bf16)
        + (H1 + H2 + N_OUT_PAD) * 4            # biases (f32)
        + B_pad * N_OUT_PAD * 4                # output (f32)
    )
    cost = pl.CostEstimate(
        flops=2 * B_pad * (N_IN * H1 + H1 * H2 + H2 * N_OUT_PAD),
        transcendentals=0,
        bytes_accessed=bytes_accessed,
    )

    batch_spec = lambda shape: pl.BlockSpec(shape, lambda i: (i, 0))
    const_spec = lambda shape: pl.BlockSpec(shape, lambda i: (0, 0))

    out_padded = pl.pallas_call(
        _mlp_kernel,
        out_shape=jax.ShapeDtypeStruct((B_pad, N_OUT_PAD), jnp.float32),
        grid=(n_tiles,),
        in_specs=[
            batch_spec((TB, N_IN)),          # x tile, pipelined over the grid
            const_spec((N_IN, H1)),          # weights: resident across tiles
            const_spec((1, H1)),
            const_spec((H1, H2)),
            const_spec((1, H2)),
            const_spec((H2, N_OUT_PAD)),
            const_spec((1, N_OUT_PAD)),
        ],
        out_specs=batch_spec((TB, N_OUT_PAD)),
        compiler_params=pltpu.CompilerParams(
            dimension_semantics=("parallel",),     # lets v7x use both TCs
            vmem_limit_bytes=32 * 1024 * 1024,     # fits v7x's 64 MiB VMEM
        ),
        cost_estimate=cost,
    )(x, w1, b1, w2, b2, w3p, b3p)

    return out_padded[:B, :N_OUT]


def init_params(key):
    """Deterministic init mirroring nn.Linear shapes (stored transposed: (in, out))."""
    ks = jax.random.split(key, 6)

    def lin(kw, kb, fan_in, fan_out):
        bound = 1.0 / jnp.sqrt(fan_in)
        w = jax.random.uniform(kw, (fan_in, fan_out), jnp.float32, -bound, bound)
        b = jax.random.uniform(kb, (fan_out,), jnp.float32, -bound, bound)
        return w, b

    w1, b1 = lin(ks[0], ks[1], N_IN, H1)
    w2, b2 = lin(ks[2], ks[3], H1, H2)
    w3, b3 = lin(ks[4], ks[5], H2, N_OUT)
    return (w1, b1, w2, b2, w3, b3)


if __name__ == "__main__":
    key = jax.random.PRNGKey(0)
    k_x, k_p = jax.random.split(key)
    x = jax.random.normal(k_x, (2, 3, 32, 32), jnp.float32)  # NCHW like PyTorch
    params = init_params(k_p)
    prepared = prepare_params(params)   # one-time: bf16 cast + head padding

    logits = rbf_classifier_forward(x, prepared)
    jax.block_until_ready(logits)

    # Pure-JAX f32 reference check (kernel runs in bf16 with f32 accumulation,
    # so the tolerance is loosened accordingly).
    w1, b1, w2, b2, w3, b3 = params
    xf = x.reshape(x.shape[0], -1)
    ref = jnp.maximum(xf @ w1 + b1, 0.0)
    ref = jnp.maximum(ref @ w2 + b2, 0.0)
    ref = ref @ w3 + b3

    assert logits.shape == (2, 43)
    assert jnp.allclose(logits, ref, atol=5e-2, rtol=5e-2), (
        float(jnp.max(jnp.abs(logits - ref)))
    )

    print("KERNEL_OK")
</pallas_src>

<mosaic_0001>
module attributes {stable_mosaic.version = 11 : i64} {
  func.func @_mlp_kernel(%arg0: i32, %arg1: memref<16x3072xbf16, #tpu.memory_space<vmem>>, %arg2: memref<3072x512xbf16, #tpu.memory_space<vmem>>, %arg3: memref<1x512xf32, #tpu.memory_space<vmem>>, %arg4: memref<512x256xbf16, #tpu.memory_space<vmem>>, %arg5: memref<1x256xf32, #tpu.memory_space<vmem>>, %arg6: memref<256x128xbf16, #tpu.memory_space<vmem>>, %arg7: memref<1x128xf32, #tpu.memory_space<vmem>>, %arg8: memref<16x128xf32, #tpu.memory_space<vmem>>) attributes {dimension_semantics = [#tpu.dimension_semantics<parallel>], iteration_bounds = array<i64: 1>, scalar_prefetch = 0 : i64, scratch_operands = 0 : i64, tpu.core_type = #tpu.core_type<tc>, window_params = [{transform_indices = @transform_0, window_bounds = array<i64: 16, 3072>}, {pipeline_mode = #tpu.pipeline_mode<synchronous>, transform_indices = @transform_1, window_bounds = array<i64: 3072, 512>}, {pipeline_mode = #tpu.pipeline_mode<synchronous>, transform_indices = @transform_2, window_bounds = array<i64: 1, 512>}, {pipeline_mode = #tpu.pipeline_mode<synchronous>, transform_indices = @transform_3, window_bounds = array<i64: 512, 256>}, {pipeline_mode = #tpu.pipeline_mode<synchronous>, transform_indices = @transform_4, window_bounds = array<i64: 1, 256>}, {pipeline_mode = #tpu.pipeline_mode<synchronous>, transform_indices = @transform_5, window_bounds = array<i64: 256, 128>}, {pipeline_mode = #tpu.pipeline_mode<synchronous>, transform_indices = @transform_6, window_bounds = array<i64: 1, 128>}, {transform_indices = @transform_7, window_bounds = array<i64: 16, 128>}]} {
    %c0 = arith.constant 0 : index
    %c0_0 = arith.constant 0 : index
    %0 = vector.load %arg1[%c0, %c0_0] : memref<16x3072xbf16, #tpu.memory_space<vmem>>, vector<16x3072xbf16>
    %c0_1 = arith.constant 0 : index
    %c0_2 = arith.constant 0 : index
    %1 = vector.load %arg2[%c0_1, %c0_2] : memref<3072x512xbf16, #tpu.memory_space<vmem>>, vector<3072x512xbf16>
    %cst = arith.constant dense<0.000000e+00> : vector<16x512xf32>
    %2 = tpu.matmul %0, %1, %cst {dimension_numbers = #tpu.dot_dimension_numbers<[1], [0], [0], [1], [0, 0, 1, 1], [], []>} : vector<16x3072xbf16>, vector<3072x512xbf16>, vector<16x512xf32> -> vector<16x512xf32>
    %c0_3 = arith.constant 0 : index
    %c0_4 = arith.constant 0 : index
    %3 = vector.load %arg3[%c0_3, %c0_4] : memref<1x512xf32, #tpu.memory_space<vmem>>, vector<1x512xf32>
    %4 = vector.broadcast %3 : vector<1x512xf32> to vector<16x512xf32>
    %5 = arith.addf %2, %4 : vector<16x512xf32>
    %cst_5 = arith.constant 0.000000e+00 : f32
    %6 = vector.broadcast %cst_5 : f32 to vector<16x512xf32>
    %7 = arith.maximumf %5, %6 : vector<16x512xf32>
    %8 = arith.truncf %7 : vector<16x512xf32> to vector<16x512xbf16>
    %c0_6 = arith.constant 0 : index
    %c0_7 = arith.constant 0 : index
    %9 = vector.load %arg4[%c0_6, %c0_7] : memref<512x256xbf16, #tpu.memory_space<vmem>>, vector<512x256xbf16>
    %cst_8 = arith.constant dense<0.000000e+00> : vector<16x256xf32>
    %10 = tpu.matmul %8, %9, %cst_8 {dimension_numbers = #tpu.dot_dimension_numbers<[1], [0], [0], [1], [0, 0, 1, 1], [], []>} : vector<16x512xbf16>, vector<512x256xbf16>, vector<16x256xf32> -> vector<16x256xf32>
    %c0_9 = arith.constant 0 : index
    %c0_10 = arith.constant 0 : index
    %11 = vector.load %arg5[%c0_9, %c0_10] : memref<1x256xf32, #tpu.memory_space<vmem>>, vector<1x256xf32>
    %12 = vector.broadcast %11 : vector<1x256xf32> to vector<16x256xf32>
    %13 = arith.addf %10, %12 : vector<16x256xf32>
    %cst_11 = arith.constant 0.000000e+00 : f32
    %14 = vector.broadcast %cst_11 : f32 to vector<16x256xf32>
    %15 = arith.maximumf %13, %14 : vector<16x256xf32>
    %16 = arith.truncf %15 : vector<16x256xf32> to vector<16x256xbf16>
    %c0_12 = arith.constant 0 : index
    %c0_13 = arith.constant 0 : index
    %17 = vector.load %arg6[%c0_12, %c0_13] : memref<256x128xbf16, #tpu.memory_space<vmem>>, vector<256x128xbf16>
    %cst_14 = arith.constant dense<0.000000e+00> : vector<16x128xf32>
    %18 = tpu.matmul %16, %17, %cst_14 {dimension_numbers = #tpu.dot_dimension_numbers<[1], [0], [0], [1], [0, 0, 1, 1], [], []>} : vector<16x256xbf16>, vector<256x128xbf16>, vector<16x128xf32> -> vector<16x128xf32>
    %c0_15 = arith.constant 0 : index
    %c0_16 = arith.constant 0 : index
    %19 = vector.load %arg7[%c0_15, %c0_16] : memref<1x128xf32, #tpu.memory_space<vmem>>, vector<1x128xf32>
    %20 = vector.broadcast %19 : vector<1x128xf32> to vector<16x128xf32>
    %21 = arith.addf %18, %20 : vector<16x128xf32>
    %c0_17 = arith.constant 0 : index
    %c0_18 = arith.constant 0 : index
    %22 = vector.load %arg8[%c0_17, %c0_18] : memref<16x128xf32, #tpu.memory_space<vmem>>, vector<16x128xf32>
    tpu.vector_store %arg8[%c0_17, %c0_18], %21 {strides = array<i32>} : memref<16x128xf32, #tpu.memory_space<vmem>>, vector<16x128xf32>,
    return
  }
  func.func @transform_0(%arg0: i32) -> (i32, i32) {
    %c0_i32 = arith.constant 0 : i32
    %c0_i32_0 = arith.constant 0 : i32
    return %arg0, %c0_i32 : i32, i32
  }
  func.func @transform_1(%arg0: i32) -> (i32, i32) {
    %c0_i32 = arith.constant 0 : i32
    %c0_i32_0 = arith.constant 0 : i32
    %c0_i32_1 = arith.constant 0 : i32
    return %c0_i32, %c0_i32_0 : i32, i32
  }
  func.func @transform_2(%arg0: i32) -> (i32, i32) {
    %c0_i32 = arith.constant 0 : i32
    %c0_i32_0 = arith.constant 0 : i32
    %c0_i32_1 = arith.constant 0 : i32
    return %c0_i32, %c0_i32_0 : i32, i32
  }
  func.func @transform_3(%arg0: i32) -> (i32, i32) {
    %c0_i32 = arith.constant 0 : i32
    %c0_i32_0 = arith.constant 0 : i32
    %c0_i32_1 = arith.constant 0 : i32
    return %c0_i32, %c0_i32_0 : i32, i32
  }
  func.func @transform_4(%arg0: i32) -> (i32, i32) {
    %c0_i32 = arith.constant 0 : i32
    %c0_i32_0 = arith.constant 0 : i32
    %c0_i32_1 = arith.constant 0 : i32
    return %c0_i32, %c0_i32_0 : i32, i32
  }
  func.func @transform_5(%arg0: i32) -> (i32, i32) {
    %c0_i32 = arith.constant 0 : i32
    %c0_i32_0 = arith.constant 0 : i32
    %c0_i32_1 = arith.constant 0 : i32
    return %c0_i32, %c0_i32_0 : i32, i32
  }
  func.func @transform_6(%arg0: i32) -> (i32, i32) {
    %c0_i32 = arith.constant 0 : i32
    %c0_i32_0 = arith.constant 0 : i32
    %c0_i32_1 = arith.constant 0 : i32
    return %c0_i32, %c0_i32_0 : i32, i32
  }
  func.func @transform_7(%arg0: i32) -> (i32, i32) {
    %c0_i32 = arith.constant 0 : i32
    %c0_i32_0 = arith.constant 0 : i32
    return %arg0, %c0_i32 : i32, i32
  }
}

</mosaic_0001>

<llo_original>
// kernel: rbf_classifier_forward.1
$region0: #{rbf_classifier_forward.1}
  #allocation0 [shape = 'u32[]', space=smem, size = 0x4, offset = 0x4, fixed_abs, tag = 'smem constant byte address 0x4 - core index']
  #allocation1 [shape = 'u32[144,128]{1,0:T(1,128)}', space=vmem, size = 0x12000, scoped, tag = 'internal scratch']
  %s0 = inlined_call_operand.vmem [shape: bf16[16,3072], index: 0, kind: input, shape index: {}]
  %s1 = inlined_call_operand.hbm [shape: bf16[3072,512], index: 1, kind: input, shape index: {}]
  %s2 = inlined_call_operand.hbm [shape: f32[1,512], index: 2, kind: input, shape index: {}]
  %s3 = inlined_call_operand.hbm [shape: bf16[512,256], index: 3, kind: input, shape index: {}]
  %s4 = inlined_call_operand.hbm [shape: f32[1,256], index: 4, kind: input, shape index: {}]
  %s5 = inlined_call_operand.hbm [shape: bf16[256,128], index: 5, kind: input, shape index: {}]
  %s6 = inlined_call_operand.hbm [shape: f32[1,128], index: 6, kind: input, shape index: {}]
  %s7 = inlined_call_operand.vmem [shape: f32[16,128], index: 7, kind: output, shape index: {}]
  %s8 = sld [smem:[#allocation0]]
  $region62: #{rbf_classifier_forward.1} parent=0
    _
  %s10 = ssub.s32 1, %s8
  %s11 = scalar_select 0, %s10, %s8
  $region1: #{rbf_classifier_forward.1} parent=0
    #allocation2 [shape = 'u8[3145728]{0}', space=vmem, size = 0x300000, scoped, tag = 'input window, operand 1, single buffered']
    #allocation3 [shape = 's32[1]{0}', space=sflag, size = 0x4, scoped, tag = 'scoped memory for rbf_classifier_forward.1']
    #allocation4 [shape = 'u8[2048]{0}', space=vmem, size = 0x800, scoped, tag = 'input window, operand 2, single buffered']
    #allocation5 [shape = 's32[1]{0}', space=sflag, size = 0x4, scoped, tag = 'scoped memory for rbf_classifier_forward.1']
    #allocation6 [shape = 'u8[262144]{0}', space=vmem, size = 0x40000, scoped, tag = 'input window, operand 3, single buffered']
    #allocation7 [shape = 'u8[1024]{0}', space=vmem, size = 0x400, scoped, tag = 'input window, operand 4, single buffered']
    #allocation8 [shape = 's32[1]{0}', space=sflag, size = 0x4, scoped, tag = 'scoped memory for rbf_classifier_forward.1']
    #allocation9 [shape = 'u8[65536]{0}', space=vmem, size = 0x10000, scoped, tag = 'input window, operand 5, single buffered']
    #allocation10 [shape = 'u8[512]{0}', space=vmem, size = 0x400, scoped, tag = 'input window, operand 6, single buffered']
    #allocation11 [shape = 's32[1]{0}', space=sflag, size = 0x4, scoped, tag = 'scoped memory for rbf_classifier_forward.1']
    %12 = vsyncpa [#allocation3], 0
    %13 = vsyncpa [#allocation5], 0
    %14 = vsyncpa [#allocation8], 0
    %15 = vsyncpa [#allocation11], 0
    // Predicated region
    $region2: #{rbf_classifier_forward.1} parent=1 // pred_check
      _
    $region3: #{rbf_classifier_forward.1} parent=1 // pred_check_branch
      %17 = sbr.rel (0) target = $region5
    $region4: #{rbf_classifier_forward.1} parent=1 // pred_region
      _
    $region5: #{rbf_classifier_forward.1} parent=1 // pred_fallthru
      _
    // Predicated region
    $region6: #{rbf_classifier_forward.1} parent=1 // pred_check
      _
    $region7: #{rbf_classifier_forward.1} parent=1 // pred_check_branch
      %19 = sbr.rel (0) target = $region9
    $region8: #{rbf_classifier_forward.1} parent=1 // pred_region
      %s21 = ssub.s32 98304, 98304
      %22 = vsyncadd [#allocation3], %s21
      %s23 = sshll.u32 [#allocation2], 4
      %s24 = int_to_ptr.vmem [resolvable:$true] %s23
      %29 = dma.hbm_to_vmem [thread:$0]  %s1, 98304, %s24, [#allocation3], 256, 256, 16
    $region9: #{rbf_classifier_forward.1} parent=1 // pred_fallthru
      _
    // Predicated region
    $region10: #{rbf_classifier_forward.1} parent=1 // pred_check
      _
    $region11: #{rbf_classifier_forward.1} parent=1 // pred_check_branch
      %31 = sbr.rel (0) target = $region13
    $region12: #{rbf_classifier_forward.1} parent=1 // pred_region
      %s33 = ssub.s32 64, 64
      %34 = vsyncadd [#allocation5], %s33
      %s36 = sshll.u32 [#allocation4], 4
      %s37 = int_to_ptr.vmem [resolvable:$true] %s36
      %39 = dma.hbm_to_vmem [thread:$0]  %s2, 64, %s37, [#allocation5]
    $region13: #{rbf_classifier_forward.1} parent=1 // pred_fallthru
      _
    // Predicated region
    $region14: #{rbf_classifier_forward.1} parent=1 // pred_check
      _
    $region15: #{rbf_classifier_forward.1} parent=1 // pred_check_branch
      %41 = sbr.rel (0) target = $region17
    $region16: #{rbf_classifier_forward.1} parent=1 // pred_region
      %s43 = ssub.s32 8192, 8192
      %44 = vsyncadd [#allocation5], %s43
      %s45 = sshll.u32 [#allocation6], 4
      %s46 = int_to_ptr.vmem [resolvable:$true] %s45
      %51 = dma.hbm_to_vmem [thread:$0]  %s3, 8192, %s46, [#allocation5], 128, 128, 8
    $region17: #{rbf_classifier_forward.1} parent=1 // pred_fallthru
      _
    // Predicated region
    $region18: #{rbf_classifier_forward.1} parent=1 // pred_check
      _
    $region19: #{rbf_classifier_forward.1} parent=1 // pred_check_branch
      %53 = sbr.rel (0) target = $region21
    $region20: #{rbf_classifier_forward.1} parent=1 // pred_region
      %s55 = ssub.s32 32, 32
      %56 = vsyncadd [#allocation8], %s55
      %s58 = sshll.u32 [#allocation7], 4
      %s59 = int_to_ptr.vmem [resolvable:$true] %s58
      %61 = dma.hbm_to_vmem [thread:$0]  %s4, 32, %s59, [#allocation8]
    $region21: #{rbf_classifier_forward.1} parent=1 // pred_fallthru
      _
    // Predicated region
    $region22: #{rbf_classifier_forward.1} parent=1 // pred_check
      _
    $region23: #{rbf_classifier_forward.1} parent=1 // pred_check_branch
      %63 = sbr.rel (0) target = $region25
    $region24: #{rbf_classifier_forward.1} parent=1 // pred_region
      %s65 = ssub.s32 2048, 2048
      %66 = vsyncadd [#allocation8], %s65
      %s67 = sshll.u32 [#allocation9], 4
      %s68 = int_to_ptr.vmem [resolvable:$true] %s67
      %73 = dma.hbm_to_vmem [thread:$0]  %s5, 2048, %s68, [#allocation8], 64, 64, 4
    $region25: #{rbf_classifier_forward.1} parent=1 // pred_fallthru
      _
    // Predicated region
    $region26: #{rbf_classifier_forward.1} parent=1 // pred_check
      _
    $region27: #{rbf_classifier_forward.1} parent=1 // pred_check_branch
      %75 = sbr.rel (0) target = $region29
    $region28: #{rbf_classifier_forward.1} parent=1 // pred_region
      %s77 = ssub.s32 16, 16
      %78 = vsyncadd [#allocation11], %s77
      %s80 = sshll.u32 [#allocation10], 4
      %s81 = int_to_ptr.vmem [resolvable:$true] %s80
      %83 = dma.hbm_to_vmem [thread:$0]  %s6, 16, %s81, [#allocation11]
    $region29: #{rbf_classifier_forward.1} parent=1 // pred_fallthru
      _
    // Predicated region
    $region30: #{rbf_classifier_forward.1} parent=1 // pred_check
      _
    $region31: #{rbf_classifier_forward.1} parent=1 // pred_check_branch
      %85 = sbr.rel (0) target = $region33
    $region32: #{rbf_classifier_forward.1} parent=1 // pred_region
      %86 = dma.done [#allocation3], 98304
    $region33: #{rbf_classifier_forward.1} parent=1 // pred_fallthru
      _
    // Predicated region
    $region34: #{rbf_classifier_forward.1} parent=1 // pred_check
      _
    $region35: #{rbf_classifier_forward.1} parent=1 // pred_check_branch
      %88 = sbr.rel (0) target = $region37
    $region36: #{rbf_classifier_forward.1} parent=1 // pred_region
      %89 = dma.done [#allocation5], 64
    $region37: #{rbf_classifier_forward.1} parent=1 // pred_fallthru
      _
    // Predicated region
    $region38: #{rbf_classifier_forward.1} parent=1 // pred_check
      _
    $region39: #{rbf_classifier_forward.1} parent=1 // pred_check_branch
      %91 = sbr.rel (0) target = $region41
    $region40: #{rbf_classifier_forward.1} parent=1 // pred_region
      %92 = dma.done [#allocation5], 8192
    $region41: #{rbf_classifier_forward.1} parent=1 // pred_fallthru
      _
    // Predicated region
    $region42: #{rbf_classifier_forward.1} parent=1 // pred_check
      _
    $region43: #{rbf_classifier_forward.1} parent=1 // pred_check_branch
      %94 = sbr.rel (0) target = $region45
    $region44: #{rbf_classifier_forward.1} parent=1 // pred_region
      %95 = dma.done [#allocation8], 32
    $region45: #{rbf_classifier_forward.1} parent=1 // pred_fallthru
      _
    // Predicated region
    $region46: #{rbf_classifier_forward.1} parent=1 // pred_check
      _
    $region47: #{rbf_classifier_forward.1} parent=1 // pred_check_branch
      %97 = sbr.rel (0) target = $region49
    $region48: #{rbf_classifier_forward.1} parent=1 // pred_region
      %98 = dma.done [#allocation8], 2048
    $region49: #{rbf_classifier_forward.1} parent=1 // pred_fallthru
      _
    // Predicated region
    $region50: #{rbf_classifier_forward.1} parent=1 // pred_check
      _
    $region51: #{rbf_classifier_forward.1} parent=1 // pred_check_branch
      %100 = sbr.rel (0) target = $region53
    $region52: #{rbf_classifier_forward.1} parent=1 // pred_region
      %101 = dma.done [#allocation11], 16
    $region53: #{rbf_classifier_forward.1} parent=1 // pred_fallthru
      _
    %v103 = vld [vmem:[%s0] sm:$0xff]
    %v104 = vld [vmem:[%s0 + $0x8] sm:$0xff]
    %v105 = vld [vmem:[%s0 + $0x10] sm:$0xff]
    %v106 = vld [vmem:[%s0 + $0x18] sm:$0xff]
    %v107 = vld [vmem:[%s0 + $0x20] sm:$0xff]
    %v108 = vld [vmem:[%s0 + $0x28] sm:$0xff]
    %v109 = vld [vmem:[%s0 + $0x30] sm:$0xff]
    %v110 = vld [vmem:[%s0 + $0x38] sm:$0xff]
    %v111 = vld [vmem:[%s0 + $0x40] sm:$0xff]
    %v112 = vld [vmem:[%s0 + $0x48] sm:$0xff]
    %v113 = vld [vmem:[%s0 + $0x50] sm:$0xff]
    %v114 = vld [vmem:[%s0 + $0x58] sm:$0xff]
    %v115 = vld [vmem:[%s0 + $0x60] sm:$0xff]
    %v116 = vld [vmem:[%s0 + $0x68] sm:$0xff]
    %v117 = vld [vmem:[%s0 + $0x70] sm:$0xff]
    %v118 = vld [vmem:[%s0 + $0x78] sm:$0xff]
    %v119 = vld [vmem:[%s0 + $0x80] sm:$0xff]
    %v120 = vld [vmem:[%s0 + $0x88] sm:$0xff]
    %v121 = vld [vmem:[%s0 + $0x90] sm:$0xff]
    %v122 = vld [vmem:[%s0 + $0x98] sm:$0xff]
    %v123 = vld [vmem:[%s0 + $0xa0] sm:$0xff]
    %v124 = vld [vmem:[%s0 + $0xa8] sm:$0xff]
    %v125 = vld [vmem:[%s0 + $0xb0] sm:$0xff]
    %v126 = vld [vmem:[%s0 + $0xb8] sm:$0xff]
    %v127 = vld [vmem:[#allocation2] sm:$0xff]
    %v128 = vld [vmem:[#allocation2 + $0x8] sm:$0xff]
    %v129 = vld [vmem:[#allocation2 + $0x10] sm:$0xff]
    %v130 = vld [vmem:[#allocation2 + $0x18] sm:$0xff]
    %v131 = vld [vmem:[#allocation2 + $0x20] sm:$0xff]
    %v132 = vld [vmem:[#allocation2 + $0x28] sm:$0xff]
    %v133 = vld [vmem:[#allocation2 + $0x30] sm:$0xff]
    %v134 = vld [vmem:[#allocation2 + $0x38] sm:$0xff]
    %v135 = vld [vmem:[#allocation2 + $0x40] sm:$0xff]
    %v136 = vld [vmem:[#allocation2 + $0x48] sm:$0xff]
    %v137 = vld [vmem:[#allocation2 + $0x50] sm:$0xff]
    %v138 = vld [vmem:[#allocation2 + $0x58] sm:$0xff]
    %v139 = vld [vmem:[#allocation2 + $0x60] sm:$0xff]
    %v140 = vld [vmem:[#allocation2 + $0x68] sm:$0xff]
    %v141 = vld [vmem:[#allocation2 + $0x70] sm:$0xff]
    %v142 = vld [vmem:[#allocation2 + $0x78] sm:$0xff]
    %v143 = vld [vmem:[#allocation2 + $0x80] sm:$0xff]
    %v144 = vld [vmem:[#allocation2 + $0x88] sm:$0xff]
    %v145 = vld [vmem:[#allocation2 + $0x90] sm:$0xff]
    %v146 = vld [vmem:[#allocation2 + $0x98] sm:$0xff]
    %v147 = vld [vmem:[#allocation2 + $0xa0] sm:$0xff]
    %v148 = vld [vmem:[#allocation2 + $0xa8] sm:$0xff]
    %v149 = vld [vmem:[#allocation2 + $0xb0] sm:$0xff]
    %v150 = vld [vmem:[#allocation2 + $0xb8] sm:$0xff]
    %v151 = vld [vmem:[#allocation2 + $0xc0] sm:$0xff]
    %v152 = vld [vmem:[#allocation2 + $0xc8] sm:$0xff]
    %v153 = vld [vmem:[#allocation2 + $0xd0] sm:$0xff]
    %v154 = vld [vmem:[#allocation2 + $0xd8] sm:$0xff]
    %v155 = vld [vmem:[#allocation2 + $0xe0] sm:$0xff]
    %v156 = vld [vmem:[#allocation2 + $0xe8] sm:$0xff]
    %v157 = vld [vmem:[#allocation2 + $0xf0] sm:$0xff]
    %v158 = vld [vmem:[#allocation2 + $0xf8] sm:$0xff]
    %v159 = vld [vmem:[#allocation2 + $0x100] sm:$0xff]
    %v160 = vld [vmem:[#allocation2 + $0x108] sm:$0xff]
    %v161 = vld [vmem:[#allocation2 + $0x110] sm:$0xff]
    %v162 = vld [vmem:[#allocation2 + $0x118] sm:$0xff]
    %v163 = vld [vmem:[#allocation2 + $0x120] sm:$0xff]
    %v164 = vld [vmem:[#allocation2 + $0x128] sm:$0xff]
    %v165 = vld [vmem:[#allocation2 + $0x130] sm:$0xff]
    %v166 = vld [vmem:[#allocation2 + $0x138] sm:$0xff]
    %v167 = vld [vmem:[#allocation2 + $0x140] sm:$0xff]
    %v168 = vld [vmem:[#allocation2 + $0x148] sm:$0xff]
    %v169 = vld [vmem:[#allocation2 + $0x150] sm:$0xff]
    %v170 = vld [vmem:[#allocation2 + $0x158] sm:$0xff]
    %v171 = vld [vmem:[#allocation2 + $0x160] sm:$0xff]
    %v172 = vld [vmem:[#allocation2 + $0x168] sm:$0xff]
    %v173 = vld [vmem:[#allocation2 + $0x170] sm:$0xff]
    %v174 = vld [vmem:[#allocation2 + $0x178] sm:$0xff]
    %v175 = vld [vmem:[#allocation2 + $0x180] sm:$0xff]
    %v176 = vld [vmem:[#allocation2 + $0x188] sm:$0xff]
    %v177 = vld [vmem:[#allocation2 + $0x190] sm:$0xff]
    %v178 = vld [vmem:[#allocation2 + $0x198] sm:$0xff]
    %v179 = vld [vmem:[#allocation2 + $0x1a0] sm:$0xff]
    %v180 = vld [vmem:[#allocation2 + $0x1a8] sm:$0xff]
    %v181 = vld [vmem:[#allocation2 + $0x1b0] sm:$0xff]
    %v182 = vld [vmem:[#allocation2 + $0x1b8] sm:$0xff]
    %v183 = vld [vmem:[#allocation2 + $0x1c0] sm:$0xff]
    %v184 = vld [vmem:[#allocation2 + $0x1c8] sm:$0xff]
    %v185 = vld [vmem:[#allocation2 + $0x1d0] sm:$0xff]
    %v186 = vld [vmem:[#allocation2 + $0x1d8] sm:$0xff]
    %v187 = vld [vmem:[#allocation2 + $0x1e0] sm:$0xff]
    %v188 = vld [vmem:[#allocation2 + $0x1e8] sm:$0xff]
    %v189 = vld [vmem:[#allocation2 + $0x1f0] sm:$0xff]
    %v190 = vld [vmem:[#allocation2 + $0x1f8] sm:$0xff]
    %v191 = vld [vmem:[#allocation2 + $0x200] sm:$0xff]
    %v192 = vld [vmem:[#allocation2 + $0x208] sm:$0xff]
    %v193 = vld [vmem:[#allocation2 + $0x210] sm:$0xff]
    %v194 = vld [vmem:[#allocation2 + $0x218] sm:$0xff]
    %v195 = vld [vmem:[#allocation2 + $0x220] sm:$0xff]
    %v196 = vld [vmem:[#allocation2 + $0x228] sm:$0xff]
    %v197 = vld [vmem:[#allocation2 + $0x230] sm:$0xff]
    %v198 = vld [vmem:[#allocation2 + $0x238] sm:$0xff]
    %v199 = vld [vmem:[#allocation2 + $0x240] sm:$0xff]
    %v200 = vld [vmem:[#allocation2 + $0x248] sm:$0xff]
    %v201 = vld [vmem:[#allocation2 + $0x250] sm:$0xff]
    %v202 = vld [vmem:[#allocation2 + $0x258] sm:$0xff]
    %v203 = vld [vmem:[#allocation2 + $0x260] sm:$0xff]
    %v204 = vld [vmem:[#allocation2 + $0x268] sm:$0xff]
    %v205 = vld [vmem:[#allocation2 + $0x270] sm:$0xff]
    %v206 = vld [vmem:[#allocation2 + $0x278] sm:$0xff]
    %v207 = vld [vmem:[#allocation2 + $0x280] sm:$0xff]
    %v208 = vld [vmem:[#allocation2 + $0x288] sm:$0xff]
    %v209 = vld [vmem:[#allocation2 + $0x290] sm:$0xff]
    %v210 = vld [vmem:[#allocation2 + $0x298] sm:$0xff]
    %v211 = vld [vmem:[#allocation2 + $0x2a0] sm:$0xff]
    %v212 = vld [vmem:[#allocation2 + $0x2a8] sm:$0xff]
    %v213 = vld [vmem:[#allocation2 + $0x2b0] sm:$0xff]
    %v214 = vld [vmem:[#allocation2 + $0x2b8] sm:$0xff]
    %v215 = vld [vmem:[#allocation2 + $0x2c0] sm:$0xff]
    %v216 = vld [vmem:[#allocation2 + $0x2c8] sm:$0xff]
    %v217 = vld [vmem:[#allocation2 + $0x2d0] sm:$0xff]
    %v218 = vld [vmem:[#allocation2 + $0x2d8] sm:$0xff]
    %v219 = vld [vmem:[#allocation2 + $0x2e0] sm:$0xff]
    %v220 = vld [vmem:[#allocation2 + $0x2e8] sm:$0xff]
    %v221 = vld [vmem:[#allocation2 + $0x2f0] sm:$0xff]
    %v222 = vld [vmem:[#allocation2 + $0x2f8] sm:$0xff]
    %v223 = vld [vmem:[#allocation2 + $0x300] sm:$0xff]
    %v224 = vld [vmem:[#allocation2 + $0x308] sm:$0xff]
    %v225 = vld [vmem:[#allocation2 + $0x310] sm:$0xff]
    %v226 = vld [vmem:[#allocation2 + $0x318] sm:$0xff]
    %v227 = vld [vmem:[#allocation2 + $0x320] sm:$0xff]
    %v228 = vld [vmem:[#allocation2 + $0x328] sm:$0xff]
    %v229 = vld [vmem:[#allocation2 + $0x330] sm:$0xff]
    %v230 = vld [vmem:[#allocation2 + $0x338] sm:$0xff]
    %v231 = vld [vmem:[#allocation2 + $0x340] sm:$0xff]
    %v232 = vld [vmem:[#allocation2 + $0x348] sm:$0xff]
    %v233 = vld [vmem:[#allocation2 + $0x350] sm:$0xff]
    %v234 = vld [vmem:[#allocation2 + $0x358] sm:$0xff]
    %v235 = vld [vmem:[#allocation2 + $0x360] sm:$0xff]
    %v236 = vld [vmem:[#allocation2 + $0x368] sm:$0xff]
    %v237 = vld [vmem:[#allocation2 + $0x370] sm:$0xff]
    %v238 = vld [vmem:[#allocation2 + $0x378] sm:$0xff]
    %v239 = vld [vmem:[#allocation2 + $0x380] sm:$0xff]
    %v240 = vld [vmem:[#allocation2 + $0x388] sm:$0xff]
    %v241 = vld [vmem:[#allocation2 + $0x390] sm:$0xff]
    %v242 = vld [vmem:[#allocation2 + $0x398] sm:$0xff]
    %v243 = vld [vmem:[#allocation2 + $0x3a0] sm:$0xff]
    %v244 = vld [vmem:[#allocation2 + $0x3a8] sm:$0xff]
    %v245 = vld [vmem:[#allocation2 + $0x3b0] sm:$0xff]
    %v246 = vld [vmem:[#allocation2 + $0x3b8] sm:$0xff]
    %v247 = vld [vmem:[#allocation2 + $0x3c0] sm:$0xff]
    %v248 = vld [vmem:[#allocation2 + $0x3c8] sm:$0xff]
    %v249 = vld [vmem:[#allocation2 + $0x3d0] sm:$0xff]
    %v250 = vld [vmem:[#allocation2 + $0x3d8] sm:$0xff]
    %v251 = vld [vmem:[#allocation2 + $0x3e0] sm:$0xff]
    %v252 = vld [vmem:[#allocation2 + $0x3e8] sm:$0xff]
    %v253 = vld [vmem:[#allocation2 + $0x3f0] sm:$0xff]
    %v254 = vld [vmem:[#allocation2 + $0x3f8] sm:$0xff]
    %v255 = vld [vmem:[#allocation2 + $0x400] sm:$0xff]
    %v256 = vld [vmem:[#allocation2 + $0x408] sm:$0xff]
    %v257 = vld [vmem:[#allocation2 + $0x410] sm:$0xff]
    %v258 = vld [vmem:[#allocation2 + $0x418] sm:$0xff]
    %v259 = vld [vmem:[#allocation2 + $0x420] sm:$0xff]
    %v260 = vld [vmem:[#allocation2 + $0x428] sm:$0xff]
    %v261 = vld [vmem:[#allocation2 + $0x430] sm:$0xff]
    %v262 = vld [vmem:[#allocation2 + $0x438] sm:$0xff]
    %v263 = vld [vmem:[#allocation2 + $0x440] sm:$0xff]
    %v264 = vld [vmem:[#allocation2 + $0x448] sm:$0xff]
    %v265 = vld [vmem:[#allocation2 + $0x450] sm:$0xff]
    %v266 = vld [vmem:[#allocation2 + $0x458] sm:$0xff]
    %v267 = vld [vmem:[#allocation2 + $0x460] sm:$0xff]
    %v268 = vld [vmem:[#allocation2 + $0x468] sm:$0xff]
    %v269 = vld [vmem:[#allocation2 + $0x470] sm:$0xff]
    %v270 = vld [vmem:[#allocation2 + $0x478] sm:$0xff]
    %v271 = vld [vmem:[#allocation2 + $0x480] sm:$0xff]
    %v272 = vld [vmem:[#allocation2 + $0x488] sm:$0xff]
    %v273 = vld [vmem:[#allocation2 + $0x490] sm:$0xff]
    %v274 = vld [vmem:[#allocation2 + $0x498] sm:$0xff]
    %v275 = vld [vmem:[#allocation2 + $0x4a0] sm:$0xff]
    %v276 = vld [vmem:[#allocation2 + $0x4a8] sm:$0xff]
    %v277 = vld [vmem:[#allocation2 + $0x4b0] sm:$0xff]
    %v278 = vld [vmem:[#allocation2 + $0x4b8] sm:$0xff]
    %v279 = vld [vmem:[#allocation2 + $0x4c0] sm:$0xff]
    %v280 = vld [vmem:[#allocation2 + $0x4c8] sm:$0xff]
    %v281 = vld [vmem:[#allocation2 + $0x4d0] sm:$0xff]
    %v282 = vld [vmem:[#allocation2 + $0x4d8] sm:$0xff]
    %v283 = vld [vmem:[#allocation2 + $0x4e0] sm:$0xff]
    %v284 = vld [vmem:[#allocation2 + $0x4e8] sm:$0xff]
    %v285 = vld [vmem:[#allocation2 + $0x4f0] sm:$0xff]
    %v286 = vld [vmem:[#allocation2 + $0x4f8] sm:$0xff]
    %v287 = vld [vmem:[#allocation2 + $0x500] sm:$0xff]
    %v288 = vld [vmem:[#allocation2 + $0x508] sm:$0xff]
    %v289 = vld [vmem:[#allocation2 + $0x510] sm:$0xff]
    %v290 = vld [vmem:[#allocation2 + $0x518] sm:$0xff]
    %v291 = vld [vmem:[#allocation2 + $0x520] sm:$0xff]
    %v292 = vld [vmem:[#allocation2 + $0x528] sm:$0xff]
    %v293 = vld [vmem:[#allocation2 + $0x530] sm:$0xff]
    %v294 = vld [vmem:[#allocation2 + $0x538] sm:$0xff]
    %v295 = vld [vmem:[#allocation2 + $0x540] sm:$0xff]
    %v296 = vld [vmem:[#allocation2 + $0x548] sm:$0xff]
    %v297 = vld [vmem:[#allocation2 + $0x550] sm:$0xff]
    %v298 = vld [vmem:[#allocation2 + $0x558] sm:$0xff]
    %v299 = vld [vmem:[#allocation2 + $0x560] sm:$0xff]
    %v300 = vld [vmem:[#allocation2 + $0x568] sm:$0xff]
    %v301 = vld [vmem:[#allocation2 + $0x570] sm:$0xff]
    %v302 = vld [vmem:[#allocation2 + $0x578] sm:$0xff]
    %v303 = vld [vmem:[#allocation2 + $0x580] sm:$0xff]
    %v304 = vld [vmem:[#allocation2 + $0x588] sm:$0xff]
    %v305 = vld [vmem:[#allocation2 + $0x590] sm:$0xff]
    %v306 = vld [vmem:[#allocation2 + $0x598] sm:$0xff]
    %v307 = vld [vmem:[#allocation2 + $0x5a0] sm:$0xff]
    %v308 = vld [vmem:[#allocation2 + $0x5a8] sm:$0xff]
    %v309 = vld [vmem:[#allocation2 + $0x5b0] sm:$0xff]
    %v310 = vld [vmem:[#allocation2 + $0x5b8] sm:$0xff]
    %v311 = vld [vmem:[#allocation2 + $0x5c0] sm:$0xff]
    %v312 = vld [vmem:[#allocation2 + $0x5c8] sm:$0xff]
    %v313 = vld [vmem:[#allocation2 + $0x5d0] sm:$0xff]
    %v314 = vld [vmem:[#allocation2 + $0x5d8] sm:$0xff]
    %v315 = vld [vmem:[#allocation2 + $0x5e0] sm:$0xff]
    %v316 = vld [vmem:[#allocation2 + $0x5e8] sm:$0xff]
    %v317 = vld [vmem:[#allocation2 + $0x5f0] sm:$0xff]
    %v318 = vld [vmem:[#allocation2 + $0x5f8] sm:$0xff]
    %v319 = vld [vmem:[#allocation2 + $0x600] sm:$0xff]
    %v320 = vld [vmem:[#allocation2 + $0x608] sm:$0xff]
    %v321 = vld [vmem:[#allocation2 + $0x610] sm:$0xff]
    %v322 = vld [vmem:[#allocation2 + $0x618] sm:$0xff]
    %v323 = vld [vmem:[#allocation2 + $0x620] sm:$0xff]
    %v324 = vld [vmem:[#allocation2 + $0x628] sm:$0xff]
    %v325 = vld [vmem:[#allocation2 + $0x630] sm:$0xff]
    %v326 = vld [vmem:[#allocation2 + $0x638] sm:$0xff]
    %v327 = vld [vmem:[#allocation2 + $0x640] sm:$0xff]
    %v328 = vld [vmem:[#allocation2 + $0x648] sm:$0xff]
    %v329 = vld [vmem:[#allocation2 + $0x650] sm:$0xff]
    %v330 = vld [vmem:[#allocation2 + $0x658] sm:$0xff]
    %v331 = vld [vmem:[#allocation2 + $0x660] sm:$0xff]
    %v332 = vld [vmem:[#allocation2 + $0x668] sm:$0xff]
    %v333 = vld [vmem:[#allocation2 + $0x670] sm:$0xff]
    %v334 = vld [vmem:[#allocation2 + $0x678] sm:$0xff]
    %v335 = vld [vmem:[#allocation2 + $0x680] sm:$0xff]
    %v336 = vld [vmem:[#allocation2 + $0x688] sm:$0xff]
    %v337 = vld [vmem:[#allocation2 + $0x690] sm:$0xff]
    %v338 = vld [vmem:[#allocation2 + $0x698] sm:$0xff]
    %v339 = vld [vmem:[#allocation2 + $0x6a0] sm:$0xff]
    %v340 = vld [vmem:[#allocation2 + $0x6a8] sm:$0xff]
    %v341 = vld [vmem:[#allocation2 + $0x6b0] sm:$0xff]
    %v342 = vld [vmem:[#allocation2 + $0x6b8] sm:$0xff]
    %v343 = vld [vmem:[#allocation2 + $0x6c0] sm:$0xff]
    %v344 = vld [vmem:[#allocation2 + $0x6c8] sm:$0xff]
    %v345 = vld [vmem:[#allocation2 + $0x6d0] sm:$0xff]
    %v346 = vld [vmem:[#allocation2 + $0x6d8] sm:$0xff]
    %v347 = vld [vmem:[#allocation2 + $0x6e0] sm:$0xff]
    %v348 = vld [vmem:[#allocation2 + $0x6e8] sm:$0xff]
    %v349 = vld [vmem:[#allocation2 + $0x6f0] sm:$0xff]
    %v350 = vld [vmem:[#allocation2 + $0x6f8] sm:$0xff]
    %v351 = vld [vmem:[#allocation2 + $0x700] sm:$0xff]
    %v352 = vld [vmem:[#allocation2 + $0x708] sm:$0xff]
    %v353 = vld [vmem:[#allocation2 + $0x710] sm:$0xff]
    %v354 = vld [vmem:[#allocation2 + $0x718] sm:$0xff]
    %v355 = vld [vmem:[#allocation2 + $0x720] sm:$0xff]
    %v356 = vld [vmem:[#allocation2 + $0x728] sm:$0xff]
    %v357 = vld [vmem:[#allocation2 + $0x730] sm:$0xff]
    %v358 = vld [vmem:[#allocation2 + $0x738] sm:$0xff]
    %v359 = vld [vmem:[#allocation2 + $0x740] sm:$0xff]
    %v360 = vld [vmem:[#allocation2 + $0x748] sm:$0xff]
    %v361 = vld [vmem:[#allocation2 + $0x750] sm:$0xff]
    %v362 = vld [vmem:[#allocation2 + $0x758] sm:$0xff]
    %v363 = vld [vmem:[#allocation2 + $0x760] sm:$0xff]
    %v364 = vld [vmem:[#allocation2 + $0x768] sm:$0xff]
    %v365 = vld [vmem:[#allocation2 + $0x770] sm:$0xff]
    %v366 = vld [vmem:[#allocation2 + $0x778] sm:$0xff]
    %v367 = vld [vmem:[#allocation2 + $0x780] sm:$0xff]
    %v368 = vld [vmem:[#allocation2 + $0x788] sm:$0xff]
    %v369 = vld [vmem:[#allocation2 + $0x790] sm:$0xff]
    %v370 = vld [vmem:[#allocation2 + $0x798] sm:$0xff]
    %v371 = vld [vmem:[#allocation2 + $0x7a0] sm:$0xff]
    %v372 = vld [vmem:[#allocation2 + $0x7a8] sm:$0xff]
    %v373 = vld [vmem:[#allocation2 + $0x7b0] sm:$0xff]
    %v374 = vld [vmem:[#allocation2 + $0x7b8] sm:$0xff]
    %v375 = vld [vmem:[#allocation2 + $0x7c0] sm:$0xff]
    %v376 = vld [vmem:[#allocation2 + $0x7c8] sm:$0xff]
    %v377 = vld [vmem:[#allocation2 + $0x7d0] sm:$0xff]
    %v378 = vld [vmem:[#allocation2 + $0x7d8] sm:$0xff]
    %v379 = vld [vmem:[#allocation2 + $0x7e0] sm:$0xff]
    %v380 = vld [vmem:[#allocation2 + $0x7e8] sm:$0xff]
    %v381 = vld [vmem:[#allocation2 + $0x7f0] sm:$0xff]
    %v382 = vld [vmem:[#allocation2 + $0x7f8] sm:$0xff]
    %v383 = vld [vmem:[#allocation2 + $0x800] sm:$0xff]
    %v384 = vld [vmem:[#allocation2 + $0x808] sm:$0xff]
    %v385 = vld [vmem:[#allocation2 + $0x810] sm:$0xff]
    %v386 = vld [vmem:[#allocation2 + $0x818] sm:$0xff]
    %v387 = vld [vmem:[#allocation2 + $0x820] sm:$0xff]
    %v388 = vld [vmem:[#allocation2 + $0x828] sm:$0xff]
    %v389 = vld [vmem:[#allocation2 + $0x830] sm:$0xff]
    %v390 = vld [vmem:[#allocation2 + $0x838] sm:$0xff]
    %v391 = vld [vmem:[#allocation2 + $0x840] sm:$0xff]
    %v392 = vld [vmem:[#allocation2 + $0x848] sm:$0xff]
    %v393 = vld [vmem:[#allocation2 + $0x850] sm:$0xff]
    %v394 = vld [vmem:[#allocation2 + $0x858] sm:$0xff]
    %v395 = vld [vmem:[#allocation2 + $0x860] sm:$0xff]
    %v396 = vld [vmem:[#allocation2 + $0x868] sm:$0xff]
    %v397 = vld [vmem:[#allocation2 + $0x870] sm:$0xff]
    %v398 = vld [vmem:[#allocation2 + $0x878] sm:$0xff]
    %v399 = vld [vmem:[#allocation2 + $0x880] sm:$0xff]
    %v400 = vld [vmem:[#allocation2 + $0x888] sm:$0xff]
    %v401 = vld [vmem:[#allocation2 + $0x890] sm:$0xff]
    %v402 = vld [vmem:[#allocation2 + $0x898] sm:$0xff]
    %v403 = vld [vmem:[#allocation2 + $0x8a0] sm:$0xff]
    %v404 = vld [vmem:[#allocation2 + $0x8a8] sm:$0xff]
    %v405 = vld [vmem:[#allocation2 + $0x8b0] sm:$0xff]
    %v406 = vld [vmem:[#allocation2 + $0x8b8] sm:$0xff]
    %v407 = vld [vmem:[#allocation2 + $0x8c0] sm:$0xff]
    %v408 = vld [vmem:[#allocation2 + $0x8c8] sm:$0xff]
    %v409 = vld [vmem:[#allocation2 + $0x8d0] sm:$0xff]
    %v410 = vld [vmem:[#allocation2 + $0x8d8] sm:$0xff]
    %v411 = vld [vmem:[#allocation2 + $0x8e0] sm:$0xff]
    %v412 = vld [vmem:[#allocation2 + $0x8e8] sm:$0xff]
    %v413 = vld [vmem:[#allocation2 + $0x8f0] sm:$0xff]
    %v414 = vld [vmem:[#allocation2 + $0x8f8] sm:$0xff]
    %v415 = vld [vmem:[#allocation2 + $0x900] sm:$0xff]
    %v416 = vld [vmem:[#allocation2 + $0x908] sm:$0xff]
    %v417 = vld [vmem:[#allocation2 + $0x910] sm:$0xff]
    %v418 = vld [vmem:[#allocation2 + $0x918] sm:$0xff]
    %v419 = vld [vmem:[#allocation2 + $0x920] sm:$0xff]
    %v420 = vld [vmem:[#allocation2 + $0x928] sm:$0xff]
    %v421 = vld [vmem:[#allocation2 + $0x930] sm:$0xff]
    %v422 = vld [vmem:[#allocation2 + $0x938] sm:$0xff]
    %v423 = vld [vmem:[#allocation2 + $0x940] sm:$0xff]
    %v424 = vld [vmem:[#allocation2 + $0x948] sm:$0xff]
    %v425 = vld [vmem:[#allocation2 + $0x950] sm:$0xff]
    %v426 = vld [vmem:[#allocation2 + $0x958] sm:$0xff]
    %v427 = vld [vmem:[#allocation2 + $0x960] sm:$0xff]
    %v428 = vld [vmem:[#allocation2 + $0x968] sm:$0xff]
    %v429 = vld [vmem:[#allocation2 + $0x970] sm:$0xff]
    %v430 = vld [vmem:[#allocation2 + $0x978] sm:$0xff]
    %v431 = vld [vmem:[#allocation2 + $0x980] sm:$0xff]
    %v432 = vld [vmem:[#allocation2 + $0x988] sm:$0xff]
    %v433 = vld [vmem:[#allocation2 + $0x990] sm:$0xff]
    %v434 = vld [vmem:[#allocation2 + $0x998] sm:$0xff]
    %v435 = vld [vmem:[#allocation2 + $0x9a0] sm:$0xff]
    %v436 = vld [vmem:[#allocation2 + $0x9a8] sm:$0xff]
    %v437 = vld [vmem:[#allocation2 + $0x9b0] sm:$0xff]
    %v438 = vld [vmem:[#allocation2 + $0x9b8] sm:$0xff]
    %v439 = vld [vmem:[#allocation2 + $0x9c0] sm:$0xff]
    %v440 = vld [vmem:[#allocation2 + $0x9c8] sm:$0xff]
    %v441 = vld [vmem:[#allocation2 + $0x9d0] sm:$0xff]
    %v442 = vld [vmem:[#allocation2 + $0x9d8] sm:$0xff]
    %v443 = vld [vmem:[#allocation2 + $0x9e0] sm:$0xff]
    %v444 = vld [vmem:[#allocation2 + $0x9e8] sm:$0xff]
    %v445 = vld [vmem:[#allocation2 + $0x9f0] sm:$0xff]
    %v446 = vld [vmem:[#allocation2 + $0x9f8] sm:$0xff]
    %v447 = vld [vmem:[#allocation2 + $0xa00] sm:$0xff]
    %v448 = vld [vmem:[#allocation2 + $0xa08] sm:$0xff]
    %v449 = vld [vmem:[#allocation2 + $0xa10] sm:$0xff]
    %v450 = vld [vmem:[#allocation2 + $0xa18] sm:$0xff]
    %v451 = vld [vmem:[#allocation2 + $0xa20] sm:$0xff]
    %v452 = vld [vmem:[#allocation2 + $0xa28] sm:$0xff]
    %v453 = vld [vmem:[#allocation2 + $0xa30] sm:$0xff]
    %v454 = vld [vmem:[#allocation2 + $0xa38] sm:$0xff]
    %v455 = vld [vmem:[#allocation2 + $0xa40] sm:$0xff]
    %v456 = vld [vmem:[#allocation2 + $0xa48] sm:$0xff]
    %v457 = vld [vmem:[#allocation2 + $0xa50] sm:$0xff]
    %v458 = vld [vmem:[#allocation2 + $0xa58] sm:$0xff]
    %v459 = vld [vmem:[#allocation2 + $0xa60] sm:$0xff]
    %v460 = vld [vmem:[#allocation2 + $0xa68] sm:$0xff]
    %v461 = vld [vmem:[#allocation2 + $0xa70] sm:$0xff]
    %v462 = vld [vmem:[#allocation2 + $0xa78] sm:$0xff]
    %v463 = vld [vmem:[#allocation2 + $0xa80] sm:$0xff]
    %v464 = vld [vmem:[#allocation2 + $0xa88] sm:$0xff]
    %v465 = vld [vmem:[#allocation2 + $0xa90] sm:$0xff]
    %v466 = vld [vmem:[#allocation2 + $0xa98] sm:$0xff]
    %v467 = vld [vmem:[#allocation2 + $0xaa0] sm:$0xff]
    %v468 = vld [vmem:[#allocation2 + $0xaa8] sm:$0xff]
    %v469 = vld [vmem:[#allocation2 + $0xab0] sm:$0xff]
    %v470 = vld [vmem:[#allocation2 + $0xab8] sm:$0xff]
    %v471 = vld [vmem:[#allocation2 + $0xac0] sm:$0xff]
    %v472 = vld [vmem:[#allocation2 + $0xac8] sm:$0xff]
    %v473 = vld [vmem:[#allocation2 + $0xad0] sm:$0xff]
    %v474 = vld [vmem:[#allocation2 + $0xad8] sm:$0xff]
    %v475 = vld [vmem:[#allocation2 + $0xae0] sm:$0xff]
    %v476 = vld [vmem:[#allocation2 + $0xae8] sm:$0xff]
    %v477 = vld [vmem:[#allocation2 + $0xaf0] sm:$0xff]
    %v478 = vld [vmem:[#allocation2 + $0xaf8] sm:$0xff]
    %v479 = vld [vmem:[#allocation2 + $0xb00] sm:$0xff]
    %v480 = vld [vmem:[#allocation2 + $0xb08] sm:$0xff]
    %v481 = vld [vmem:[#allocation2 + $0xb10] sm:$0xff]
    %v482 = vld [vmem:[#allocation2 + $0xb18] sm:$0xff]
    %v483 = vld [vmem:[#allocation2 + $0xb20] sm:$0xff]
    %v484 = vld [vmem:[#allocation2 + $0xb28] sm:$0xff]
    %v485 = vld [vmem:[#allocation2 + $0xb30] sm:$0xff]
    %v486 = vld [vmem:[#allocation2 + $0xb38] sm:$0xff]
    %v487 = vld [vmem:[#allocation2 + $0xb40] sm:$0xff]
    %v488 = vld [vmem:[#allocation2 + $0xb48] sm:$0xff]
    %v489 = vld [vmem:[#allocation2 + $0xb50] sm:$0xff]
    %v490 = vld [vmem:[#allocation2 + $0xb58] sm:$0xff]
    %v491 = vld [vmem:[#allocation2 + $0xb60] sm:$0xff]
    %v492 = vld [vmem:[#allocation2 + $0xb68] sm:$0xff]
    %v493 = vld [vmem:[#allocation2 + $0xb70] sm:$0xff]
    %v494 = vld [vmem:[#allocation2 + $0xb78] sm:$0xff]
    %v495 = vld [vmem:[#allocation2 + $0xb80] sm:$0xff]
    %v496 = vld [vmem:[#allocation2 + $0xb88] sm:$0xff]
    %v497 = vld [vmem:[#allocation2 + $0xb90] sm:$0xff]
    %v498 = vld [vmem:[#allocation2 + $0xb98] sm:$0xff]
    %v499 = vld [vmem:[#allocation2 + $0xba0] sm:$0xff]
    %v500 = vld [vmem:[#allocation2 + $0xba8] sm:$0xff]
    %v501 = vld [vmem:[#allocation2 + $0xbb0] sm:$0xff]
    %v502 = vld [vmem:[#allocation2 + $0xbb8] sm:$0xff]
    %v503 = vld [vmem:[#allocation2 + $0xbc0] sm:$0xff]
    %v504 = vld [vmem:[#allocation2 + $0xbc8] sm:$0xff]
    %v505 = vld [vmem:[#allocation2 + $0xbd0] sm:$0xff]
    %v506 = vld [vmem:[#allocation2 + $0xbd8] sm:$0xff]
    %v507 = vld [vmem:[#allocation2 + $0xbe0] sm:$0xff]
    %v508 = vld [vmem:[#allocation2 + $0xbe8] sm:$0xff]
    %v509 = vld [vmem:[#allocation2 + $0xbf0] sm:$0xff]
    %v510 = vld [vmem:[#allocation2 + $0xbf8] sm:$0xff]
    %v511 = vld [vmem:[#allocation2 + $0xc00] sm:$0xff]
    %v512 = vld [vmem:[#allocation2 + $0xc08] sm:$0xff]
    %v513 = vld [vmem:[#allocation2 + $0xc10] sm:$0xff]
    %v514 = vld [vmem:[#allocation2 + $0xc18] sm:$0xff]
    %v515 = vld [vmem:[#allocation2 + $0xc20] sm:$0xff]
    %v516 = vld [vmem:[#allocation2 + $0xc28] sm:$0xff]
    %v517 = vld [vmem:[#allocation2 + $0xc30] sm:$0xff]
    %v518 = vld [vmem:[#allocation2 + $0xc38] sm:$0xff]
    %v519 = vld [vmem:[#allocation2 + $0xc40] sm:$0xff]
    %v520 = vld [vmem:[#allocation2 + $0xc48] sm:$0xff]
    %v521 = vld [vmem:[#allocation2 + $0xc50] sm:$0xff]
    %v522 = vld [vmem:[#allocation2 + $0xc58] sm:$0xff]
    %v523 = vld [vmem:[#allocation2 + $0xc60] sm:$0xff]
    %v524 = vld [vmem:[#allocation2 + $0xc68] sm:$0xff]
    %v525 = vld [vmem:[#allocation2 + $0xc70] sm:$0xff]
    %v526 = vld [vmem:[#allocation2 + $0xc78] sm:$0xff]
    %v527 = vld [vmem:[#allocation2 + $0xc80] sm:$0xff]
    %v528 = vld [vmem:[#allocation2 + $0xc88] sm:$0xff]
    %v529 = vld [vmem:[#allocation2 + $0xc90] sm:$0xff]
    %v530 = vld [vmem:[#allocation2 + $0xc98] sm:$0xff]
    %v531 = vld [vmem:[#allocation2 + $0xca0] sm:$0xff]
    %v532 = vld [vmem:[#allocation2 + $0xca8] sm:$0xff]
    %v533 = vld [vmem:[#allocation2 + $0xcb0] sm:$0xff]
    %v534 = vld [vmem:[#allocation2 + $0xcb8] sm:$0xff]
    %v535 = vld [vmem:[#allocation2 + $0xcc0] sm:$0xff]
    %v536 = vld [vmem:[#allocation2 + $0xcc8] sm:$0xff]
    %v537 = vld [vmem:[#allocation2 + $0xcd0] sm:$0xff]
    %v538 = vld [vmem:[#allocation2 + $0xcd8] sm:$0xff]
    %v539 = vld [vmem:[#allocation2 + $0xce0] sm:$0xff]
    %v540 = vld [vmem:[#allocation2 + $0xce8] sm:$0xff]
    %v541 = vld [vmem:[#allocation2 + $0xcf0] sm:$0xff]
    %v542 = vld [vmem:[#allocation2 + $0xcf8] sm:$0xff]
    %v543 = vld [vmem:[#allocation2 + $0xd00] sm:$0xff]
    %v544 = vld [vmem:[#allocation2 + $0xd08] sm:$0xff]
    %v545 = vld [vmem:[#allocation2 + $0xd10] sm:$0xff]
    %v546 = vld [vmem:[#allocation2 + $0xd18] sm:$0xff]
    %v547 = vld [vmem:[#allocation2 + $0xd20] sm:$0xff]
    %v548 = vld [vmem:[#allocation2 + $0xd28] sm:$0xff]
    %v549 = vld [vmem:[#allocation2 + $0xd30] sm:$0xff]
    %v550 = vld [vmem:[#allocation2 + $0xd38] sm:$0xff]
    %v551 = vld [vmem:[#allocation2 + $0xd40] sm:$0xff]
    %v552 = vld [vmem:[#allocation2 + $0xd48] sm:$0xff]
    %v553 = vld [vmem:[#allocation2 + $0xd50] sm:$0xff]
    %v554 = vld [vmem:[#allocation2 + $0xd58] sm:$0xff]
    %v555 = vld [vmem:[#allocation2 + $0xd60] sm:$0xff]
    %v556 = vld [vmem:[#allocation2 + $0xd68] sm:$0xff]
    %v557 = vld [vmem:[#allocation2 + $0xd70] sm:$0xff]
    %v558 = vld [vmem:[#allocation2 + $0xd78] sm:$0xff]
    %v559 = vld [vmem:[#allocation2 + $0xd80] sm:$0xff]
    %v560 = vld [vmem:[#allocation2 + $0xd88] sm:$0xff]
    %v561 = vld [vmem:[#allocation2 + $0xd90] sm:$0xff]
    %v562 = vld [vmem:[#allocation2 + $0xd98] sm:$0xff]
    %v563 = vld [vmem:[#allocation2 + $0xda0] sm:$0xff]
    %v564 = vld [vmem:[#allocation2 + $0xda8] sm:$0xff]
    %v565 = vld [vmem:[#allocation2 + $0xdb0] sm:$0xff]
    %v566 = vld [vmem:[#allocation2 + $0xdb8] sm:$0xff]
    %v567 = vld [vmem:[#allocation2 + $0xdc0] sm:$0xff]
    %v568 = vld [vmem:[#allocation2 + $0xdc8] sm:$0xff]
    %v569 = vld [vmem:[#allocation2 + $0xdd0] sm:$0xff]
    %v570 = vld [vmem:[#allocation2 + $0xdd8] sm:$0xff]
    %v571 = vld [vmem:[#allocation2 + $0xde0] sm:$0xff]
    %v572 = vld [vmem:[#allocation2 + $0xde8] sm:$0xff]
    %v573 = vld [vmem:[#allocation2 + $0xdf0] sm:$0xff]
    %v574 = vld [vmem:[#allocation2 + $0xdf8] sm:$0xff]
    %v575 = vld [vmem:[#allocation2 + $0xe00] sm:$0xff]
    %v576 = vld [vmem:[#allocation2 + $0xe08] sm:$0xff]
    %v577 = vld [vmem:[#allocation2 + $0xe10] sm:$0xff]
    %v578 = vld [vmem:[#allocation2 + $0xe18] sm:$0xff]
    %v579 = vld [vmem:[#allocation2 + $0xe20] sm:$0xff]
    %v580 = vld [vmem:[#allocation2 + $0xe28] sm:$0xff]
    %v581 = vld [vmem:[#allocation2 + $0xe30] sm:$0xff]
    %v582 = vld [vmem:[#allocation2 + $0xe38] sm:$0xff]
    %v583 = vld [vmem:[#allocation2 + $0xe40] sm:$0xff]
    %v584 = vld [vmem:[#allocation2 + $0xe48] sm:$0xff]
    %v585 = vld [vmem:[#allocation2 + $0xe50] sm:$0xff]
    %v586 = vld [vmem:[#allocation2 + $0xe58] sm:$0xff]
    %v587 = vld [vmem:[#allocation2 + $0xe60] sm:$0xff]
    %v588 = vld [vmem:[#allocation2 + $0xe68] sm:$0xff]
    %v589 = vld [vmem:[#allocation2 + $0xe70] sm:$0xff]
    %v590 = vld [vmem:[#allocation2 + $0xe78] sm:$0xff]
    %v591 = vld [vmem:[#allocation2 + $0xe80] sm:$0xff]
    %v592 = vld [vmem:[#allocation2 + $0xe88] sm:$0xff]
    %v593 = vld [vmem:[#allocation2 + $0xe90] sm:$0xff]
    %v594 = vld [vmem:[#allocation2 + $0xe98] sm:$0xff]
    %v595 = vld [vmem:[#allocation2 + $0xea0] sm:$0xff]
    %v596 = vld [vmem:[#allocation2 + $0xea8] sm:$0xff]
    %v597 = vld [vmem:[#allocation2 + $0xeb0] sm:$0xff]
    %v598 = vld [vmem:[#allocation2 + $0xeb8] sm:$0xff]
    %v599 = vld [vmem:[#allocation2 + $0xec0] sm:$0xff]
    %v600 = vld [vmem:[#allocation2 + $0xec8] sm:$0xff]
    %v601 = vld [vmem:[#allocation2 + $0xed0] sm:$0xff]
    %v602 = vld [vmem:[#allocation2 + $0xed8] sm:$0xff]
    %v603 = vld [vmem:[#allocation2 + $0xee0] sm:$0xff]
    %v604 = vld [vmem:[#allocation2 + $0xee8] sm:$0xff]
    %v605 = vld [vmem:[#allocation2 + $0xef0] sm:$0xff]
    %v606 = vld [vmem:[#allocation2 + $0xef8] sm:$0xff]
    %v607 = vld [vmem:[#allocation2 + $0xf00] sm:$0xff]
    %v608 = vld [vmem:[#allocation2 + $0xf08] sm:$0xff]
    %v609 = vld [vmem:[#allocation2 + $0xf10] sm:$0xff]
    %v610 = vld [vmem:[#allocation2 + $0xf18] sm:$0xff]
    %v611 = vld [vmem:[#allocation2 + $0xf20] sm:$0xff]
    %v612 = vld [vmem:[#allocation2 + $0xf28] sm:$0xff]
    %v613 = vld [vmem:[#allocation2 + $0xf30] sm:$0xff]
    %v614 = vld [vmem:[#allocation2 + $0xf38] sm:$0xff]
    %v615 = vld [vmem:[#allocation2 + $0xf40] sm:$0xff]
    %v616 = vld [vmem:[#allocation2 + $0xf48] sm:$0xff]
    %v617 = vld [vmem:[#allocation2 + $0xf50] sm:$0xff]
    %v618 = vld [vmem:[#allocation2 + $0xf58] sm:$0xff]
    %v619 = vld [vmem:[#allocation2 + $0xf60] sm:$0xff]
    %v620 = vld [vmem:[#allocation2 + $0xf68] sm:$0xff]
    %v621 = vld [vmem:[#allocation2 + $0xf70] sm:$0xff]
    %v622 = vld [vmem:[#allocation2 + $0xf78] sm:$0xff]
    %v623 = vld [vmem:[#allocation2 + $0xf80] sm:$0xff]
    %v624 = vld [vmem:[#allocation2 + $0xf88] sm:$0xff]
    %v625 = vld [vmem:[#allocation2 + $0xf90] sm:$0xff]
    %v626 = vld [vmem:[#allocation2 + $0xf98] sm:$0xff]
    %v627 = vld [vmem:[#allocation2 + $0xfa0] sm:$0xff]
    %v628 = vld [vmem:[#allocation2 + $0xfa8] sm:$0xff]
    %v629 = vld [vmem:[#allocation2 + $0xfb0] sm:$0xff]
    %v630 = vld [vmem:[#allocation2 + $0xfb8] sm:$0xff]
    %v631 = vld [vmem:[#allocation2 + $0xfc0] sm:$0xff]
    %v632 = vld [vmem:[#allocation2 + $0xfc8] sm:$0xff]
    %v633 = vld [vmem:[#allocation2 + $0xfd0] sm:$0xff]
    %v634 = vld [vmem:[#allocation2 + $0xfd8] sm:$0xff]
    %v635 = vld [vmem:[#allocation2 + $0xfe0] sm:$0xff]
    %v636 = vld [vmem:[#allocation2 + $0xfe8] sm:$0xff]
    %v637 = vld [vmem:[#allocation2 + $0xff0] sm:$0xff]
    %v638 = vld [vmem:[#allocation2 + $0xff8] sm:$0xff]
    %v639 = vld [vmem:[#allocation2 + $0x1000] sm:$0xff]
    %v640 = vld [vmem:[#allocation2 + $0x1008] sm:$0xff]
    %v641 = vld [vmem:[#allocation2 + $0x1010] sm:$0xff]
    %v642 = vld [vmem:[#allocation2 + $0x1018] sm:$0xff]
    %v643 = vld [vmem:[#allocation2 + $0x1020] sm:$0xff]
    %v644 = vld [vmem:[#allocation2 + $0x1028] sm:$0xff]
    %v645 = vld [vmem:[#allocation2 + $0x1030] sm:$0xff]
    %v646 = vld [vmem:[#allocation2 + $0x1038] sm:$0xff]
    %v647 = vld [vmem:[#allocation2 + $0x1040] sm:$0xff]
    %v648 = vld [vmem:[#allocation2 + $0x1048] sm:$0xff]
    %v649 = vld [vmem:[#allocation2 + $0x1050] sm:$0xff]
    %v650 = vld [vmem:[#allocation2 + $0x1058] sm:$0xff]
    %v651 = vld [vmem:[#allocation2 + $0x1060] sm:$0xff]
    %v652 = vld [vmem:[#allocation2 + $0x1068] sm:$0xff]
    %v653 = vld [vmem:[#allocation2 + $0x1070] sm:$0xff]
    %v654 = vld [vmem:[#allocation2 + $0x1078] sm:$0xff]
    %v655 = vld [vmem:[#allocation2 + $0x1080] sm:$0xff]
    %v656 = vld [vmem:[#allocation2 + $0x1088] sm:$0xff]
    %v657 = vld [vmem:[#allocation2 + $0x1090] sm:$0xff]
    %v658 = vld [vmem:[#allocation2 + $0x1098] sm:$0xff]
    %v659 = vld [vmem:[#allocation2 + $0x10a0] sm:$0xff]
    %v660 = vld [vmem:[#allocation2 + $0x10a8] sm:$0xff]
    %v661 = vld [vmem:[#allocation2 + $0x10b0] sm:$0xff]
    %v662 = vld [vmem:[#allocation2 + $0x10b8] sm:$0xff]
    %v663 = vld [vmem:[#allocation2 + $0x10c0] sm:$0xff]
    %v664 = vld [vmem:[#allocation2 + $0x10c8] sm:$0xff]
    %v665 = vld [vmem:[#allocation2 + $0x10d0] sm:$0xff]
    %v666 = vld [vmem:[#allocation2 + $0x10d8] sm:$0xff]
    %v667 = vld [vmem:[#allocation2 + $0x10e0] sm:$0xff]
    %v668 = vld [vmem:[#allocation2 + $0x10e8] sm:$0xff]
    %v669 = vld [vmem:[#allocation2 + $0x10f0] sm:$0xff]
    %v670 = vld [vmem:[#allocation2 + $0x10f8] sm:$0xff]
    %v671 = vld [vmem:[#allocation2 + $0x1100] sm:$0xff]
    %v672 = vld [vmem:[#allocation2 + $0x1108] sm:$0xff]
    %v673 = vld [vmem:[#allocation2 + $0x1110] sm:$0xff]
    %v674 = vld [vmem:[#allocation2 + $0x1118] sm:$0xff]
    %v675 = vld [vmem:[#allocation2 + $0x1120] sm:$0xff]
    %v676 = vld [vmem:[#allocation2 + $0x1128] sm:$0xff]
    %v677 = vld [vmem:[#allocation2 + $0x1130] sm:$0xff]
    %v678 = vld [vmem:[#allocation2 + $0x1138] sm:$0xff]
    %v679 = vld [vmem:[#allocation2 + $0x1140] sm:$0xff]
    %v680 = vld [vmem:[#allocation2 + $0x1148] sm:$0xff]
    %v681 = vld [vmem:[#allocation2 + $0x1150] sm:$0xff]
    %v682 = vld [vmem:[#allocation2 + $0x1158] sm:$0xff]
    %v683 = vld [vmem:[#allocation2 + $0x1160] sm:$0xff]
    %v684 = vld [vmem:[#allocation2 + $0x1168] sm:$0xff]
    %v685 = vld [vmem:[#allocation2 + $0x1170] sm:$0xff]
    %v686 = vld [vmem:[#allocation2 + $0x1178] sm:$0xff]
    %v687 = vld [vmem:[#allocation2 + $0x1180] sm:$0xff]
    %v688 = vld [vmem:[#allocation2 + $0x1188] sm:$0xff]
    %v689 = vld [vmem:[#allocation2 + $0x1190] sm:$0xff]
    %v690 = vld [vmem:[#allocation2 + $0x1198] sm:$0xff]
    %v691 = vld [vmem:[#allocation2 + $0x11a0] sm:$0xff]
    %v692 = vld [vmem:[#allocation2 + $0x11a8] sm:$0xff]
    %v693 = vld [vmem:[#allocation2 + $0x11b0] sm:$0xff]
    %v694 = vld [vmem:[#allocation2 + $0x11b8] sm:$0xff]
    %v695 = vld [vmem:[#allocation2 + $0x11c0] sm:$0xff]
    %v696 = vld [vmem:[#allocation2 + $0x11c8] sm:$0xff]
    %v697 = vld [vmem:[#allocation2 + $0x11d0] sm:$0xff]
    %v698 = vld [vmem:[#allocation2 + $0x11d8] sm:$0xff]
    %v699 = vld [vmem:[#allocation2 + $0x11e0] sm:$0xff]
    %v700 = vld [vmem:[#allocation2 + $0x11e8] sm:$0xff]
    %v701 = vld [vmem:[#allocation2 + $0x11f0] sm:$0xff]
    %v702 = vld [vmem:[#allocation2 + $0x11f8] sm:$0xff]
    %v703 = vld [vmem:[#allocation2 + $0x1200] sm:$0xff]
    %v704 = vld [vmem:[#allocation2 + $0x1208] sm:$0xff]
    %v705 = vld [vmem:[#allocation2 + $0x1210] sm:$0xff]
    %v706 = vld [vmem:[#allocation2 + $0x1218] sm:$0xff]
    %v707 = vld [vmem:[#allocation2 + $0x1220] sm:$0xff]
    %v708 = vld [vmem:[#allocation2 + $0x1228] sm:$0xff]
    %v709 = vld [vmem:[#allocation2 + $0x1230] sm:$0xff]
    %v710 = vld [vmem:[#allocation2 + $0x1238] sm:$0xff]
    %v711 = vld [vmem:[#allocation2 + $0x1240] sm:$0xff]
    %v712 = vld [vmem:[#allocation2 + $0x1248] sm:$0xff]
    %v713 = vld [vmem:[#allocation2 + $0x1250] sm:$0xff]
    %v714 = vld [vmem:[#allocation2 + $0x1258] sm:$0xff]
    %v715 = vld [vmem:[#allocation2 + $0x1260] sm:$0xff]
    %v716 = vld [vmem:[#allocation2 + $0x1268] sm:$0xff]
    %v717 = vld [vmem:[#allocation2 + $0x1270] sm:$0xff]
    %v718 = vld [vmem:[#allocation2 + $0x1278] sm:$0xff]
    %v719 = vld [vmem:[#allocation2 + $0x1280] sm:$0xff]
    %v720 = vld [vmem:[#allocation2 + $0x1288] sm:$0xff]
    %v721 = vld [vmem:[#allocation2 + $0x1290] sm:$0xff]
    %v722 = vld [vmem:[#allocation2 + $0x1298] sm:$0xff]
    %v723 = vld [vmem:[#allocation2 + $0x12a0] sm:$0xff]
    %v724 = vld [vmem:[#allocation2 + $0x12a8] sm:$0xff]
    %v725 = vld [vmem:[#allocation2 + $0x12b0] sm:$0xff]
    %v726 = vld [vmem:[#allocation2 + $0x12b8] sm:$0xff]
    %v727 = vld [vmem:[#allocation2 + $0x12c0] sm:$0xff]
    %v728 = vld [vmem:[#allocation2 + $0x12c8] sm:$0xff]
    %v729 = vld [vmem:[#allocation2 + $0x12d0] sm:$0xff]
    %v730 = vld [vmem:[#allocation2 + $0x12d8] sm:$0xff]
    %v731 = vld [vmem:[#allocation2 + $0x12e0] sm:$0xff]
    %v732 = vld [vmem:[#allocation2 + $0x12e8] sm:$0xff]
    %v733 = vld [vmem:[#allocation2 + $0x12f0] sm:$0xff]
    %v734 = vld [vmem:[#allocation2 + $0x12f8] sm:$0xff]
    %v735 = vld [vmem:[#allocation2 + $0x1300] sm:$0xff]
    %v736 = vld [vmem:[#allocation2 + $0x1308] sm:$0xff]
    %v737 = vld [vmem:[#allocation2 + $0x1310] sm:$0xff]
    %v738 = vld [vmem:[#allocation2 + $0x1318] sm:$0xff]
    %v739 = vld [vmem:[#allocation2 + $0x1320] sm:$0xff]
    %v740 = vld [vmem:[#allocation2 + $0x1328] sm:$0xff]
    %v741 = vld [vmem:[#allocation2 + $0x1330] sm:$0xff]
    %v742 = vld [vmem:[#allocation2 + $0x1338] sm:$0xff]
    %v743 = vld [vmem:[#allocation2 + $0x1340] sm:$0xff]
    %v744 = vld [vmem:[#allocation2 + $0x1348] sm:$0xff]
    %v745 = vld [vmem:[#allocation2 + $0x1350] sm:$0xff]
    %v746 = vld [vmem:[#allocation2 + $0x1358] sm:$0xff]
    %v747 = vld [vmem:[#allocation2 + $0x1360] sm:$0xff]
    %v748 = vld [vmem:[#allocation2 + $0x1368] sm:$0xff]
    %v749 = vld [vmem:[#allocation2 + $0x1370] sm:$0xff]
    %v750 = vld [vmem:[#allocation2 + $0x1378] sm:$0xff]
    %v751 = vld [vmem:[#allocation2 + $0x1380] sm:$0xff]
    %v752 = vld [vmem:[#allocation2 + $0x1388] sm:$0xff]
    %v753 = vld [vmem:[#allocation2 + $0x1390] sm:$0xff]
    %v754 = vld [vmem:[#allocation2 + $0x1398] sm:$0xff]
    %v755 = vld [vmem:[#allocation2 + $0x13a0] sm:$0xff]
    %v756 = vld [vmem:[#allocation2 + $0x13a8] sm:$0xff]
    %v757 = vld [vmem:[#allocation2 + $0x13b0] sm:$0xff]
    %v758 = vld [vmem:[#allocation2 + $0x13b8] sm:$0xff]
    %v759 = vld [vmem:[#allocation2 + $0x13c0] sm:$0xff]
    %v760 = vld [vmem:[#allocation2 + $0x13c8] sm:$0xff]
    %v761 = vld [vmem:[#allocation2 + $0x13d0] sm:$0xff]
    %v762 = vld [vmem:[#allocation2 + $0x13d8] sm:$0xff]
    %v763 = vld [vmem:[#allocation2 + $0x13e0] sm:$0xff]
    %v764 = vld [vmem:[#allocation2 + $0x13e8] sm:$0xff]
    %v765 = vld [vmem:[#allocation2 + $0x13f0] sm:$0xff]
    %v766 = vld [vmem:[#allocation2 + $0x13f8] sm:$0xff]
    %v767 = vld [vmem:[#allocation2 + $0x1400] sm:$0xff]
    %v768 = vld [vmem:[#allocation2 + $0x1408] sm:$0xff]
    %v769 = vld [vmem:[#allocation2 + $0x1410] sm:$0xff]
    %v770 = vld [vmem:[#allocation2 + $0x1418] sm:$0xff]
    %v771 = vld [vmem:[#allocation2 + $0x1420] sm:$0xff]
    %v772 = vld [vmem:[#allocation2 + $0x1428] sm:$0xff]
    %v773 = vld [vmem:[#allocation2 + $0x1430] sm:$0xff]
    %v774 = vld [vmem:[#allocation2 + $0x1438] sm:$0xff]
    %v775 = vld [vmem:[#allocation2 + $0x1440] sm:$0xff]
    %v776 = vld [vmem:[#allocation2 + $0x1448] sm:$0xff]
    %v777 = vld [vmem:[#allocation2 + $0x1450] sm:$0xff]
    %v778 = vld [vmem:[#allocation2 + $0x1458] sm:$0xff]
    %v779 = vld [vmem:[#allocation2 + $0x1460] sm:$0xff]
    %v780 = vld [vmem:[#allocation2 + $0x1468] sm:$0xff]
    %v781 = vld [vmem:[#allocation2 + $0x1470] sm:$0xff]
    %v782 = vld [vmem:[#allocation2 + $0x1478] sm:$0xff]
    %v783 = vld [vmem:[#allocation2 + $0x1480] sm:$0xff]
    %v784 = vld [vmem:[#allocation2 + $0x1488] sm:$0xff]
    %v785 = vld [vmem:[#allocation2 + $0x1490] sm:$0xff]
    %v786 = vld [vmem:[#allocation2 + $0x1498] sm:$0xff]
    %v787 = vld [vmem:[#allocation2 + $0x14a0] sm:$0xff]
    %v788 = vld [vmem:[#allocation2 + $0x14a8] sm:$0xff]
    %v789 = vld [vmem:[#allocation2 + $0x14b0] sm:$0xff]
    %v790 = vld [vmem:[#allocation2 + $0x14b8] sm:$0xff]
    %v791 = vld [vmem:[#allocation2 + $0x14c0] sm:$0xff]
    %v792 = vld [vmem:[#allocation2 + $0x14c8] sm:$0xff]
    %v793 = vld [vmem:[#allocation2 + $0x14d0] sm:$0xff]
    %v794 = vld [vmem:[#allocation2 + $0x14d8] sm:$0xff]
    %v795 = vld [vmem:[#allocation2 + $0x14e0] sm:$0xff]
    %v796 = vld [vmem:[#allocation2 + $0x14e8] sm:$0xff]
    %v797 = vld [vmem:[#allocation2 + $0x14f0] sm:$0xff]
    %v798 = vld [vmem:[#allocation2 + $0x14f8] sm:$0xff]
    %v799 = vld [vmem:[#allocation2 + $0x1500] sm:$0xff]
    %v800 = vld [vmem:[#allocation2 + $0x1508] sm:$0xff]
    %v801 = vld [vmem:[#allocation2 + $0x1510] sm:$0xff]
    %v802 = vld [vmem:[#allocation2 + $0x1518] sm:$0xff]
    %v803 = vld [vmem:[#allocation2 + $0x1520] sm:$0xff]
    %v804 = vld [vmem:[#allocation2 + $0x1528] sm:$0xff]
    %v805 = vld [vmem:[#allocation2 + $0x1530] sm:$0xff]
    %v806 = vld [vmem:[#allocation2 + $0x1538] sm:$0xff]
    %v807 = vld [vmem:[#allocation2 + $0x1540] sm:$0xff]
    %v808 = vld [vmem:[#allocation2 + $0x1548] sm:$0xff]
    %v809 = vld [vmem:[#allocation2 + $0x1550] sm:$0xff]
    %v810 = vld [vmem:[#allocation2 + $0x1558] sm:$0xff]
    %v811 = vld [vmem:[#allocation2 + $0x1560] sm:$0xff]
    %v812 = vld [vmem:[#allocation2 + $0x1568] sm:$0xff]
    %v813 = vld [vmem:[#allocation2 + $0x1570] sm:$0xff]
    %v814 = vld [vmem:[#allocation2 + $0x1578] sm:$0xff]
    %v815 = vld [vmem:[#allocation2 + $0x1580] sm:$0xff]
    %v816 = vld [vmem:[#allocation2 + $0x1588] sm:$0xff]
    %v817 = vld [vmem:[#allocation2 + $0x1590] sm:$0xff]
    %v818 = vld [vmem:[#allocation2 + $0x1598] sm:$0xff]
    %v819 = vld [vmem:[#allocation2 + $0x15a0] sm:$0xff]
    %v820 = vld [vmem:[#allocation2 + $0x15a8] sm:$0xff]
    %v821 = vld [vmem:[#allocation2 + $0x15b0] sm:$0xff]
    %v822 = vld [vmem:[#allocation2 + $0x15b8] sm:$0xff]
    %v823 = vld [vmem:[#allocation2 + $0x15c0] sm:$0xff]
    %v824 = vld [vmem:[#allocation2 + $0x15c8] sm:$0xff]
    %v825 = vld [vmem:[#allocation2 + $0x15d0] sm:$0xff]
    %v826 = vld [vmem:[#allocation2 + $0x15d8] sm:$0xff]
    %v827 = vld [vmem:[#allocation2 + $0x15e0] sm:$0xff]
    %v828 = vld [vmem:[#allocation2 + $0x15e8] sm:$0xff]
    %v829 = vld [vmem:[#allocation2 + $0x15f0] sm:$0xff]
    %v830 = vld [vmem:[#allocation2 + $0x15f8] sm:$0xff]
    %v831 = vld [vmem:[#allocation2 + $0x1600] sm:$0xff]
    %v832 = vld [vmem:[#allocation2 + $0x1608] sm:$0xff]
    %v833 = vld [vmem:[#allocation2 + $0x1610] sm:$0xff]
    %v834 = vld [vmem:[#allocation2 + $0x1618] sm:$0xff]
    %v835 = vld [vmem:[#allocation2 + $0x1620] sm:$0xff]
    %v836 = vld [vmem:[#allocation2 + $0x1628] sm:$0xff]
    %v837 = vld [vmem:[#allocation2 + $0x1630] sm:$0xff]
    %v838 = vld [vmem:[#allocation2 + $0x1638] sm:$0xff]
    %v839 = vld [vmem:[#allocation2 + $0x1640] sm:$0xff]
    %v840 = vld [vmem:[#allocation2 + $0x1648] sm:$0xff]
    %v841 = vld [vmem:[#allocation2 + $0x1650] sm:$0xff]
    %v842 = vld [vmem:[#allocation2 + $0x1658] sm:$0xff]
    %v843 = vld [vmem:[#allocation2 + $0x1660] sm:$0xff]
    %v844 = vld [vmem:[#allocation2 + $0x1668] sm:$0xff]
    %v845 = vld [vmem:[#allocation2 + $0x1670] sm:$0xff]
    %v846 = vld [vmem:[#allocation2 + $0x1678] sm:$0xff]
    %v847 = vld [vmem:[#allocation2 + $0x1680] sm:$0xff]
    %v848 = vld [vmem:[#allocation2 + $0x1688] sm:$0xff]
    %v849 = vld [vmem:[#allocation2 + $0x1690] sm:$0xff]
    %v850 = vld [vmem:[#allocation2 + $0x1698] sm:$0xff]
    %v851 = vld [vmem:[#allocation2 + $0x16a0] sm:$0xff]
    %v852 = vld [vmem:[#allocation2 + $0x16a8] sm:$0xff]
    %v853 = vld [vmem:[#allocation2 + $0x16b0] sm:$0xff]
    %v854 = vld [vmem:[#allocation2 + $0x16b8] sm:$0xff]
    %v855 = vld [vmem:[#allocation2 + $0x16c0] sm:$0xff]
    %v856 = vld [vmem:[#allocation2 + $0x16c8] sm:$0xff]
    %v857 = vld [vmem:[#allocation2 + $0x16d0] sm:$0xff]
    %v858 = vld [vmem:[#allocation2 + $0x16d8] sm:$0xff]
    %v859 = vld [vmem:[#allocation2 + $0x16e0] sm:$0xff]
    %v860 = vld [vmem:[#allocation2 + $0x16e8] sm:$0xff]
    %v861 = vld [vmem:[#allocation2 + $0x16f0] sm:$0xff]
    %v862 = vld [vmem:[#allocation2 + $0x16f8] sm:$0xff]
    %v863 = vld [vmem:[#allocation2 + $0x1700] sm:$0xff]
    %v864 = vld [vmem:[#allocation2 + $0x1708] sm:$0xff]
    %v865 = vld [vmem:[#allocation2 + $0x1710] sm:$0xff]
    %v866 = vld [vmem:[#allocation2 + $0x1718] sm:$0xff]
    %v867 = vld [vmem:[#allocation2 + $0x1720] sm:$0xff]
    %v868 = vld [vmem:[#allocation2 + $0x1728] sm:$0xff]
    %v869 = vld [vmem:[#allocation2 + $0x1730] sm:$0xff]
    %v870 = vld [vmem:[#allocation2 + $0x1738] sm:$0xff]
    %v871 = vld [vmem:[#allocation2 + $0x1740] sm:$0xff]
    %v872 = vld [vmem:[#allocation2 + $0x1748] sm:$0xff]
    %v873 = vld [vmem:[#allocation2 + $0x1750] sm:$0xff]
    %v874 = vld [vmem:[#allocation2 + $0x1758] sm:$0xff]
    %v875 = vld [vmem:[#allocation2 + $0x1760] sm:$0xff]
    %v876 = vld [vmem:[#allocation2 + $0x1768] sm:$0xff]
    %v877 = vld [vmem:[#allocation2 + $0x1770] sm:$0xff]
    %v878 = vld [vmem:[#allocation2 + $0x1778] sm:$0xff]
    %v879 = vld [vmem:[#allocation2 + $0x1780] sm:$0xff]
    %v880 = vld [vmem:[#allocation2 + $0x1788] sm:$0xff]
    %v881 = vld [vmem:[#allocation2 + $0x1790] sm:$0xff]
    %v882 = vld [vmem:[#allocation2 + $0x1798] sm:$0xff]
    %v883 = vld [vmem:[#allocation2 + $0x17a0] sm:$0xff]
    %v884 = vld [vmem:[#allocation2 + $0x17a8] sm:$0xff]
    %v885 = vld [vmem:[#allocation2 + $0x17b0] sm:$0xff]
    %v886 = vld [vmem:[#allocation2 + $0x17b8] sm:$0xff]
    %v887 = vld [vmem:[#allocation2 + $0x17c0] sm:$0xff]
    %v888 = vld [vmem:[#allocation2 + $0x17c8] sm:$0xff]
    %v889 = vld [vmem:[#allocation2 + $0x17d0] sm:$0xff]
    %v890 = vld [vmem:[#allocation2 + $0x17d8] sm:$0xff]
    %v891 = vld [vmem:[#allocation2 + $0x17e0] sm:$0xff]
    %v892 = vld [vmem:[#allocation2 + $0x17e8] sm:$0xff]
    %v893 = vld [vmem:[#allocation2 + $0x17f0] sm:$0xff]
    %v894 = vld [vmem:[#allocation2 + $0x17f8] sm:$0xff]
    %v895 = vld [vmem:[#allocation4] sm:$0xf]
    %v897 = vlaneseq
    %v898 = vshrl.u32 %v897, 7
    %v899 = vsub.s32 0, %v898
    %v900 = vrot.slane %v895, %v899
    %v901 = vlaneseq
    %v902 = vshrl.u32 %v901, 7
    %v903 = vsub.s32 1, %v902
    %v904 = vrot.slane %v895, %v903
    %v905 = vlaneseq
    %v906 = vshrl.u32 %v905, 7
    %v907 = vsub.s32 2, %v906
    %v908 = vrot.slane %v895, %v907
    %v909 = vlaneseq
    %v910 = vshrl.u32 %v909, 7
    %v911 = vsub.s32 3, %v910
    %v912 = vrot.slane %v895, %v911
    %v941 = vunpack.c.l.b16 %v103
    %v942 = vunpack.c.h.b16 %v103
    %v943 = vunpack.c.l.b16 %v104
    %v944 = vunpack.c.h.b16 %v104
    %v945 = vunpack.c.l.b16 %v105
    %v946 = vunpack.c.h.b16 %v105
    %v947 = vunpack.c.l.b16 %v106
    %v948 = vunpack.c.h.b16 %v106
    %v949 = vunpack.c.l.b16 %v107
    %v950 = vunpack.c.h.b16 %v107
    %v951 = vunpack.c.l.b16 %v108
    %v952 = vunpack.c.h.b16 %v108
    %v953 = vunpack.c.l.b16 %v109
    %v954 = vunpack.c.h.b16 %v109
    %v955 = vunpack.c.l.b16 %v110
    %v956 = vunpack.c.h.b16 %v110
    %v957 = vunpack.c.l.b16 %v111
    %v958 = vunpack.c.h.b16 %v111
    %v959 = vunpack.c.l.b16 %v112
    %v960 = vunpack.c.h.b16 %v112
    %v961 = vunpack.c.l.b16 %v113
    %v962 = vunpack.c.h.b16 %v113
    %v963 = vunpack.c.l.b16 %v114
    %v964 = vunpack.c.h.b16 %v114
    %v965 = vunpack.c.l.b16 %v115
    %v966 = vunpack.c.h.b16 %v115
    %v967 = vunpack.c.l.b16 %v116
    %v968 = vunpack.c.h.b16 %v116
    %v969 = vunpack.c.l.b16 %v117
    %v970 = vunpack.c.h.b16 %v117
    %v971 = vunpack.c.l.b16 %v118
    %v972 = vunpack.c.h.b16 %v118
    %v973 = vunpack.c.l.b16 %v119
    %v974 = vunpack.c.h.b16 %v119
    %v975 = vunpack.c.l.b16 %v120
    %v976 = vunpack.c.h.b16 %v120
    %v977 = vunpack.c.l.b16 %v121
    %v978 = vunpack.c.h.b16 %v121
    %v979 = vunpack.c.l.b16 %v122
    %v980 = vunpack.c.h.b16 %v122
    %v981 = vunpack.c.l.b16 %v123
    %v982 = vunpack.c.h.b16 %v123
    %v983 = vunpack.c.l.b16 %v124
    %v984 = vunpack.c.h.b16 %v124
    %v985 = vunpack.c.l.b16 %v125
    %v986 = vunpack.c.h.b16 %v125
    %v987 = vunpack.c.l.b16 %v126
    %v988 = vunpack.c.h.b16 %v126
    %v989 = vpack.c.b16 %v965, %v941
    %v990 = vpack.c.b16 %v966, %v942
    %v991 = vpack.c.b16 %v967, %v943
    %v992 = vpack.c.b16 %v968, %v944
    %v993 = vpack.c.b16 %v969, %v945
    %v994 = vpack.c.b16 %v970, %v946
    %v995 = vpack.c.b16 %v971, %v947
    %v996 = vpack.c.b16 %v972, %v948
    %v997 = vpack.c.b16 %v973, %v949
    %v998 = vpack.c.b16 %v974, %v950
    %v999 = vpack.c.b16 %v975, %v951
    %v1000 = vpack.c.b16 %v976, %v952
    %v1001 = vpack.c.b16 %v977, %v953
    %v1002 = vpack.c.b16 %v978, %v954
    %v1003 = vpack.c.b16 %v979, %v955
    %v1004 = vpack.c.b16 %v980, %v956
    %v1005 = vpack.c.b16 %v981, %v957
    %v1006 = vpack.c.b16 %v982, %v958
    %v1007 = vpack.c.b16 %v983, %v959
    %v1008 = vpack.c.b16 %v984, %v960
    %v1009 = vpack.c.b16 %v985, %v961
    %v1010 = vpack.c.b16 %v986, %v962
    %v1011 = vpack.c.b16 %v987, %v963
    %v1012 = vpack.c.b16 %v988, %v964
    %v1805 = vunpack.c.l.b16 %v127
    %v1806 = vunpack.c.h.b16 %v127
    %v1807 = vunpack.c.l.b16 %v128
    %v1808 = vunpack.c.h.b16 %v128
    %v1809 = vunpack.c.l.b16 %v129
    %v1810 = vunpack.c.h.b16 %v129
    %v1811 = vunpack.c.l.b16 %v130
    %v1812 = vunpack.c.h.b16 %v130
    %v1813 = vunpack.c.l.b16 %v131
    %v1814 = vunpack.c.h.b16 %v131
    %v1815 = vunpack.c.l.b16 %v132
    %v1816 = vunpack.c.h.b16 %v132
    %v1817 = vunpack.c.l.b16 %v133
    %v1818 = vunpack.c.h.b16 %v133
    %v1819 = vunpack.c.l.b16 %v134
    %v1820 = vunpack.c.h.b16 %v134
    %v1821 = vunpack.c.l.b16 %v135
    %v1822 = vunpack.c.h.b16 %v135
    %v1823 = vunpack.c.l.b16 %v136
    %v1824 = vunpack.c.h.b16 %v136
    %v1825 = vunpack.c.l.b16 %v137
    %v1826 = vunpack.c.h.b16 %v137
    %v1827 = vunpack.c.l.b16 %v138
    %v1828 = vunpack.c.h.b16 %v138
    %v1829 = vunpack.c.l.b16 %v139
    %v1830 = vunpack.c.h.b16 %v139
    %v1831 = vunpack.c.l.b16 %v140
    %v1832 = vunpack.c.h.b16 %v140
    %v1833 = vunpack.c.l.b16 %v141
    %v1834 = vunpack.c.h.b16 %v141
    %v1835 = vunpack.c.l.b16 %v142
    %v1836 = vunpack.c.h.b16 %v142
    %v1837 = vunpack.c.l.b16 %v143
    %v1838 = vunpack.c.h.b16 %v143
    %v1839 = vunpack.c.l.b16 %v144
    %v1840 = vunpack.c.h.b16 %v144
    %v1841 = vunpack.c.l.b16 %v145
    %v1842 = vunpack.c.h.b16 %v145
    %v1843 = vunpack.c.l.b16 %v146
    %v1844 = vunpack.c.h.b16 %v146
    %v1845 = vunpack.c.l.b16 %v147
    %v1846 = vunpack.c.h.b16 %v147
    %v1847 = vunpack.c.l.b16 %v148
    %v1848 = vunpack.c.h.b16 %v148
    %v1849 = vunpack.c.l.b16 %v149
    %v1850 = vunpack.c.h.b16 %v149
    %v1851 = vunpack.c.l.b16 %v150
    %v1852 = vunpack.c.h.b16 %v150
    %v1853 = vunpack.c.l.b16 %v151
    %v1854 = vunpack.c.h.b16 %v151
    %v1855 = vunpack.c.l.b16 %v152
    %v1856 = vunpack.c.h.b16 %v152
    %v1857 = vunpack.c.l.b16 %v153
    %v1858 = vunpack.c.h.b16 %v153
    %v1859 = vunpack.c.l.b16 %v154
    %v1860 = vunpack.c.h.b16 %v154
    %v1861 = vunpack.c.l.b16 %v155
    %v1862 = vunpack.c.h.b16 %v155
    %v1863 = vunpack.c.l.b16 %v156
    %v1864 = vunpack.c.h.b16 %v156
    %v1865 = vunpack.c.l.b16 %v157
    %v1866 = vunpack.c.h.b16 %v157
    %v1867 = vunpack.c.l.b16 %v158
    %v1868 = vunpack.c.h.b16 %v158
    %v1869 = vunpack.c.l.b16 %v159
    %v1870 = vunpack.c.h.b16 %v159
    %v1871 = vunpack.c.l.b16 %v160
    %v1872 = vunpack.c.h.b16 %v160
    %v1873 = vunpack.c.l.b16 %v161
    %v1874 = vunpack.c.h.b16 %v161
    %v1875 = vunpack.c.l.b16 %v162
    %v1876 = vunpack.c.h.b16 %v162
    %v1877 = vunpack.c.l.b16 %v163
    %v1878 = vunpack.c.h.b16 %v163
    %v1879 = vunpack.c.l.b16 %v164
    %v1880 = vunpack.c.h.b16 %v164
    %v1881 = vunpack.c.l.b16 %v165
    %v1882 = vunpack.c.h.b16 %v165
    %v1883 = vunpack.c.l.b16 %v166
    %v1884 = vunpack.c.h.b16 %v166
    %v1885 = vunpack.c.l.b16 %v167
    %v1886 = vunpack.c.h.b16 %v167
    %v1887 = vunpack.c.l.b16 %v168
    %v1888 = vunpack.c.h.b16 %v168
    %v1889 = vunpack.c.l.b16 %v169
    %v1890 = vunpack.c.h.b16 %v169
    %v1891 = vunpack.c.l.b16 %v170
    %v1892 = vunpack.c.h.b16 %v170
    %v1893 = vunpack.c.l.b16 %v171
    %v1894 = vunpack.c.h.b16 %v171
    %v1895 = vunpack.c.l.b16 %v172
    %v1896 = vunpack.c.h.b16 %v172
    %v1897 = vunpack.c.l.b16 %v173
    %v1898 = vunpack.c.h.b16 %v173
    %v1899 = vunpack.c.l.b16 %v174
    %v1900 = vunpack.c.h.b16 %v174
    %v1901 = vunpack.c.l.b16 %v175
    %v1902 = vunpack.c.h.b16 %v175
    %v1903 = vunpack.c.l.b16 %v176
    %v1904 = vunpack.c.h.b16 %v176
    %v1905 = vunpack.c.l.b16 %v177
    %v1906 = vunpack.c.h.b16 %v177
    %v1907 = vunpack.c.l.b16 %v178
    %v1908 = vunpack.c.h.b16 %v178
    %v1909 = vunpack.c.l.b16 %v179
    %v1910 = vunpack.c.h.b16 %v179
    %v1911 = vunpack.c.l.b16 %v180
    %v1912 = vunpack.c.h.b16 %v180
    %v1913 = vunpack.c.l.b16 %v181
    %v1914 = vunpack.c.h.b16 %v181
    %v1915 = vunpack.c.l.b16 %v182
    %v1916 = vunpack.c.h.b16 %v182
    %v1917 = vunpack.c.l.b16 %v183
    %v1918 = vunpack.c.h.b16 %v183
    %v1919 = vunpack.c.l.b16 %v184
    %v1920 = vunpack.c.h.b16 %v184
    %v1921 = vunpack.c.l.b16 %v185
    %v1922 = vunpack.c.h.b16 %v185
    %v1923 = vunpack.c.l.b16 %v186
    %v1924 = vunpack.c.h.b16 %v186
    %v1925 = vunpack.c.l.b16 %v187
    %v1926 = vunpack.c.h.b16 %v187
    %v1927 = vunpack.c.l.b16 %v188
    %v1928 = vunpack.c.h.b16 %v188
    %v1929 = vunpack.c.l.b16 %v189
    %v1930 = vunpack.c.h.b16 %v189
    %v1931 = vunpack.c.l.b16 %v190
    %v1932 = vunpack.c.h.b16 %v190
    %v1933 = vunpack.c.l.b16 %v191
    %v1934 = vunpack.c.h.b16 %v191
    %v1935 = vunpack.c.l.b16 %v192
    %v1936 = vunpack.c.h.b16 %v192
    %v1937 = vunpack.c.l.b16 %v193
    %v1938 = vunpack.c.h.b16 %v193
    %v1939 = vunpack.c.l.b16 %v194
    %v1940 = vunpack.c.h.b16 %v194
    %v1941 = vunpack.c.l.b16 %v195
    %v1942 = vunpack.c.h.b16 %v195
    %v1943 = vunpack.c.l.b16 %v196
    %v1944 = vunpack.c.h.b16 %v196
    %v1945 = vunpack.c.l.b16 %v197
    %v1946 = vunpack.c.h.b16 %v197
    %v1947 = vunpack.c.l.b16 %v198
    %v1948 = vunpack.c.h.b16 %v198
    %v1949 = vunpack.c.l.b16 %v199
    %v1950 = vunpack.c.h.b16 %v199
    %v1951 = vunpack.c.l.b16 %v200
    %v1952 = vunpack.c.h.b16 %v200
    %v1953 = vunpack.c.l.b16 %v201
    %v1954 = vunpack.c.h.b16 %v201
    %v1955 = vunpack.c.l.b16 %v202
    %v1956 = vunpack.c.h.b16 %v202
    %v1957 = vunpack.c.l.b16 %v203
    %v1958 = vunpack.c.h.b16 %v203
    %v1959 = vunpack.c.l.b16 %v204
    %v1960 = vunpack.c.h.b16 %v204
    %v1961 = vunpack.c.l.b16 %v205
    %v1962 = vunpack.c.h.b16 %v205
    %v1963 = vunpack.c.l.b16 %v206
    %v1964 = vunpack.c.h.b16 %v206
    %v1965 = vunpack.c.l.b16 %v207
    %v1966 = vunpack.c.h.b16 %v207
    %v1967 = vunpack.c.l.b16 %v208
    %v1968 = vunpack.c.h.b16 %v208
    %v1969 = vunpack.c.l.b16 %v209
    %v1970 = vunpack.c.h.b16 %v209
    %v1971 = vunpack.c.l.b16 %v210
    %v1972 = vunpack.c.h.b16 %v210
    %v1973 = vunpack.c.l.b16 %v211
    %v1974 = vunpack.c.h.b16 %v211
    %v1975 = vunpack.c.l.b16 %v212
    %v1976 = vunpack.c.h.b16 %v212
    %v1977 = vunpack.c.l.b16 %v213
    %v1978 = vunpack.c.h.b16 %v213
    %v1979 = vunpack.c.l.b16 %v214
    %v1980 = vunpack.c.h.b16 %v214
    %v1981 = vunpack.c.l.b16 %v215
    %v1982 = vunpack.c.h.b16 %v215
    %v1983 = vunpack.c.l.b16 %v216
    %v1984 = vunpack.c.h.b16 %v216
    %v1985 = vunpack.c.l.b16 %v217
    %v1986 = vunpack.c.h.b16 %v217
    %v1987 = vunpack.c.l.b16 %v218
    %v1988 = vunpack.c.h.b16 %v218
    %v1989 = vunpack.c.l.b16 %v219
    %v1990 = vunpack.c.h.b16 %v219
    %v1991 = vunpack.c.l.b16 %v220
    %v1992 = vunpack.c.h.b16 %v220
    %v1993 = vunpack.c.l.b16 %v221
    %v1994 = vunpack.c.h.b16 %v221
    %v1995 = vunpack.c.l.b16 %v222
    %v1996 = vunpack.c.h.b16 %v222
    %v1997 = vunpack.c.l.b16 %v223
    %v1998 = vunpack.c.h.b16 %v223
    %v1999 = vunpack.c.l.b16 %v224
    %v2000 = vunpack.c.h.b16 %v224
    %v2001 = vunpack.c.l.b16 %v225
    %v2002 = vunpack.c.h.b16 %v225
    %v2003 = vunpack.c.l.b16 %v226
    %v2004 = vunpack.c.h.b16 %v226
    %v2005 = vunpack.c.l.b16 %v227
    %v2006 = vunpack.c.h.b16 %v227
    %v2007 = vunpack.c.l.b16 %v228
    %v2008 = vunpack.c.h.b16 %v228
    %v2009 = vunpack.c.l.b16 %v229
    %v2010 = vunpack.c.h.b16 %v229
    %v2011 = vunpack.c.l.b16 %v230
    %v2012 = vunpack.c.h.b16 %v230
    %v2013 = vunpack.c.l.b16 %v231
    %v2014 = vunpack.c.h.b16 %v231
    %v2015 = vunpack.c.l.b16 %v232
    %v2016 = vunpack.c.h.b16 %v232
    %v2017 = vunpack.c.l.b16 %v233
    %v2018 = vunpack.c.h.b16 %v233
    %v2019 = vunpack.c.l.b16 %v234
    %v2020 = vunpack.c.h.b16 %v234
    %v2021 = vunpack.c.l.b16 %v235
    %v2022 = vunpack.c.h.b16 %v235
    %v2023 = vunpack.c.l.b16 %v236
    %v2024 = vunpack.c.h.b16 %v236
    %v2025 = vunpack.c.l.b16 %v237
    %v2026 = vunpack.c.h.b16 %v237
    %v2027 = vunpack.c.l.b16 %v238
    %v2028 = vunpack.c.h.b16 %v238
    %v2029 = vunpack.c.l.b16 %v239
    %v2030 = vunpack.c.h.b16 %v239
    %v2031 = vunpack.c.l.b16 %v240
    %v2032 = vunpack.c.h.b16 %v240
    %v2033 = vunpack.c.l.b16 %v241
    %v2034 = vunpack.c.h.b16 %v241
    %v2035 = vunpack.c.l.b16 %v242
    %v2036 = vunpack.c.h.b16 %v242
    %v2037 = vunpack.c.l.b16 %v243
    %v2038 = vunpack.c.h.b16 %v243
    %v2039 = vunpack.c.l.b16 %v244
    %v2040 = vunpack.c.h.b16 %v244
    %v2041 = vunpack.c.l.b16 %v245
    %v2042 = vunpack.c.h.b16 %v245
    %v2043 = vunpack.c.l.b16 %v246
    %v2044 = vunpack.c.h.b16 %v246
    %v2045 = vunpack.c.l.b16 %v247
    %v2046 = vunpack.c.h.b16 %v247
    %v2047 = vunpack.c.l.b16 %v248
    %v2048 = vunpack.c.h.b16 %v248
    %v2049 = vunpack.c.l.b16 %v249
    %v2050 = vunpack.c.h.b16 %v249
    %v2051 = vunpack.c.l.b16 %v250
    %v2052 = vunpack.c.h.b16 %v250
    %v2053 = vunpack.c.l.b16 %v251
    %v2054 = vunpack.c.h.b16 %v251
    %v2055 = vunpack.c.l.b16 %v252
    %v2056 = vunpack.c.h.b16 %v252
    %v2057 = vunpack.c.l.b16 %v253
    %v2058 = vunpack.c.h.b16 %v253
    %v2059 = vunpack.c.l.b16 %v254
    %v2060 = vunpack.c.h.b16 %v254
    %v2061 = vunpack.c.l.b16 %v255
    %v2062 = vunpack.c.h.b16 %v255
    %v2063 = vunpack.c.l.b16 %v256
    %v2064 = vunpack.c.h.b16 %v256
    %v2065 = vunpack.c.l.b16 %v257
    %v2066 = vunpack.c.h.b16 %v257
    %v2067 = vunpack.c.l.b16 %v258
    %v2068 = vunpack.c.h.b16 %v258
    %v2069 = vunpack.c.l.b16 %v259
    %v2070 = vunpack.c.h.b16 %v259
    %v2071 = vunpack.c.l.b16 %v260
    %v2072 = vunpack.c.h.b16 %v260
    %v2073 = vunpack.c.l.b16 %v261
    %v2074 = vunpack.c.h.b16 %v261
    %v2075 = vunpack.c.l.b16 %v262
    %v2076 = vunpack.c.h.b16 %v262
    %v2077 = vunpack.c.l.b16 %v263
    %v2078 = vunpack.c.h.b16 %v263
    %v2079 = vunpack.c.l.b16 %v264
    %v2080 = vunpack.c.h.b16 %v264
    %v2081 = vunpack.c.l.b16 %v265
    %v2082 = vunpack.c.h.b16 %v265
    %v2083 = vunpack.c.l.b16 %v266
    %v2084 = vunpack.c.h.b16 %v266
    %v2085 = vunpack.c.l.b16 %v267
    %v2086 = vunpack.c.h.b16 %v267
    %v2087 = vunpack.c.l.b16 %v268
    %v2088 = vunpack.c.h.b16 %v268
    %v2089 = vunpack.c.l.b16 %v269
    %v2090 = vunpack.c.h.b16 %v269
    %v2091 = vunpack.c.l.b16 %v270
    %v2092 = vunpack.c.h.b16 %v270
    %v2093 = vunpack.c.l.b16 %v271
    %v2094 = vunpack.c.h.b16 %v271
    %v2095 = vunpack.c.l.b16 %v272
    %v2096 = vunpack.c.h.b16 %v272
    %v2097 = vunpack.c.l.b16 %v273
    %v2098 = vunpack.c.h.b16 %v273
    %v2099 = vunpack.c.l.b16 %v274
    %v2100 = vunpack.c.h.b16 %v274
    %v2101 = vunpack.c.l.b16 %v275
    %v2102 = vunpack.c.h.b16 %v275
    %v2103 = vunpack.c.l.b16 %v276
    %v2104 = vunpack.c.h.b16 %v276
    %v2105 = vunpack.c.l.b16 %v277
    %v2106 = vunpack.c.h.b16 %v277
    %v2107 = vunpack.c.l.b16 %v278
    %v2108 = vunpack.c.h.b16 %v278
    %v2109 = vunpack.c.l.b16 %v279
    %v2110 = vunpack.c.h.b16 %v279
    %v2111 = vunpack.c.l.b16 %v280
    %v2112 = vunpack.c.h.b16 %v280
    %v2113 = vunpack.c.l.b16 %v281
    %v2114 = vunpack.c.h.b16 %v281
    %v2115 = vunpack.c.l.b16 %v282
    %v2116 = vunpack.c.h.b16 %v282
    %v2117 = vunpack.c.l.b16 %v283
    %v2118 = vunpack.c.h.b16 %v283
    %v2119 = vunpack.c.l.b16 %v284
    %v2120 = vunpack.c.h.b16 %v284
    %v2121 = vunpack.c.l.b16 %v285
    %v2122 = vunpack.c.h.b16 %v285
    %v2123 = vunpack.c.l.b16 %v286
    %v2124 = vunpack.c.h.b16 %v286
    %v2125 = vunpack.c.l.b16 %v287
    %v2126 = vunpack.c.h.b16 %v287
    %v2127 = vunpack.c.l.b16 %v288
    %v2128 = vunpack.c.h.b16 %v288
    %v2129 = vunpack.c.l.b16 %v289
    %v2130 = vunpack.c.h.b16 %v289
    %v2131 = vunpack.c.l.b16 %v290
    %v2132 = vunpack.c.h.b16 %v290
    %v2133 = vunpack.c.l.b16 %v291
    %v2134 = vunpack.c.h.b16 %v291
    %v2135 = vunpack.c.l.b16 %v292
    %v2136 = vunpack.c.h.b16 %v292
    %v2137 = vunpack.c.l.b16 %v293
    %v2138 = vunpack.c.h.b16 %v293
    %v2139 = vunpack.c.l.b16 %v294
    %v2140 = vunpack.c.h.b16 %v294
    %v2141 = vunpack.c.l.b16 %v295
    %v2142 = vunpack.c.h.b16 %v295
    %v2143 = vunpack.c.l.b16 %v296
    %v2144 = vunpack.c.h.b16 %v296
    %v2145 = vunpack.c.l.b16 %v297
    %v2146 = vunpack.c.h.b16 %v297
    %v2147 = vunpack.c.l.b16 %v298
    %v2148 = vunpack.c.h.b16 %v298
    %v2149 = vunpack.c.l.b16 %v299
    %v2150 = vunpack.c.h.b16 %v299
    %v2151 = vunpack.c.l.b16 %v300
    %v2152 = vunpack.c.h.b16 %v300
    %v2153 = vunpack.c.l.b16 %v301
    %v2154 = vunpack.c.h.b16 %v301
    %v2155 = vunpack.c.l.b16 %v302
    %v2156 = vunpack.c.h.b16 %v302
    %v2157 = vunpack.c.l.b16 %v303
    %v2158 = vunpack.c.h.b16 %v303
    %v2159 = vunpack.c.l.b16 %v304
    %v2160 = vunpack.c.h.b16 %v304
    %v2161 = vunpack.c.l.b16 %v305
    %v2162 = vunpack.c.h.b16 %v305
    %v2163 = vunpack.c.l.b16 %v306
    %v2164 = vunpack.c.h.b16 %v306
    %v2165 = vunpack.c.l.b16 %v307
    %v2166 = vunpack.c.h.b16 %v307
    %v2167 = vunpack.c.l.b16 %v308
    %v2168 = vunpack.c.h.b16 %v308
    %v2169 = vunpack.c.l.b16 %v309
    %v2170 = vunpack.c.h.b16 %v309
    %v2171 = vunpack.c.l.b16 %v310
    %v2172 = vunpack.c.h.b16 %v310
    %v2173 = vunpack.c.l.b16 %v311
    %v2174 = vunpack.c.h.b16 %v311
    %v2175 = vunpack.c.l.b16 %v312
    %v2176 = vunpack.c.h.b16 %v312
    %v2177 = vunpack.c.l.b16 %v313
    %v2178 = vunpack.c.h.b16 %v313
    %v2179 = vunpack.c.l.b16 %v314
    %v2180 = vunpack.c.h.b16 %v314
    %v2181 = vunpack.c.l.b16 %v315
    %v2182 = vunpack.c.h.b16 %v315
    %v2183 = vunpack.c.l.b16 %v316
    %v2184 = vunpack.c.h.b16 %v316
    %v2185 = vunpack.c.l.b16 %v317
    %v2186 = vunpack.c.h.b16 %v317
    %v2187 = vunpack.c.l.b16 %v318
    %v2188 = vunpack.c.h.b16 %v318
    %v2189 = vunpack.c.l.b16 %v319
    %v2190 = vunpack.c.h.b16 %v319
    %v2191 = vunpack.c.l.b16 %v320
    %v2192 = vunpack.c.h.b16 %v320
    %v2193 = vunpack.c.l.b16 %v321
    %v2194 = vunpack.c.h.b16 %v321
    %v2195 = vunpack.c.l.b16 %v322
    %v2196 = vunpack.c.h.b16 %v322
    %v2197 = vunpack.c.l.b16 %v323
    %v2198 = vunpack.c.h.b16 %v323
    %v2199 = vunpack.c.l.b16 %v324
    %v2200 = vunpack.c.h.b16 %v324
    %v2201 = vunpack.c.l.b16 %v325
    %v2202 = vunpack.c.h.b16 %v325
    %v2203 = vunpack.c.l.b16 %v326
    %v2204 = vunpack.c.h.b16 %v326
    %v2205 = vunpack.c.l.b16 %v327
    %v2206 = vunpack.c.h.b16 %v327
    %v2207 = vunpack.c.l.b16 %v328
    %v2208 = vunpack.c.h.b16 %v328
    %v2209 = vunpack.c.l.b16 %v329
    %v2210 = vunpack.c.h.b16 %v329
    %v2211 = vunpack.c.l.b16 %v330
    %v2212 = vunpack.c.h.b16 %v330
    %v2213 = vunpack.c.l.b16 %v331
    %v2214 = vunpack.c.h.b16 %v331
    %v2215 = vunpack.c.l.b16 %v332
    %v2216 = vunpack.c.h.b16 %v332
    %v2217 = vunpack.c.l.b16 %v333
    %v2218 = vunpack.c.h.b16 %v333
    %v2219 = vunpack.c.l.b16 %v334
    %v2220 = vunpack.c.h.b16 %v334
    %v2221 = vunpack.c.l.b16 %v335
    %v2222 = vunpack.c.h.b16 %v335
    %v2223 = vunpack.c.l.b16 %v336
    %v2224 = vunpack.c.h.b16 %v336
    %v2225 = vunpack.c.l.b16 %v337
    %v2226 = vunpack.c.h.b16 %v337
    %v2227 = vunpack.c.l.b16 %v338
    %v2228 = vunpack.c.h.b16 %v338
    %v2229 = vunpack.c.l.b16 %v339
    %v2230 = vunpack.c.h.b16 %v339
    %v2231 = vunpack.c.l.b16 %v340
    %v2232 = vunpack.c.h.b16 %v340
    %v2233 = vunpack.c.l.b16 %v341
    %v2234 = vunpack.c.h.b16 %v341
    %v2235 = vunpack.c.l.b16 %v342
    %v2236 = vunpack.c.h.b16 %v342
    %v2237 = vunpack.c.l.b16 %v343
    %v2238 = vunpack.c.h.b16 %v343
    %v2239 = vunpack.c.l.b16 %v344
    %v2240 = vunpack.c.h.b16 %v344
    %v2241 = vunpack.c.l.b16 %v345
    %v2242 = vunpack.c.h.b16 %v345
    %v2243 = vunpack.c.l.b16 %v346
    %v2244 = vunpack.c.h.b16 %v346
    %v2245 = vunpack.c.l.b16 %v347
    %v2246 = vunpack.c.h.b16 %v347
    %v2247 = vunpack.c.l.b16 %v348
    %v2248 = vunpack.c.h.b16 %v348
    %v2249 = vunpack.c.l.b16 %v349
    %v2250 = vunpack.c.h.b16 %v349
    %v2251 = vunpack.c.l.b16 %v350
    %v2252 = vunpack.c.h.b16 %v350
    %v2253 = vunpack.c.l.b16 %v351
    %v2254 = vunpack.c.h.b16 %v351
    %v2255 = vunpack.c.l.b16 %v352
    %v2256 = vunpack.c.h.b16 %v352
    %v2257 = vunpack.c.l.b16 %v353
    %v2258 = vunpack.c.h.b16 %v353
    %v2259 = vunpack.c.l.b16 %v354
    %v2260 = vunpack.c.h.b16 %v354
    %v2261 = vunpack.c.l.b16 %v355
    %v2262 = vunpack.c.h.b16 %v355
    %v2263 = vunpack.c.l.b16 %v356
    %v2264 = vunpack.c.h.b16 %v356
    %v2265 = vunpack.c.l.b16 %v357
    %v2266 = vunpack.c.h.b16 %v357
    %v2267 = vunpack.c.l.b16 %v358
    %v2268 = vunpack.c.h.b16 %v358
    %v2269 = vunpack.c.l.b16 %v359
    %v2270 = vunpack.c.h.b16 %v359
    %v2271 = vunpack.c.l.b16 %v360
    %v2272 = vunpack.c.h.b16 %v360
    %v2273 = vunpack.c.l.b16 %v361
    %v2274 = vunpack.c.h.b16 %v361
    %v2275 = vunpack.c.l.b16 %v362
    %v2276 = vunpack.c.h.b16 %v362
    %v2277 = vunpack.c.l.b16 %v363
    %v2278 = vunpack.c.h.b16 %v363
    %v2279 = vunpack.c.l.b16 %v364
    %v2280 = vunpack.c.h.b16 %v364
    %v2281 = vunpack.c.l.b16 %v365
    %v2282 = vunpack.c.h.b16 %v365
    %v2283 = vunpack.c.l.b16 %v366
    %v2284 = vunpack.c.h.b16 %v366
    %v2285 = vunpack.c.l.b16 %v367
    %v2286 = vunpack.c.h.b16 %v367
    %v2287 = vunpack.c.l.b16 %v368
    %v2288 = vunpack.c.h.b16 %v368
    %v2289 = vunpack.c.l.b16 %v369
    %v2290 = vunpack.c.h.b16 %v369
    %v2291 = vunpack.c.l.b16 %v370
    %v2292 = vunpack.c.h.b16 %v370
    %v2293 = vunpack.c.l.b16 %v371
    %v2294 = vunpack.c.h.b16 %v371
    %v2295 = vunpack.c.l.b16 %v372
    %v2296 = vunpack.c.h.b16 %v372
    %v2297 = vunpack.c.l.b16 %v373
    %v2298 = vunpack.c.h.b16 %v373
    %v2299 = vunpack.c.l.b16 %v374
    %v2300 = vunpack.c.h.b16 %v374
    %v2301 = vunpack.c.l.b16 %v375
    %v2302 = vunpack.c.h.b16 %v375
    %v2303 = vunpack.c.l.b16 %v376
    %v2304 = vunpack.c.h.b16 %v376
    %v2305 = vunpack.c.l.b16 %v377
    %v2306 = vunpack.c.h.b16 %v377
    %v2307 = vunpack.c.l.b16 %v378
    %v2308 = vunpack.c.h.b16 %v378
    %v2309 = vunpack.c.l.b16 %v379
    %v2310 = vunpack.c.h.b16 %v379
    %v2311 = vunpack.c.l.b16 %v380
    %v2312 = vunpack.c.h.b16 %v380
    %v2313 = vunpack.c.l.b16 %v381
    %v2314 = vunpack.c.h.b16 %v381
    %v2315 = vunpack.c.l.b16 %v382
    %v2316 = vunpack.c.h.b16 %v382
    %v2317 = vunpack.c.l.b16 %v383
    %v2318 = vunpack.c.h.b16 %v383
    %v2319 = vunpack.c.l.b16 %v384
    %v2320 = vunpack.c.h.b16 %v384
    %v2321 = vunpack.c.l.b16 %v385
    %v2322 = vunpack.c.h.b16 %v385
    %v2323 = vunpack.c.l.b16 %v386
    %v2324 = vunpack.c.h.b16 %v386
    %v2325 = vunpack.c.l.b16 %v387
    %v2326 = vunpack.c.h.b16 %v387
    %v2327 = vunpack.c.l.b16 %v388
    %v2328 = vunpack.c.h.b16 %v388
    %v2329 = vunpack.c.l.b16 %v389
    %v2330 = vunpack.c.h.b16 %v389
    %v2331 = vunpack.c.l.b16 %v390
    %v2332 = vunpack.c.h.b16 %v390
    %v2333 = vunpack.c.l.b16 %v391
    %v2334 = vunpack.c.h.b16 %v391
    %v2335 = vunpack.c.l.b16 %v392
    %v2336 = vunpack.c.h.b16 %v392
    %v2337 = vunpack.c.l.b16 %v393
    %v2338 = vunpack.c.h.b16 %v393
    %v2339 = vunpack.c.l.b16 %v394
    %v2340 = vunpack.c.h.b16 %v394
    %v2341 = vunpack.c.l.b16 %v395
    %v2342 = vunpack.c.h.b16 %v395
    %v2343 = vunpack.c.l.b16 %v396
    %v2344 = vunpack.c.h.b16 %v396
    %v2345 = vunpack.c.l.b16 %v397
    %v2346 = vunpack.c.h.b16 %v397
    %v2347 = vunpack.c.l.b16 %v398
    %v2348 = vunpack.c.h.b16 %v398
    %v2349 = vunpack.c.l.b16 %v399
    %v2350 = vunpack.c.h.b16 %v399
    %v2351 = vunpack.c.l.b16 %v400
    %v2352 = vunpack.c.h.b16 %v400
    %v2353 = vunpack.c.l.b16 %v401
    %v2354 = vunpack.c.h.b16 %v401
    %v2355 = vunpack.c.l.b16 %v402
    %v2356 = vunpack.c.h.b16 %v402
    %v2357 = vunpack.c.l.b16 %v403
    %v2358 = vunpack.c.h.b16 %v403
    %v2359 = vunpack.c.l.b16 %v404
    %v2360 = vunpack.c.h.b16 %v404
    %v2361 = vunpack.c.l.b16 %v405
    %v2362 = vunpack.c.h.b16 %v405
    %v2363 = vunpack.c.l.b16 %v406
    %v2364 = vunpack.c.h.b16 %v406
    %v2365 = vunpack.c.l.b16 %v407
    %v2366 = vunpack.c.h.b16 %v407
    %v2367 = vunpack.c.l.b16 %v408
    %v2368 = vunpack.c.h.b16 %v408
    %v2369 = vunpack.c.l.b16 %v409
    %v2370 = vunpack.c.h.b16 %v409
    %v2371 = vunpack.c.l.b16 %v410
    %v2372 = vunpack.c.h.b16 %v410
    %v2373 = vunpack.c.l.b16 %v411
    %v2374 = vunpack.c.h.b16 %v411
    %v2375 = vunpack.c.l.b16 %v412
    %v2376 = vunpack.c.h.b16 %v412
    %v2377 = vunpack.c.l.b16 %v413
    %v2378 = vunpack.c.h.b16 %v413
    %v2379 = vunpack.c.l.b16 %v414
    %v2380 = vunpack.c.h.b16 %v414
    %v2381 = vunpack.c.l.b16 %v415
    %v2382 = vunpack.c.h.b16 %v415
    %v2383 = vunpack.c.l.b16 %v416
    %v2384 = vunpack.c.h.b16 %v416
    %v2385 = vunpack.c.l.b16 %v417
    %v2386 = vunpack.c.h.b16 %v417
    %v2387 = vunpack.c.l.b16 %v418
    %v2388 = vunpack.c.h.b16 %v418
    %v2389 = vunpack.c.l.b16 %v419
    %v2390 = vunpack.c.h.b16 %v419
    %v2391 = vunpack.c.l.b16 %v420
    %v2392 = vunpack.c.h.b16 %v420
    %v2393 = vunpack.c.l.b16 %v421
    %v2394 = vunpack.c.h.b16 %v421
    %v2395 = vunpack.c.l.b16 %v422
    %v2396 = vunpack.c.h.b16 %v422
    %v2397 = vunpack.c.l.b16 %v423
    %v2398 = vunpack.c.h.b16 %v423
    %v2399 = vunpack.c.l.b16 %v424
    %v2400 = vunpack.c.h.b16 %v424
    %v2401 = vunpack.c.l.b16 %v425
    %v2402 = vunpack.c.h.b16 %v425
    %v2403 = vunpack.c.l.b16 %v426
    %v2404 = vunpack.c.h.b16 %v426
    %v2405 = vunpack.c.l.b16 %v427
    %v2406 = vunpack.c.h.b16 %v427
    %v2407 = vunpack.c.l.b16 %v428
    %v2408 = vunpack.c.h.b16 %v428
    %v2409 = vunpack.c.l.b16 %v429
    %v2410 = vunpack.c.h.b16 %v429
    %v2411 = vunpack.c.l.b16 %v430
    %v2412 = vunpack.c.h.b16 %v430
    %v2413 = vunpack.c.l.b16 %v431
    %v2414 = vunpack.c.h.b16 %v431
    %v2415 = vunpack.c.l.b16 %v432
    %v2416 = vunpack.c.h.b16 %v432
    %v2417 = vunpack.c.l.b16 %v433
    %v2418 = vunpack.c.h.b16 %v433
    %v2419 = vunpack.c.l.b16 %v434
    %v2420 = vunpack.c.h.b16 %v434
    %v2421 = vunpack.c.l.b16 %v435
    %v2422 = vunpack.c.h.b16 %v435
    %v2423 = vunpack.c.l.b16 %v436
    %v2424 = vunpack.c.h.b16 %v436
    %v2425 = vunpack.c.l.b16 %v437
    %v2426 = vunpack.c.h.b16 %v437
    %v2427 = vunpack.c.l.b16 %v438
    %v2428 = vunpack.c.h.b16 %v438
    %v2429 = vunpack.c.l.b16 %v439
    %v2430 = vunpack.c.h.b16 %v439
    %v2431 = vunpack.c.l.b16 %v440
    %v2432 = vunpack.c.h.b16 %v440
    %v2433 = vunpack.c.l.b16 %v441
    %v2434 = vunpack.c.h.b16 %v441
    %v2435 = vunpack.c.l.b16 %v442
    %v2436 = vunpack.c.h.b16 %v442
    %v2437 = vunpack.c.l.b16 %v443
    %v2438 = vunpack.c.h.b16 %v443
    %v2439 = vunpack.c.l.b16 %v444
    %v2440 = vunpack.c.h.b16 %v444
    %v2441 = vunpack.c.l.b16 %v445
    %v2442 = vunpack.c.h.b16 %v445
    %v2443 = vunpack.c.l.b16 %v446
    %v2444 = vunpack.c.h.b16 %v446
    %v2445 = vunpack.c.l.b16 %v447
    %v2446 = vunpack.c.h.b16 %v447
    %v2447 = vunpack.c.l.b16 %v448
    %v2448 = vunpack.c.h.b16 %v448
    %v2449 = vunpack.c.l.b16 %v449
    %v2450 = vunpack.c.h.b16 %v449
    %v2451 = vunpack.c.l.b16 %v450
    %v2452 = vunpack.c.h.b16 %v450
    %v2453 = vunpack.c.l.b16 %v451
    %v2454 = vunpack.c.h.b16 %v451
    %v2455 = vunpack.c.l.b16 %v452
    %v2456 = vunpack.c.h.b16 %v452
    %v2457 = vunpack.c.l.b16 %v453
    %v2458 = vunpack.c.h.b16 %v453
    %v2459 = vunpack.c.l.b16 %v454
    %v2460 = vunpack.c.h.b16 %v454
    %v2461 = vunpack.c.l.b16 %v455
    %v2462 = vunpack.c.h.b16 %v455
    %v2463 = vunpack.c.l.b16 %v456
    %v2464 = vunpack.c.h.b16 %v456
    %v2465 = vunpack.c.l.b16 %v457
    %v2466 = vunpack.c.h.b16 %v457
    %v2467 = vunpack.c.l.b16 %v458
    %v2468 = vunpack.c.h.b16 %v458
    %v2469 = vunpack.c.l.b16 %v459
    %v2470 = vunpack.c.h.b16 %v459
    %v2471 = vunpack.c.l.b16 %v460
    %v2472 = vunpack.c.h.b16 %v460
    %v2473 = vunpack.c.l.b16 %v461
    %v2474 = vunpack.c.h.b16 %v461
    %v2475 = vunpack.c.l.b16 %v462
    %v2476 = vunpack.c.h.b16 %v462
    %v2477 = vunpack.c.l.b16 %v463
    %v2478 = vunpack.c.h.b16 %v463
    %v2479 = vunpack.c.l.b16 %v464
    %v2480 = vunpack.c.h.b16 %v464
    %v2481 = vunpack.c.l.b16 %v465
    %v2482 = vunpack.c.h.b16 %v465
    %v2483 = vunpack.c.l.b16 %v466
    %v2484 = vunpack.c.h.b16 %v466
    %v2485 = vunpack.c.l.b16 %v467
    %v2486 = vunpack.c.h.b16 %v467
    %v2487 = vunpack.c.l.b16 %v468
    %v2488 = vunpack.c.h.b16 %v468
    %v2489 = vunpack.c.l.b16 %v469
    %v2490 = vunpack.c.h.b16 %v469
    %v2491 = vunpack.c.l.b16 %v470
    %v2492 = vunpack.c.h.b16 %v470
    %v2493 = vunpack.c.l.b16 %v471
    %v2494 = vunpack.c.h.b16 %v471
    %v2495 = vunpack.c.l.b16 %v472
    %v2496 = vunpack.c.h.b16 %v472
    %v2497 = vunpack.c.l.b16 %v473
    %v2498 = vunpack.c.h.b16 %v473
    %v2499 = vunpack.c.l.b16 %v474
    %v2500 = vunpack.c.h.b16 %v474
    %v2501 = vunpack.c.l.b16 %v475
    %v2502 = vunpack.c.h.b16 %v475
    %v2503 = vunpack.c.l.b16 %v476
    %v2504 = vunpack.c.h.b16 %v476
    %v2505 = vunpack.c.l.b16 %v477
    %v2506 = vunpack.c.h.b16 %v477
    %v2507 = vunpack.c.l.b16 %v478
    %v2508 = vunpack.c.h.b16 %v478
    %v2509 = vunpack.c.l.b16 %v479
    %v2510 = vunpack.c.h.b16 %v479
    %v2511 = vunpack.c.l.b16 %v480
    %v2512 = vunpack.c.h.b16 %v480
    %v2513 = vunpack.c.l.b16 %v481
    %v2514 = vunpack.c.h.b16 %v481
    %v2515 = vunpack.c.l.b16 %v482
    %v2516 = vunpack.c.h.b16 %v482
    %v2517 = vunpack.c.l.b16 %v483
    %v2518 = vunpack.c.h.b16 %v483
    %v2519 = vunpack.c.l.b16 %v484
    %v2520 = vunpack.c.h.b16 %v484
    %v2521 = vunpack.c.l.b16 %v485
    %v2522 = vunpack.c.h.b16 %v485
    %v2523 = vunpack.c.l.b16 %v486
    %v2524 = vunpack.c.h.b16 %v486
    %v2525 = vunpack.c.l.b16 %v487
    %v2526 = vunpack.c.h.b16 %v487
    %v2527 = vunpack.c.l.b16 %v488
    %v2528 = vunpack.c.h.b16 %v488
    %v2529 = vunpack.c.l.b16 %v489
    %v2530 = vunpack.c.h.b16 %v489
    %v2531 = vunpack.c.l.b16 %v490
    %v2532 = vunpack.c.h.b16 %v490
    %v2533 = vunpack.c.l.b16 %v491
    %v2534 = vunpack.c.h.b16 %v491
    %v2535 = vunpack.c.l.b16 %v492
    %v2536 = vunpack.c.h.b16 %v492
    %v2537 = vunpack.c.l.b16 %v493
    %v2538 = vunpack.c.h.b16 %v493
    %v2539 = vunpack.c.l.b16 %v494
    %v2540 = vunpack.c.h.b16 %v494
    %v2541 = vunpack.c.l.b16 %v495
    %v2542 = vunpack.c.h.b16 %v495
    %v2543 = vunpack.c.l.b16 %v496
    %v2544 = vunpack.c.h.b16 %v496
    %v2545 = vunpack.c.l.b16 %v497
    %v2546 = vunpack.c.h.b16 %v497
    %v2547 = vunpack.c.l.b16 %v498
    %v2548 = vunpack.c.h.b16 %v498
    %v2549 = vunpack.c.l.b16 %v499
    %v2550 = vunpack.c.h.b16 %v499
    %v2551 = vunpack.c.l.b16 %v500
    %v2552 = vunpack.c.h.b16 %v500
    %v2553 = vunpack.c.l.b16 %v501
    %v2554 = vunpack.c.h.b16 %v501
    %v2555 = vunpack.c.l.b16 %v502
    %v2556 = vunpack.c.h.b16 %v502
    %v2557 = vunpack.c.l.b16 %v503
    %v2558 = vunpack.c.h.b16 %v503
    %v2559 = vunpack.c.l.b16 %v504
    %v2560 = vunpack.c.h.b16 %v504
    %v2561 = vunpack.c.l.b16 %v505
    %v2562 = vunpack.c.h.b16 %v505
    %v2563 = vunpack.c.l.b16 %v506
    %v2564 = vunpack.c.h.b16 %v506
    %v2565 = vunpack.c.l.b16 %v507
    %v2566 = vunpack.c.h.b16 %v507
    %v2567 = vunpack.c.l.b16 %v508
    %v2568 = vunpack.c.h.b16 %v508
    %v2569 = vunpack.c.l.b16 %v509
    %v2570 = vunpack.c.h.b16 %v509
    %v2571 = vunpack.c.l.b16 %v510
    %v2572 = vunpack.c.h.b16 %v510
    %v2573 = vunpack.c.l.b16 %v511
    %v2574 = vunpack.c.h.b16 %v511
    %v2575 = vunpack.c.l.b16 %v512
    %v2576 = vunpack.c.h.b16 %v512
    %v2577 = vunpack.c.l.b16 %v513
    %v2578 = vunpack.c.h.b16 %v513
    %v2579 = vunpack.c.l.b16 %v514
    %v2580 = vunpack.c.h.b16 %v514
    %v2581 = vunpack.c.l.b16 %v515
    %v2582 = vunpack.c.h.b16 %v515
    %v2583 = vunpack.c.l.b16 %v516
    %v2584 = vunpack.c.h.b16 %v516
    %v2585 = vunpack.c.l.b16 %v517
    %v2586 = vunpack.c.h.b16 %v517
    %v2587 = vunpack.c.l.b16 %v518
    %v2588 = vunpack.c.h.b16 %v518
    %v2589 = vunpack.c.l.b16 %v519
    %v2590 = vunpack.c.h.b16 %v519
    %v2591 = vunpack.c.l.b16 %v520
    %v2592 = vunpack.c.h.b16 %v520
    %v2593 = vunpack.c.l.b16 %v521
    %v2594 = vunpack.c.h.b16 %v521
    %v2595 = vunpack.c.l.b16 %v522
    %v2596 = vunpack.c.h.b16 %v522
    %v2597 = vunpack.c.l.b16 %v523
    %v2598 = vunpack.c.h.b16 %v523
    %v2599 = vunpack.c.l.b16 %v524
    %v2600 = vunpack.c.h.b16 %v524
    %v2601 = vunpack.c.l.b16 %v525
    %v2602 = vunpack.c.h.b16 %v525
    %v2603 = vunpack.c.l.b16 %v526
    %v2604 = vunpack.c.h.b16 %v526
    %v2605 = vunpack.c.l.b16 %v527
    %v2606 = vunpack.c.h.b16 %v527
    %v2607 = vunpack.c.l.b16 %v528
    %v2608 = vunpack.c.h.b16 %v528
    %v2609 = vunpack.c.l.b16 %v529
    %v2610 = vunpack.c.h.b16 %v529
    %v2611 = vunpack.c.l.b16 %v530
    %v2612 = vunpack.c.h.b16 %v530
    %v2613 = vunpack.c.l.b16 %v531
    %v2614 = vunpack.c.h.b16 %v531
    %v2615 = vunpack.c.l.b16 %v532
    %v2616 = vunpack.c.h.b16 %v532
    %v2617 = vunpack.c.l.b16 %v533
    %v2618 = vunpack.c.h.b16 %v533
    %v2619 = vunpack.c.l.b16 %v534
    %v2620 = vunpack.c.h.b16 %v534
    %v2621 = vunpack.c.l.b16 %v535
    %v2622 = vunpack.c.h.b16 %v535
    %v2623 = vunpack.c.l.b16 %v536
    %v2624 = vunpack.c.h.b16 %v536
    %v2625 = vunpack.c.l.b16 %v537
    %v2626 = vunpack.c.h.b16 %v537
    %v2627 = vunpack.c.l.b16 %v538
    %v2628 = vunpack.c.h.b16 %v538
    %v2629 = vunpack.c.l.b16 %v539
    %v2630 = vunpack.c.h.b16 %v539
    %v2631 = vunpack.c.l.b16 %v540
    %v2632 = vunpack.c.h.b16 %v540
    %v2633 = vunpack.c.l.b16 %v541
    %v2634 = vunpack.c.h.b16 %v541
    %v2635 = vunpack.c.l.b16 %v542
    %v2636 = vunpack.c.h.b16 %v542
    %v2637 = vunpack.c.l.b16 %v543
    %v2638 = vunpack.c.h.b16 %v543
    %v2639 = vunpack.c.l.b16 %v544
    %v2640 = vunpack.c.h.b16 %v544
    %v2641 = vunpack.c.l.b16 %v545
    %v2642 = vunpack.c.h.b16 %v545
    %v2643 = vunpack.c.l.b16 %v546
    %v2644 = vunpack.c.h.b16 %v546
    %v2645 = vunpack.c.l.b16 %v547
    %v2646 = vunpack.c.h.b16 %v547
    %v2647 = vunpack.c.l.b16 %v548
    %v2648 = vunpack.c.h.b16 %v548
    %v2649 = vunpack.c.l.b16 %v549
    %v2650 = vunpack.c.h.b16 %v549
    %v2651 = vunpack.c.l.b16 %v550
    %v2652 = vunpack.c.h.b16 %v550
    %v2653 = vunpack.c.l.b16 %v551
    %v2654 = vunpack.c.h.b16 %v551
    %v2655 = vunpack.c.l.b16 %v552
    %v2656 = vunpack.c.h.b16 %v552
    %v2657 = vunpack.c.l.b16 %v553
    %v2658 = vunpack.c.h.b16 %v553
    %v2659 = vunpack.c.l.b16 %v554
    %v2660 = vunpack.c.h.b16 %v554
    %v2661 = vunpack.c.l.b16 %v555
    %v2662 = vunpack.c.h.b16 %v555
    %v2663 = vunpack.c.l.b16 %v556
    %v2664 = vunpack.c.h.b16 %v556
    %v2665 = vunpack.c.l.b16 %v557
    %v2666 = vunpack.c.h.b16 %v557
    %v2667 = vunpack.c.l.b16 %v558
    %v2668 = vunpack.c.h.b16 %v558
    %v2669 = vunpack.c.l.b16 %v559
    %v2670 = vunpack.c.h.b16 %v559
    %v2671 = vunpack.c.l.b16 %v560
    %v2672 = vunpack.c.h.b16 %v560
    %v2673 = vunpack.c.l.b16 %v561
    %v2674 = vunpack.c.h.b16 %v561
    %v2675 = vunpack.c.l.b16 %v562
    %v2676 = vunpack.c.h.b16 %v562
    %v2677 = vunpack.c.l.b16 %v563
    %v2678 = vunpack.c.h.b16 %v563
    %v2679 = vunpack.c.l.b16 %v564
    %v2680 = vunpack.c.h.b16 %v564
    %v2681 = vunpack.c.l.b16 %v565
    %v2682 = vunpack.c.h.b16 %v565
    %v2683 = vunpack.c.l.b16 %v566
    %v2684 = vunpack.c.h.b16 %v566
    %v2685 = vunpack.c.l.b16 %v567
    %v2686 = vunpack.c.h.b16 %v567
    %v2687 = vunpack.c.l.b16 %v568
    %v2688 = vunpack.c.h.b16 %v568
    %v2689 = vunpack.c.l.b16 %v569
    %v2690 = vunpack.c.h.b16 %v569
    %v2691 = vunpack.c.l.b16 %v570
    %v2692 = vunpack.c.h.b16 %v570
    %v2693 = vunpack.c.l.b16 %v571
    %v2694 = vunpack.c.h.b16 %v571
    %v2695 = vunpack.c.l.b16 %v572
    %v2696 = vunpack.c.h.b16 %v572
    %v2697 = vunpack.c.l.b16 %v573
    %v2698 = vunpack.c.h.b16 %v573
    %v2699 = vunpack.c.l.b16 %v574
    %v2700 = vunpack.c.h.b16 %v574
    %v2701 = vunpack.c.l.b16 %v575
    %v2702 = vunpack.c.h.b16 %v575
    %v2703 = vunpack.c.l.b16 %v576
    %v2704 = vunpack.c.h.b16 %v576
    %v2705 = vunpack.c.l.b16 %v577
    %v2706 = vunpack.c.h.b16 %v577
    %v2707 = vunpack.c.l.b16 %v578
    %v2708 = vunpack.c.h.b16 %v578
    %v2709 = vunpack.c.l.b16 %v579
    %v2710 = vunpack.c.h.b16 %v579
    %v2711 = vunpack.c.l.b16 %v580
    %v2712 = vunpack.c.h.b16 %v580
    %v2713 = vunpack.c.l.b16 %v581
    %v2714 = vunpack.c.h.b16 %v581
    %v2715 = vunpack.c.l.b16 %v582
    %v2716 = vunpack.c.h.b16 %v582
    %v2717 = vunpack.c.l.b16 %v583
    %v2718 = vunpack.c.h.b16 %v583
    %v2719 = vunpack.c.l.b16 %v584
    %v2720 = vunpack.c.h.b16 %v584
    %v2721 = vunpack.c.l.b16 %v585
    %v2722 = vunpack.c.h.b16 %v585
    %v2723 = vunpack.c.l.b16 %v586
    %v2724 = vunpack.c.h.b16 %v586
    %v2725 = vunpack.c.l.b16 %v587
    %v2726 = vunpack.c.h.b16 %v587
    %v2727 = vunpack.c.l.b16 %v588
    %v2728 = vunpack.c.h.b16 %v588
    %v2729 = vunpack.c.l.b16 %v589
    %v2730 = vunpack.c.h.b16 %v589
    %v2731 = vunpack.c.l.b16 %v590
    %v2732 = vunpack.c.h.b16 %v590
    %v2733 = vunpack.c.l.b16 %v591
    %v2734 = vunpack.c.h.b16 %v591
    %v2735 = vunpack.c.l.b16 %v592
    %v2736 = vunpack.c.h.b16 %v592
    %v2737 = vunpack.c.l.b16 %v593
    %v2738 = vunpack.c.h.b16 %v593
    %v2739 = vunpack.c.l.b16 %v594
    %v2740 = vunpack.c.h.b16 %v594
    %v2741 = vunpack.c.l.b16 %v595
    %v2742 = vunpack.c.h.b16 %v595
    %v2743 = vunpack.c.l.b16 %v596
    %v2744 = vunpack.c.h.b16 %v596
    %v2745 = vunpack.c.l.b16 %v597
    %v2746 = vunpack.c.h.b16 %v597
    %v2747 = vunpack.c.l.b16 %v598
    %v2748 = vunpack.c.h.b16 %v598
    %v2749 = vunpack.c.l.b16 %v599
    %v2750 = vunpack.c.h.b16 %v599
    %v2751 = vunpack.c.l.b16 %v600
    %v2752 = vunpack.c.h.b16 %v600
    %v2753 = vunpack.c.l.b16 %v601
    %v2754 = vunpack.c.h.b16 %v601
    %v2755 = vunpack.c.l.b16 %v602
    %v2756 = vunpack.c.h.b16 %v602
    %v2757 = vunpack.c.l.b16 %v603
    %v2758 = vunpack.c.h.b16 %v603
    %v2759 = vunpack.c.l.b16 %v604
    %v2760 = vunpack.c.h.b16 %v604
    %v2761 = vunpack.c.l.b16 %v605
    %v2762 = vunpack.c.h.b16 %v605
    %v2763 = vunpack.c.l.b16 %v606
    %v2764 = vunpack.c.h.b16 %v606
    %v2765 = vunpack.c.l.b16 %v607
    %v2766 = vunpack.c.h.b16 %v607
    %v2767 = vunpack.c.l.b16 %v608
    %v2768 = vunpack.c.h.b16 %v608
    %v2769 = vunpack.c.l.b16 %v609
    %v2770 = vunpack.c.h.b16 %v609
    %v2771 = vunpack.c.l.b16 %v610
    %v2772 = vunpack.c.h.b16 %v610
    %v2773 = vunpack.c.l.b16 %v611
    %v2774 = vunpack.c.h.b16 %v611
    %v2775 = vunpack.c.l.b16 %v612
    %v2776 = vunpack.c.h.b16 %v612
    %v2777 = vunpack.c.l.b16 %v613
    %v2778 = vunpack.c.h.b16 %v613
    %v2779 = vunpack.c.l.b16 %v614
    %v2780 = vunpack.c.h.b16 %v614
    %v2781 = vunpack.c.l.b16 %v615
    %v2782 = vunpack.c.h.b16 %v615
    %v2783 = vunpack.c.l.b16 %v616
    %v2784 = vunpack.c.h.b16 %v616
    %v2785 = vunpack.c.l.b16 %v617
    %v2786 = vunpack.c.h.b16 %v617
    %v2787 = vunpack.c.l.b16 %v618
    %v2788 = vunpack.c.h.b16 %v618
    %v2789 = vunpack.c.l.b16 %v619
    %v2790 = vunpack.c.h.b16 %v619
    %v2791 = vunpack.c.l.b16 %v620
    %v2792 = vunpack.c.h.b16 %v620
    %v2793 = vunpack.c.l.b16 %v621
    %v2794 = vunpack.c.h.b16 %v621
    %v2795 = vunpack.c.l.b16 %v622
    %v2796 = vunpack.c.h.b16 %v622
    %v2797 = vunpack.c.l.b16 %v623
    %v2798 = vunpack.c.h.b16 %v623
    %v2799 = vunpack.c.l.b16 %v624
    %v2800 = vunpack.c.h.b16 %v624
    %v2801 = vunpack.c.l.b16 %v625
    %v2802 = vunpack.c.h.b16 %v625
    %v2803 = vunpack.c.l.b16 %v626
    %v2804 = vunpack.c.h.b16 %v626
    %v2805 = vunpack.c.l.b16 %v627
    %v2806 = vunpack.c.h.b16 %v627
    %v2807 = vunpack.c.l.b16 %v628
    %v2808 = vunpack.c.h.b16 %v628
    %v2809 = vunpack.c.l.b16 %v629
    %v2810 = vunpack.c.h.b16 %v629
    %v2811 = vunpack.c.l.b16 %v630
    %v2812 = vunpack.c.h.b16 %v630
    %v2813 = vunpack.c.l.b16 %v631
    %v2814 = vunpack.c.h.b16 %v631
    %v2815 = vunpack.c.l.b16 %v632
    %v2816 = vunpack.c.h.b16 %v632
    %v2817 = vunpack.c.l.b16 %v633
    %v2818 = vunpack.c.h.b16 %v633
    %v2819 = vunpack.c.l.b16 %v634
    %v2820 = vunpack.c.h.b16 %v634
    %v2821 = vunpack.c.l.b16 %v635
    %v2822 = vunpack.c.h.b16 %v635
    %v2823 = vunpack.c.l.b16 %v636
    %v2824 = vunpack.c.h.b16 %v636
    %v2825 = vunpack.c.l.b16 %v637
    %v2826 = vunpack.c.h.b16 %v637
    %v2827 = vunpack.c.l.b16 %v638
    %v2828 = vunpack.c.h.b16 %v638
    %v2829 = vunpack.c.l.b16 %v639
    %v2830 = vunpack.c.h.b16 %v639
    %v2831 = vunpack.c.l.b16 %v640
    %v2832 = vunpack.c.h.b16 %v640
    %v2833 = vunpack.c.l.b16 %v641
    %v2834 = vunpack.c.h.b16 %v641
    %v2835 = vunpack.c.l.b16 %v642
    %v2836 = vunpack.c.h.b16 %v642
    %v2837 = vunpack.c.l.b16 %v643
    %v2838 = vunpack.c.h.b16 %v643
    %v2839 = vunpack.c.l.b16 %v644
    %v2840 = vunpack.c.h.b16 %v644
    %v2841 = vunpack.c.l.b16 %v645
    %v2842 = vunpack.c.h.b16 %v645
    %v2843 = vunpack.c.l.b16 %v646
    %v2844 = vunpack.c.h.b16 %v646
    %v2845 = vunpack.c.l.b16 %v647
    %v2846 = vunpack.c.h.b16 %v647
    %v2847 = vunpack.c.l.b16 %v648
    %v2848 = vunpack.c.h.b16 %v648
    %v2849 = vunpack.c.l.b16 %v649
    %v2850 = vunpack.c.h.b16 %v649
    %v2851 = vunpack.c.l.b16 %v650
    %v2852 = vunpack.c.h.b16 %v650
    %v2853 = vunpack.c.l.b16 %v651
    %v2854 = vunpack.c.h.b16 %v651
    %v2855 = vunpack.c.l.b16 %v652
    %v2856 = vunpack.c.h.b16 %v652
    %v2857 = vunpack.c.l.b16 %v653
    %v2858 = vunpack.c.h.b16 %v653
    %v2859 = vunpack.c.l.b16 %v654
    %v2860 = vunpack.c.h.b16 %v654
    %v2861 = vunpack.c.l.b16 %v655
    %v2862 = vunpack.c.h.b16 %v655
    %v2863 = vunpack.c.l.b16 %v656
    %v2864 = vunpack.c.h.b16 %v656
    %v2865 = vunpack.c.l.b16 %v657
    %v2866 = vunpack.c.h.b16 %v657
    %v2867 = vunpack.c.l.b16 %v658
    %v2868 = vunpack.c.h.b16 %v658
    %v2869 = vunpack.c.l.b16 %v659
    %v2870 = vunpack.c.h.b16 %v659
    %v2871 = vunpack.c.l.b16 %v660
    %v2872 = vunpack.c.h.b16 %v660
    %v2873 = vunpack.c.l.b16 %v661
    %v2874 = vunpack.c.h.b16 %v661
    %v2875 = vunpack.c.l.b16 %v662
    %v2876 = vunpack.c.h.b16 %v662
    %v2877 = vunpack.c.l.b16 %v663
    %v2878 = vunpack.c.h.b16 %v663
    %v2879 = vunpack.c.l.b16 %v664
    %v2880 = vunpack.c.h.b16 %v664
    %v2881 = vunpack.c.l.b16 %v665
    %v2882 = vunpack.c.h.b16 %v665
    %v2883 = vunpack.c.l.b16 %v666
    %v2884 = vunpack.c.h.b16 %v666
    %v2885 = vunpack.c.l.b16 %v667
    %v2886 = vunpack.c.h.b16 %v667
    %v2887 = vunpack.c.l.b16 %v668
    %v2888 = vunpack.c.h.b16 %v668
    %v2889 = vunpack.c.l.b16 %v669
    %v2890 = vunpack.c.h.b16 %v669
    %v2891 = vunpack.c.l.b16 %v670
    %v2892 = vunpack.c.h.b16 %v670
    %v2893 = vunpack.c.l.b16 %v671
    %v2894 = vunpack.c.h.b16 %v671
    %v2895 = vunpack.c.l.b16 %v672
    %v2896 = vunpack.c.h.b16 %v672
    %v2897 = vunpack.c.l.b16 %v673
    %v2898 = vunpack.c.h.b16 %v673
    %v2899 = vunpack.c.l.b16 %v674
    %v2900 = vunpack.c.h.b16 %v674
    %v2901 = vunpack.c.l.b16 %v675
    %v2902 = vunpack.c.h.b16 %v675
    %v2903 = vunpack.c.l.b16 %v676
    %v2904 = vunpack.c.h.b16 %v676
    %v2905 = vunpack.c.l.b16 %v677
    %v2906 = vunpack.c.h.b16 %v677
    %v2907 = vunpack.c.l.b16 %v678
    %v2908 = vunpack.c.h.b16 %v678
    %v2909 = vunpack.c.l.b16 %v679
    %v2910 = vunpack.c.h.b16 %v679
    %v2911 = vunpack.c.l.b16 %v680
    %v2912 = vunpack.c.h.b16 %v680
    %v2913 = vunpack.c.l.b16 %v681
    %v2914 = vunpack.c.h.b16 %v681
    %v2915 = vunpack.c.l.b16 %v682
    %v2916 = vunpack.c.h.b16 %v682
    %v2917 = vunpack.c.l.b16 %v683
    %v2918 = vunpack.c.h.b16 %v683
    %v2919 = vunpack.c.l.b16 %v684
    %v2920 = vunpack.c.h.b16 %v684
    %v2921 = vunpack.c.l.b16 %v685
    %v2922 = vunpack.c.h.b16 %v685
    %v2923 = vunpack.c.l.b16 %v686
    %v2924 = vunpack.c.h.b16 %v686
    %v2925 = vunpack.c.l.b16 %v687
    %v2926 = vunpack.c.h.b16 %v687
    %v2927 = vunpack.c.l.b16 %v688
    %v2928 = vunpack.c.h.b16 %v688
    %v2929 = vunpack.c.l.b16 %v689
    %v2930 = vunpack.c.h.b16 %v689
    %v2931 = vunpack.c.l.b16 %v690
    %v2932 = vunpack.c.h.b16 %v690
    %v2933 = vunpack.c.l.b16 %v691
    %v2934 = vunpack.c.h.b16 %v691
    %v2935 = vunpack.c.l.b16 %v692
    %v2936 = vunpack.c.h.b16 %v692
    %v2937 = vunpack.c.l.b16 %v693
    %v2938 = vunpack.c.h.b16 %v693
    %v2939 = vunpack.c.l.b16 %v694
    %v2940 = vunpack.c.h.b16 %v694
    %v2941 = vunpack.c.l.b16 %v695
    %v2942 = vunpack.c.h.b16 %v695
    %v2943 = vunpack.c.l.b16 %v696
    %v2944 = vunpack.c.h.b16 %v696
    %v2945 = vunpack.c.l.b16 %v697
    %v2946 = vunpack.c.h.b16 %v697
    %v2947 = vunpack.c.l.b16 %v698
    %v2948 = vunpack.c.h.b16 %v698
    %v2949 = vunpack.c.l.b16 %v699
    %v2950 = vunpack.c.h.b16 %v699
    %v2951 = vunpack.c.l.b16 %v700
    %v2952 = vunpack.c.h.b16 %v700
    %v2953 = vunpack.c.l.b16 %v701
    %v2954 = vunpack.c.h.b16 %v701
    %v2955 = vunpack.c.l.b16 %v702
    %v2956 = vunpack.c.h.b16 %v702
    %v2957 = vunpack.c.l.b16 %v703
    %v2958 = vunpack.c.h.b16 %v703
    %v2959 = vunpack.c.l.b16 %v704
    %v2960 = vunpack.c.h.b16 %v704
    %v2961 = vunpack.c.l.b16 %v705
    %v2962 = vunpack.c.h.b16 %v705
    %v2963 = vunpack.c.l.b16 %v706
    %v2964 = vunpack.c.h.b16 %v706
    %v2965 = vunpack.c.l.b16 %v707
    %v2966 = vunpack.c.h.b16 %v707
    %v2967 = vunpack.c.l.b16 %v708
    %v2968 = vunpack.c.h.b16 %v708
    %v2969 = vunpack.c.l.b16 %v709
    %v2970 = vunpack.c.h.b16 %v709
    %v2971 = vunpack.c.l.b16 %v710
    %v2972 = vunpack.c.h.b16 %v710
    %v2973 = vunpack.c.l.b16 %v711
    %v2974 = vunpack.c.h.b16 %v711
    %v2975 = vunpack.c.l.b16 %v712
    %v2976 = vunpack.c.h.b16 %v712
    %v2977 = vunpack.c.l.b16 %v713
    %v2978 = vunpack.c.h.b16 %v713
    %v2979 = vunpack.c.l.b16 %v714
    %v2980 = vunpack.c.h.b16 %v714
    %v2981 = vunpack.c.l.b16 %v715
    %v2982 = vunpack.c.h.b16 %v715
    %v2983 = vunpack.c.l.b16 %v716
    %v2984 = vunpack.c.h.b16 %v716
    %v2985 = vunpack.c.l.b16 %v717
    %v2986 = vunpack.c.h.b16 %v717
    %v2987 = vunpack.c.l.b16 %v718
    %v2988 = vunpack.c.h.b16 %v718
    %v2989 = vunpack.c.l.b16 %v719
    %v2990 = vunpack.c.h.b16 %v719
    %v2991 = vunpack.c.l.b16 %v720
    %v2992 = vunpack.c.h.b16 %v720
    %v2993 = vunpack.c.l.b16 %v721
    %v2994 = vunpack.c.h.b16 %v721
    %v2995 = vunpack.c.l.b16 %v722
    %v2996 = vunpack.c.h.b16 %v722
    %v2997 = vunpack.c.l.b16 %v723
    %v2998 = vunpack.c.h.b16 %v723
    %v2999 = vunpack.c.l.b16 %v724
    %v3000 = vunpack.c.h.b16 %v724
    %v3001 = vunpack.c.l.b16 %v725
    %v3002 = vunpack.c.h.b16 %v725
    %v3003 = vunpack.c.l.b16 %v726
    %v3004 = vunpack.c.h.b16 %v726
    %v3005 = vunpack.c.l.b16 %v727
    %v3006 = vunpack.c.h.b16 %v727
    %v3007 = vunpack.c.l.b16 %v728
    %v3008 = vunpack.c.h.b16 %v728
    %v3009 = vunpack.c.l.b16 %v729
    %v3010 = vunpack.c.h.b16 %v729
    %v3011 = vunpack.c.l.b16 %v730
    %v3012 = vunpack.c.h.b16 %v730
    %v3013 = vunpack.c.l.b16 %v731
    %v3014 = vunpack.c.h.b16 %v731
    %v3015 = vunpack.c.l.b16 %v732
    %v3016 = vunpack.c.h.b16 %v732
    %v3017 = vunpack.c.l.b16 %v733
    %v3018 = vunpack.c.h.b16 %v733
    %v3019 = vunpack.c.l.b16 %v734
    %v3020 = vunpack.c.h.b16 %v734
    %v3021 = vunpack.c.l.b16 %v735
    %v3022 = vunpack.c.h.b16 %v735
    %v3023 = vunpack.c.l.b16 %v736
    %v3024 = vunpack.c.h.b16 %v736
    %v3025 = vunpack.c.l.b16 %v737
    %v3026 = vunpack.c.h.b16 %v737
    %v3027 = vunpack.c.l.b16 %v738
    %v3028 = vunpack.c.h.b16 %v738
    %v3029 = vunpack.c.l.b16 %v739
    %v3030 = vunpack.c.h.b16 %v739
    %v3031 = vunpack.c.l.b16 %v740
    %v3032 = vunpack.c.h.b16 %v740
    %v3033 = vunpack.c.l.b16 %v741
    %v3034 = vunpack.c.h.b16 %v741
    %v3035 = vunpack.c.l.b16 %v742
    %v3036 = vunpack.c.h.b16 %v742
    %v3037 = vunpack.c.l.b16 %v743
    %v3038 = vunpack.c.h.b16 %v743
    %v3039 = vunpack.c.l.b16 %v744
    %v3040 = vunpack.c.h.b16 %v744
    %v3041 = vunpack.c.l.b16 %v745
    %v3042 = vunpack.c.h.b16 %v745
    %v3043 = vunpack.c.l.b16 %v746
    %v3044 = vunpack.c.h.b16 %v746
    %v3045 = vunpack.c.l.b16 %v747
    %v3046 = vunpack.c.h.b16 %v747
    %v3047 = vunpack.c.l.b16 %v748
    %v3048 = vunpack.c.h.b16 %v748
    %v3049 = vunpack.c.l.b16 %v749
    %v3050 = vunpack.c.h.b16 %v749
    %v3051 = vunpack.c.l.b16 %v750
    %v3052 = vunpack.c.h.b16 %v750
    %v3053 = vunpack.c.l.b16 %v751
    %v3054 = vunpack.c.h.b16 %v751
    %v3055 = vunpack.c.l.b16 %v752
    %v3056 = vunpack.c.h.b16 %v752
    %v3057 = vunpack.c.l.b16 %v753
    %v3058 = vunpack.c.h.b16 %v753
    %v3059 = vunpack.c.l.b16 %v754
    %v3060 = vunpack.c.h.b16 %v754
    %v3061 = vunpack.c.l.b16 %v755
    %v3062 = vunpack.c.h.b16 %v755
    %v3063 = vunpack.c.l.b16 %v756
    %v3064 = vunpack.c.h.b16 %v756
    %v3065 = vunpack.c.l.b16 %v757
    %v3066 = vunpack.c.h.b16 %v757
    %v3067 = vunpack.c.l.b16 %v758
    %v3068 = vunpack.c.h.b16 %v758
    %v3069 = vunpack.c.l.b16 %v759
    %v3070 = vunpack.c.h.b16 %v759
    %v3071 = vunpack.c.l.b16 %v760
    %v3072 = vunpack.c.h.b16 %v760
    %v3073 = vunpack.c.l.b16 %v761
    %v3074 = vunpack.c.h.b16 %v761
    %v3075 = vunpack.c.l.b16 %v762
    %v3076 = vunpack.c.h.b16 %v762
    %v3077 = vunpack.c.l.b16 %v763
    %v3078 = vunpack.c.h.b16 %v763
    %v3079 = vunpack.c.l.b16 %v764
    %v3080 = vunpack.c.h.b16 %v764
    %v3081 = vunpack.c.l.b16 %v765
    %v3082 = vunpack.c.h.b16 %v765
    %v3083 = vunpack.c.l.b16 %v766
    %v3084 = vunpack.c.h.b16 %v766
    %v3085 = vunpack.c.l.b16 %v767
    %v3086 = vunpack.c.h.b16 %v767
    %v3087 = vunpack.c.l.b16 %v768
    %v3088 = vunpack.c.h.b16 %v768
    %v3089 = vunpack.c.l.b16 %v769
    %v3090 = vunpack.c.h.b16 %v769
    %v3091 = vunpack.c.l.b16 %v770
    %v3092 = vunpack.c.h.b16 %v770
    %v3093 = vunpack.c.l.b16 %v771
    %v3094 = vunpack.c.h.b16 %v771
    %v3095 = vunpack.c.l.b16 %v772
    %v3096 = vunpack.c.h.b16 %v772
    %v3097 = vunpack.c.l.b16 %v773
    %v3098 = vunpack.c.h.b16 %v773
    %v3099 = vunpack.c.l.b16 %v774
    %v3100 = vunpack.c.h.b16 %v774
    %v3101 = vunpack.c.l.b16 %v775
    %v3102 = vunpack.c.h.b16 %v775
    %v3103 = vunpack.c.l.b16 %v776
    %v3104 = vunpack.c.h.b16 %v776
    %v3105 = vunpack.c.l.b16 %v777
    %v3106 = vunpack.c.h.b16 %v777
    %v3107 = vunpack.c.l.b16 %v778
    %v3108 = vunpack.c.h.b16 %v778
    %v3109 = vunpack.c.l.b16 %v779
    %v3110 = vunpack.c.h.b16 %v779
    %v3111 = vunpack.c.l.b16 %v780
    %v3112 = vunpack.c.h.b16 %v780
    %v3113 = vunpack.c.l.b16 %v781
    %v3114 = vunpack.c.h.b16 %v781
    %v3115 = vunpack.c.l.b16 %v782
    %v3116 = vunpack.c.h.b16 %v782
    %v3117 = vunpack.c.l.b16 %v783
    %v3118 = vunpack.c.h.b16 %v783
    %v3119 = vunpack.c.l.b16 %v784
    %v3120 = vunpack.c.h.b16 %v784
    %v3121 = vunpack.c.l.b16 %v785
    %v3122 = vunpack.c.h.b16 %v785
    %v3123 = vunpack.c.l.b16 %v786
    %v3124 = vunpack.c.h.b16 %v786
    %v3125 = vunpack.c.l.b16 %v787
    %v3126 = vunpack.c.h.b16 %v787
    %v3127 = vunpack.c.l.b16 %v788
    %v3128 = vunpack.c.h.b16 %v788
    %v3129 = vunpack.c.l.b16 %v789
    %v3130 = vunpack.c.h.b16 %v789
    %v3131 = vunpack.c.l.b16 %v790
    %v3132 = vunpack.c.h.b16 %v790
    %v3133 = vunpack.c.l.b16 %v791
    %v3134 = vunpack.c.h.b16 %v791
    %v3135 = vunpack.c.l.b16 %v792
    %v3136 = vunpack.c.h.b16 %v792
    %v3137 = vunpack.c.l.b16 %v793
    %v3138 = vunpack.c.h.b16 %v793
    %v3139 = vunpack.c.l.b16 %v794
    %v3140 = vunpack.c.h.b16 %v794
    %v3141 = vunpack.c.l.b16 %v795
    %v3142 = vunpack.c.h.b16 %v795
    %v3143 = vunpack.c.l.b16 %v796
    %v3144 = vunpack.c.h.b16 %v796
    %v3145 = vunpack.c.l.b16 %v797
    %v3146 = vunpack.c.h.b16 %v797
    %v3147 = vunpack.c.l.b16 %v798
    %v3148 = vunpack.c.h.b16 %v798
    %v3149 = vunpack.c.l.b16 %v799
    %v3150 = vunpack.c.h.b16 %v799
    %v3151 = vunpack.c.l.b16 %v800
    %v3152 = vunpack.c.h.b16 %v800
    %v3153 = vunpack.c.l.b16 %v801
    %v3154 = vunpack.c.h.b16 %v801
    %v3155 = vunpack.c.l.b16 %v802
    %v3156 = vunpack.c.h.b16 %v802
    %v3157 = vunpack.c.l.b16 %v803
    %v3158 = vunpack.c.h.b16 %v803
    %v3159 = vunpack.c.l.b16 %v804
    %v3160 = vunpack.c.h.b16 %v804
    %v3161 = vunpack.c.l.b16 %v805
    %v3162 = vunpack.c.h.b16 %v805
    %v3163 = vunpack.c.l.b16 %v806
    %v3164 = vunpack.c.h.b16 %v806
    %v3165 = vunpack.c.l.b16 %v807
    %v3166 = vunpack.c.h.b16 %v807
    %v3167 = vunpack.c.l.b16 %v808
    %v3168 = vunpack.c.h.b16 %v808
    %v3169 = vunpack.c.l.b16 %v809
    %v3170 = vunpack.c.h.b16 %v809
    %v3171 = vunpack.c.l.b16 %v810
    %v3172 = vunpack.c.h.b16 %v810
    %v3173 = vunpack.c.l.b16 %v811
    %v3174 = vunpack.c.h.b16 %v811
    %v3175 = vunpack.c.l.b16 %v812
    %v3176 = vunpack.c.h.b16 %v812
    %v3177 = vunpack.c.l.b16 %v813
    %v3178 = vunpack.c.h.b16 %v813
    %v3179 = vunpack.c.l.b16 %v814
    %v3180 = vunpack.c.h.b16 %v814
    %v3181 = vunpack.c.l.b16 %v815
    %v3182 = vunpack.c.h.b16 %v815
    %v3183 = vunpack.c.l.b16 %v816
    %v3184 = vunpack.c.h.b16 %v816
    %v3185 = vunpack.c.l.b16 %v817
    %v3186 = vunpack.c.h.b16 %v817
    %v3187 = vunpack.c.l.b16 %v818
    %v3188 = vunpack.c.h.b16 %v818
    %v3189 = vunpack.c.l.b16 %v819
    %v3190 = vunpack.c.h.b16 %v819
    %v3191 = vunpack.c.l.b16 %v820
    %v3192 = vunpack.c.h.b16 %v820
    %v3193 = vunpack.c.l.b16 %v821
    %v3194 = vunpack.c.h.b16 %v821
    %v3195 = vunpack.c.l.b16 %v822
    %v3196 = vunpack.c.h.b16 %v822
    %v3197 = vunpack.c.l.b16 %v823
    %v3198 = vunpack.c.h.b16 %v823
    %v3199 = vunpack.c.l.b16 %v824
    %v3200 = vunpack.c.h.b16 %v824
    %v3201 = vunpack.c.l.b16 %v825
    %v3202 = vunpack.c.h.b16 %v825
    %v3203 = vunpack.c.l.b16 %v826
    %v3204 = vunpack.c.h.b16 %v826
    %v3205 = vunpack.c.l.b16 %v827
    %v3206 = vunpack.c.h.b16 %v827
    %v3207 = vunpack.c.l.b16 %v828
    %v3208 = vunpack.c.h.b16 %v828
    %v3209 = vunpack.c.l.b16 %v829
    %v3210 = vunpack.c.h.b16 %v829
    %v3211 = vunpack.c.l.b16 %v830
    %v3212 = vunpack.c.h.b16 %v830
    %v3213 = vunpack.c.l.b16 %v831
    %v3214 = vunpack.c.h.b16 %v831
    %v3215 = vunpack.c.l.b16 %v832
    %v3216 = vunpack.c.h.b16 %v832
    %v3217 = vunpack.c.l.b16 %v833
    %v3218 = vunpack.c.h.b16 %v833
    %v3219 = vunpack.c.l.b16 %v834
    %v3220 = vunpack.c.h.b16 %v834
    %v3221 = vunpack.c.l.b16 %v835
    %v3222 = vunpack.c.h.b16 %v835
    %v3223 = vunpack.c.l.b16 %v836
    %v3224 = vunpack.c.h.b16 %v836
    %v3225 = vunpack.c.l.b16 %v837
    %v3226 = vunpack.c.h.b16 %v837
    %v3227 = vunpack.c.l.b16 %v838
    %v3228 = vunpack.c.h.b16 %v838
    %v3229 = vunpack.c.l.b16 %v839
    %v3230 = vunpack.c.h.b16 %v839
    %v3231 = vunpack.c.l.b16 %v840
    %v3232 = vunpack.c.h.b16 %v840
    %v3233 = vunpack.c.l.b16 %v841
    %v3234 = vunpack.c.h.b16 %v841
    %v3235 = vunpack.c.l.b16 %v842
    %v3236 = vunpack.c.h.b16 %v842
    %v3237 = vunpack.c.l.b16 %v843
    %v3238 = vunpack.c.h.b16 %v843
    %v3239 = vunpack.c.l.b16 %v844
    %v3240 = vunpack.c.h.b16 %v844
    %v3241 = vunpack.c.l.b16 %v845
    %v3242 = vunpack.c.h.b16 %v845
    %v3243 = vunpack.c.l.b16 %v846
    %v3244 = vunpack.c.h.b16 %v846
    %v3245 = vunpack.c.l.b16 %v847
    %v3246 = vunpack.c.h.b16 %v847
    %v3247 = vunpack.c.l.b16 %v848
    %v3248 = vunpack.c.h.b16 %v848
    %v3249 = vunpack.c.l.b16 %v849
    %v3250 = vunpack.c.h.b16 %v849
    %v3251 = vunpack.c.l.b16 %v850
    %v3252 = vunpack.c.h.b16 %v850
    %v3253 = vunpack.c.l.b16 %v851
    %v3254 = vunpack.c.h.b16 %v851
    %v3255 = vunpack.c.l.b16 %v852
    %v3256 = vunpack.c.h.b16 %v852
    %v3257 = vunpack.c.l.b16 %v853
    %v3258 = vunpack.c.h.b16 %v853
    %v3259 = vunpack.c.l.b16 %v854
    %v3260 = vunpack.c.h.b16 %v854
    %v3261 = vunpack.c.l.b16 %v855
    %v3262 = vunpack.c.h.b16 %v855
    %v3263 = vunpack.c.l.b16 %v856
    %v3264 = vunpack.c.h.b16 %v856
    %v3265 = vunpack.c.l.b16 %v857
    %v3266 = vunpack.c.h.b16 %v857
    %v3267 = vunpack.c.l.b16 %v858
    %v3268 = vunpack.c.h.b16 %v858
    %v3269 = vunpack.c.l.b16 %v859
    %v3270 = vunpack.c.h.b16 %v859
    %v3271 = vunpack.c.l.b16 %v860
    %v3272 = vunpack.c.h.b16 %v860
    %v3273 = vunpack.c.l.b16 %v861
    %v3274 = vunpack.c.h.b16 %v861
    %v3275 = vunpack.c.l.b16 %v862
    %v3276 = vunpack.c.h.b16 %v862
    %v3277 = vunpack.c.l.b16 %v863
    %v3278 = vunpack.c.h.b16 %v863
    %v3279 = vunpack.c.l.b16 %v864
    %v3280 = vunpack.c.h.b16 %v864
    %v3281 = vunpack.c.l.b16 %v865
    %v3282 = vunpack.c.h.b16 %v865
    %v3283 = vunpack.c.l.b16 %v866
    %v3284 = vunpack.c.h.b16 %v866
    %v3285 = vunpack.c.l.b16 %v867
    %v3286 = vunpack.c.h.b16 %v867
    %v3287 = vunpack.c.l.b16 %v868
    %v3288 = vunpack.c.h.b16 %v868
    %v3289 = vunpack.c.l.b16 %v869
    %v3290 = vunpack.c.h.b16 %v869
    %v3291 = vunpack.c.l.b16 %v870
    %v3292 = vunpack.c.h.b16 %v870
    %v3293 = vunpack.c.l.b16 %v871
    %v3294 = vunpack.c.h.b16 %v871
    %v3295 = vunpack.c.l.b16 %v872
    %v3296 = vunpack.c.h.b16 %v872
    %v3297 = vunpack.c.l.b16 %v873
    %v3298 = vunpack.c.h.b16 %v873
    %v3299 = vunpack.c.l.b16 %v874
    %v3300 = vunpack.c.h.b16 %v874
    %v3301 = vunpack.c.l.b16 %v875
    %v3302 = vunpack.c.h.b16 %v875
    %v3303 = vunpack.c.l.b16 %v876
    %v3304 = vunpack.c.h.b16 %v876
    %v3305 = vunpack.c.l.b16 %v877
    %v3306 = vunpack.c.h.b16 %v877
    %v3307 = vunpack.c.l.b16 %v878
    %v3308 = vunpack.c.h.b16 %v878
    %v3309 = vunpack.c.l.b16 %v879
    %v3310 = vunpack.c.h.b16 %v879
    %v3311 = vunpack.c.l.b16 %v880
    %v3312 = vunpack.c.h.b16 %v880
    %v3313 = vunpack.c.l.b16 %v881
    %v3314 = vunpack.c.h.b16 %v881
    %v3315 = vunpack.c.l.b16 %v882
    %v3316 = vunpack.c.h.b16 %v882
    %v3317 = vunpack.c.l.b16 %v883
    %v3318 = vunpack.c.h.b16 %v883
    %v3319 = vunpack.c.l.b16 %v884
    %v3320 = vunpack.c.h.b16 %v884
    %v3321 = vunpack.c.l.b16 %v885
    %v3322 = vunpack.c.h.b16 %v885
    %v3323 = vunpack.c.l.b16 %v886
    %v3324 = vunpack.c.h.b16 %v886
    %v3325 = vunpack.c.l.b16 %v887
    %v3326 = vunpack.c.h.b16 %v887
    %v3327 = vunpack.c.l.b16 %v888
    %v3328 = vunpack.c.h.b16 %v888
    %v3329 = vunpack.c.l.b16 %v889
    %v3330 = vunpack.c.h.b16 %v889
    %v3331 = vunpack.c.l.b16 %v890
    %v3332 = vunpack.c.h.b16 %v890
    %v3333 = vunpack.c.l.b16 %v891
    %v3334 = vunpack.c.h.b16 %v891
    %v3335 = vunpack.c.l.b16 %v892
    %v3336 = vunpack.c.h.b16 %v892
    %v3337 = vunpack.c.l.b16 %v893
    %v3338 = vunpack.c.h.b16 %v893
    %v3339 = vunpack.c.l.b16 %v894
    %v3340 = vunpack.c.h.b16 %v894
    %v3341 = vpack.c.b16 %v1809, %v1805
    %v3342 = vpack.c.b16 %v1810, %v1806
    %v3343 = vpack.c.b16 %v1811, %v1807
    %v3344 = vpack.c.b16 %v1812, %v1808
    %v3345 = vpack.c.b16 %v1817, %v1813
    %v3346 = vpack.c.b16 %v1818, %v1814
    %v3347 = vpack.c.b16 %v1819, %v1815
    %v3348 = vpack.c.b16 %v1820, %v1816
    %v3349 = vpack.c.b16 %v1825, %v1821
    %v3350 = vpack.c.b16 %v1826, %v1822
    %v3351 = vpack.c.b16 %v1827, %v1823
    %v3352 = vpack.c.b16 %v1828, %v1824
    %v3353 = vpack.c.b16 %v1833, %v1829
    %v3354 = vpack.c.b16 %v1834, %v1830
    %v3355 = vpack.c.b16 %v1835, %v1831
    %v3356 = vpack.c.b16 %v1836, %v1832
    %v3357 = vpack.c.b16 %v1841, %v1837
    %v3358 = vpack.c.b16 %v1842, %v1838
    %v3359 = vpack.c.b16 %v1843, %v1839
    %v3360 = vpack.c.b16 %v1844, %v1840
    %v3361 = vpack.c.b16 %v1849, %v1845
    %v3362 = vpack.c.b16 %v1850, %v1846
    %v3363 = vpack.c.b16 %v1851, %v1847
    %v3364 = vpack.c.b16 %v1852, %v1848
    %v3365 = vpack.c.b16 %v1857, %v1853
    %v3366 = vpack.c.b16 %v1858, %v1854
    %v3367 = vpack.c.b16 %v1859, %v1855
    %v3368 = vpack.c.b16 %v1860, %v1856
    %v3369 = vpack.c.b16 %v1865, %v1861
    %v3370 = vpack.c.b16 %v1866, %v1862
    %v3371 = vpack.c.b16 %v1867, %v1863
    %v3372 = vpack.c.b16 %v1868, %v1864
    %v3373 = vpack.c.b16 %v1873, %v1869
    %v3374 = vpack.c.b16 %v1874, %v1870
    %v3375 = vpack.c.b16 %v1875, %v1871
    %v3376 = vpack.c.b16 %v1876, %v1872
    %v3377 = vpack.c.b16 %v1881, %v1877
    %v3378 = vpack.c.b16 %v1882, %v1878
    %v3379 = vpack.c.b16 %v1883, %v1879
    %v3380 = vpack.c.b16 %v1884, %v1880
    %v3381 = vpack.c.b16 %v1889, %v1885
    %v3382 = vpack.c.b16 %v1890, %v1886
    %v3383 = vpack.c.b16 %v1891, %v1887
    %v3384 = vpack.c.b16 %v1892, %v1888
    %v3385 = vpack.c.b16 %v1897, %v1893
    %v3386 = vpack.c.b16 %v1898, %v1894
    %v3387 = vpack.c.b16 %v1899, %v1895
    %v3388 = vpack.c.b16 %v1900, %v1896
    %v3389 = vpack.c.b16 %v1905, %v1901
    %v3390 = vpack.c.b16 %v1906, %v1902
    %v3391 = vpack.c.b16 %v1907, %v1903
    %v3392 = vpack.c.b16 %v1908, %v1904
    %v3393 = vpack.c.b16 %v1913, %v1909
    %v3394 = vpack.c.b16 %v1914, %v1910
    %v3395 = vpack.c.b16 %v1915, %v1911
    %v3396 = vpack.c.b16 %v1916, %v1912
    %v3397 = vpack.c.b16 %v1921, %v1917
    %v3398 = vpack.c.b16 %v1922, %v1918
    %v3399 = vpack.c.b16 %v1923, %v1919
    %v3400 = vpack.c.b16 %v1924, %v1920
    %v3401 = vpack.c.b16 %v1929, %v1925
    %v3402 = vpack.c.b16 %v1930, %v1926
    %v3403 = vpack.c.b16 %v1931, %v1927
    %v3404 = vpack.c.b16 %v1932, %v1928
    %v3405 = vpack.c.b16 %v1937, %v1933
    %v3406 = vpack.c.b16 %v1938, %v1934
    %v3407 = vpack.c.b16 %v1939, %v1935
    %v3408 = vpack.c.b16 %v1940, %v1936
    %v3409 = vpack.c.b16 %v1945, %v1941
    %v3410 = vpack.c.b16 %v1946, %v1942
    %v3411 = vpack.c.b16 %v1947, %v1943
    %v3412 = vpack.c.b16 %v1948, %v1944
    %v3413 = vpack.c.b16 %v1953, %v1949
    %v3414 = vpack.c.b16 %v1954, %v1950
    %v3415 = vpack.c.b16 %v1955, %v1951
    %v3416 = vpack.c.b16 %v1956, %v1952
    %v3417 = vpack.c.b16 %v1961, %v1957
    %v3418 = vpack.c.b16 %v1962, %v1958
    %v3419 = vpack.c.b16 %v1963, %v1959
    %v3420 = vpack.c.b16 %v1964, %v1960
    %v3421 = vpack.c.b16 %v1969, %v1965
    %v3422 = vpack.c.b16 %v1970, %v1966
    %v3423 = vpack.c.b16 %v1971, %v1967
    %v3424 = vpack.c.b16 %v1972, %v1968
    %v3425 = vpack.c.b16 %v1977, %v1973
    %v3426 = vpack.c.b16 %v1978, %v1974
    %v3427 = vpack.c.b16 %v1979, %v1975
    %v3428 = vpack.c.b16 %v1980, %v1976
    %v3429 = vpack.c.b16 %v1985, %v1981
    %v3430 = vpack.c.b16 %v1986, %v1982
    %v3431 = vpack.c.b16 %v1987, %v1983
    %v3432 = vpack.c.b16 %v1988, %v1984
    %v3433 = vpack.c.b16 %v1993, %v1989
    %v3434 = vpack.c.b16 %v1994, %v1990
    %v3435 = vpack.c.b16 %v1995, %v1991
    %v3436 = vpack.c.b16 %v1996, %v1992
    %v3437 = vpack.c.b16 %v2001, %v1997
    %v3438 = vpack.c.b16 %v2002, %v1998
    %v3439 = vpack.c.b16 %v2003, %v1999
    %v3440 = vpack.c.b16 %v2004, %v2000
    %v3441 = vpack.c.b16 %v2009, %v2005
    %v3442 = vpack.c.b16 %v2010, %v2006
    %v3443 = vpack.c.b16 %v2011, %v2007
    %v3444 = vpack.c.b16 %v2012, %v2008
    %v3445 = vpack.c.b16 %v2017, %v2013
    %v3446 = vpack.c.b16 %v2018, %v2014
    %v3447 = vpack.c.b16 %v2019, %v2015
    %v3448 = vpack.c.b16 %v2020, %v2016
    %v3449 = vpack.c.b16 %v2025, %v2021
    %v3450 = vpack.c.b16 %v2026, %v2022
    %v3451 = vpack.c.b16 %v2027, %v2023
    %v3452 = vpack.c.b16 %v2028, %v2024
    %v3453 = vpack.c.b16 %v2033, %v2029
    %v3454 = vpack.c.b16 %v2034, %v2030
    %v3455 = vpack.c.b16 %v2035, %v2031
    %v3456 = vpack.c.b16 %v2036, %v2032
    %v3457 = vpack.c.b16 %v2041, %v2037
    %v3458 = vpack.c.b16 %v2042, %v2038
    %v3459 = vpack.c.b16 %v2043, %v2039
    %v3460 = vpack.c.b16 %v2044, %v2040
    %v3461 = vpack.c.b16 %v2049, %v2045
    %v3462 = vpack.c.b16 %v2050, %v2046
    %v3463 = vpack.c.b16 %v2051, %v2047
    %v3464 = vpack.c.b16 %v2052, %v2048
    %v3465 = vpack.c.b16 %v2057, %v2053
    %v3466 = vpack.c.b16 %v2058, %v2054
    %v3467 = vpack.c.b16 %v2059, %v2055
    %v3468 = vpack.c.b16 %v2060, %v2056
    %v3469 = vpack.c.b16 %v2065, %v2061
    %v3470 = vpack.c.b16 %v2066, %v2062
    %v3471 = vpack.c.b16 %v2067, %v2063
    %v3472 = vpack.c.b16 %v2068, %v2064
    %v3473 = vpack.c.b16 %v2073, %v2069
    %v3474 = vpack.c.b16 %v2074, %v2070
    %v3475 = vpack.c.b16 %v2075, %v2071
    %v3476 = vpack.c.b16 %v2076, %v2072
    %v3477 = vpack.c.b16 %v2081, %v2077
    %v3478 = vpack.c.b16 %v2082, %v2078
    %v3479 = vpack.c.b16 %v2083, %v2079
    %v3480 = vpack.c.b16 %v2084, %v2080
    %v3481 = vpack.c.b16 %v2089, %v2085
    %v3482 = vpack.c.b16 %v2090, %v2086
    %v3483 = vpack.c.b16 %v2091, %v2087
    %v3484 = vpack.c.b16 %v2092, %v2088
    %v3485 = vpack.c.b16 %v2097, %v2093
    %v3486 = vpack.c.b16 %v2098, %v2094
    %v3487 = vpack.c.b16 %v2099, %v2095
    %v3488 = vpack.c.b16 %v2100, %v2096
    %v3489 = vpack.c.b16 %v2105, %v2101
    %v3490 = vpack.c.b16 %v2106, %v2102
    %v3491 = vpack.c.b16 %v2107, %v2103
    %v3492 = vpack.c.b16 %v2108, %v2104
    %v3493 = vpack.c.b16 %v2113, %v2109
    %v3494 = vpack.c.b16 %v2114, %v2110
    %v3495 = vpack.c.b16 %v2115, %v2111
    %v3496 = vpack.c.b16 %v2116, %v2112
    %v3497 = vpack.c.b16 %v2121, %v2117
    %v3498 = vpack.c.b16 %v2122, %v2118
    %v3499 = vpack.c.b16 %v2123, %v2119
    %v3500 = vpack.c.b16 %v2124, %v2120
    %v3501 = vpack.c.b16 %v2129, %v2125
    %v3502 = vpack.c.b16 %v2130, %v2126
    %v3503 = vpack.c.b16 %v2131, %v2127
    %v3504 = vpack.c.b16 %v2132, %v2128
    %v3505 = vpack.c.b16 %v2137, %v2133
    %v3506 = vpack.c.b16 %v2138, %v2134
    %v3507 = vpack.c.b16 %v2139, %v2135
    %v3508 = vpack.c.b16 %v2140, %v2136
    %v3509 = vpack.c.b16 %v2145, %v2141
    %v3510 = vpack.c.b16 %v2146, %v2142
    %v3511 = vpack.c.b16 %v2147, %v2143
    %v3512 = vpack.c.b16 %v2148, %v2144
    %v3513 = vpack.c.b16 %v2153, %v2149
    %v3514 = vpack.c.b16 %v2154, %v2150
    %v3515 = vpack.c.b16 %v2155, %v2151
    %v3516 = vpack.c.b16 %v2156, %v2152
    %v3517 = vpack.c.b16 %v2161, %v2157
    %v3518 = vpack.c.b16 %v2162, %v2158
    %v3519 = vpack.c.b16 %v2163, %v2159
    %v3520 = vpack.c.b16 %v2164, %v2160
    %v3521 = vpack.c.b16 %v2169, %v2165
    %v3522 = vpack.c.b16 %v2170, %v2166
    %v3523 = vpack.c.b16 %v2171, %v2167
    %v3524 = vpack.c.b16 %v2172, %v2168
    %v3525 = vpack.c.b16 %v2177, %v2173
    %v3526 = vpack.c.b16 %v2178, %v2174
    %v3527 = vpack.c.b16 %v2179, %v2175
    %v3528 = vpack.c.b16 %v2180, %v2176
    %v3529 = vpack.c.b16 %v2185, %v2181
    %v3530 = vpack.c.b16 %v2186, %v2182
    %v3531 = vpack.c.b16 %v2187, %v2183
    %v3532 = vpack.c.b16 %v2188, %v2184
    %v3533 = vpack.c.b16 %v2193, %v2189
    %v3534 = vpack.c.b16 %v2194, %v2190
    %v3535 = vpack.c.b16 %v2195, %v2191
    %v3536 = vpack.c.b16 %v2196, %v2192
    %v3537 = vpack.c.b16 %v2201, %v2197
    %v3538 = vpack.c.b16 %v2202, %v2198
    %v3539 = vpack.c.b16 %v2203, %v2199
    %v3540 = vpack.c.b16 %v2204, %v2200
    %v3541 = vpack.c.b16 %v2209, %v2205
    %v3542 = vpack.c.b16 %v2210, %v2206
    %v3543 = vpack.c.b16 %v2211, %v2207
    %v3544 = vpack.c.b16 %v2212, %v2208
    %v3545 = vpack.c.b16 %v2217, %v2213
    %v3546 = vpack.c.b16 %v2218, %v2214
    %v3547 = vpack.c.b16 %v2219, %v2215
    %v3548 = vpack.c.b16 %v2220, %v2216
    %v3549 = vpack.c.b16 %v2225, %v2221
    %v3550 = vpack.c.b16 %v2226, %v2222
    %v3551 = vpack.c.b16 %v2227, %v2223
    %v3552 = vpack.c.b16 %v2228, %v2224
    %v3553 = vpack.c.b16 %v2233, %v2229
    %v3554 = vpack.c.b16 %v2234, %v2230
    %v3555 = vpack.c.b16 %v2235, %v2231
    %v3556 = vpack.c.b16 %v2236, %v2232
    %v3557 = vpack.c.b16 %v2241, %v2237
    %v3558 = vpack.c.b16 %v2242, %v2238
    %v3559 = vpack.c.b16 %v2243, %v2239
    %v3560 = vpack.c.b16 %v2244, %v2240
    %v3561 = vpack.c.b16 %v2249, %v2245
    %v3562 = vpack.c.b16 %v2250, %v2246
    %v3563 = vpack.c.b16 %v2251, %v2247
    %v3564 = vpack.c.b16 %v2252, %v2248
    %v3565 = vpack.c.b16 %v2257, %v2253
    %v3566 = vpack.c.b16 %v2258, %v2254
    %v3567 = vpack.c.b16 %v2259, %v2255
    %v3568 = vpack.c.b16 %v2260, %v2256
    %v3569 = vpack.c.b16 %v2265, %v2261
    %v3570 = vpack.c.b16 %v2266, %v2262
    %v3571 = vpack.c.b16 %v2267, %v2263
    %v3572 = vpack.c.b16 %v2268, %v2264
    %v3573 = vpack.c.b16 %v2273, %v2269
    %v3574 = vpack.c.b16 %v2274, %v2270
    %v3575 = vpack.c.b16 %v2275, %v2271
    %v3576 = vpack.c.b16 %v2276, %v2272
    %v3577 = vpack.c.b16 %v2281, %v2277
    %v3578 = vpack.c.b16 %v2282, %v2278
    %v3579 = vpack.c.b16 %v2283, %v2279
    %v3580 = vpack.c.b16 %v2284, %v2280
    %v3581 = vpack.c.b16 %v2289, %v2285
    %v3582 = vpack.c.b16 %v2290, %v2286
    %v3583 = vpack.c.b16 %v2291, %v2287
    %v3584 = vpack.c.b16 %v2292, %v2288
    %v3585 = vpack.c.b16 %v2297, %v2293
    %v3586 = vpack.c.b16 %v2298, %v2294
    %v3587 = vpack.c.b16 %v2299, %v2295
    %v3588 = vpack.c.b16 %v2300, %v2296
    %v3589 = vpack.c.b16 %v2305, %v2301
    %v3590 = vpack.c.b16 %v2306, %v2302
    %v3591 = vpack.c.b16 %v2307, %v2303
    %v3592 = vpack.c.b16 %v2308, %v2304
    %v3593 = vpack.c.b16 %v2313, %v2309
    %v3594 = vpack.c.b16 %v2314, %v2310
    %v3595 = vpack.c.b16 %v2315, %v2311
    %v3596 = vpack.c.b16 %v2316, %v2312
    %v3597 = vpack.c.b16 %v2321, %v2317
    %v3598 = vpack.c.b16 %v2322, %v2318
    %v3599 = vpack.c.b16 %v2323, %v2319
    %v3600 = vpack.c.b16 %v2324, %v2320
    %v3601 = vpack.c.b16 %v2329, %v2325
    %v3602 = vpack.c.b16 %v2330, %v2326
    %v3603 = vpack.c.b16 %v2331, %v2327
    %v3604 = vpack.c.b16 %v2332, %v2328
    %v3605 = vpack.c.b16 %v2337, %v2333
    %v3606 = vpack.c.b16 %v2338, %v2334
    %v3607 = vpack.c.b16 %v2339, %v2335
    %v3608 = vpack.c.b16 %v2340, %v2336
    %v3609 = vpack.c.b16 %v2345, %v2341
    %v3610 = vpack.c.b16 %v2346, %v2342
    %v3611 = vpack.c.b16 %v2347, %v2343
    %v3612 = vpack.c.b16 %v2348, %v2344
    %v3613 = vpack.c.b16 %v2353, %v2349
    %v3614 = vpack.c.b16 %v2354, %v2350
    %v3615 = vpack.c.b16 %v2355, %v2351
    %v3616 = vpack.c.b16 %v2356, %v2352
    %v3617 = vpack.c.b16 %v2361, %v2357
    %v3618 = vpack.c.b16 %v2362, %v2358
    %v3619 = vpack.c.b16 %v2363, %v2359
    %v3620 = vpack.c.b16 %v2364, %v2360
    %v3621 = vpack.c.b16 %v2369, %v2365
    %v3622 = vpack.c.b16 %v2370, %v2366
    %v3623 = vpack.c.b16 %v2371, %v2367
    %v3624 = vpack.c.b16 %v2372, %v2368
    %v3625 = vpack.c.b16 %v2377, %v2373
    %v3626 = vpack.c.b16 %v2378, %v2374
    %v3627 = vpack.c.b16 %v2379, %v2375
    %v3628 = vpack.c.b16 %v2380, %v2376
    %v3629 = vpack.c.b16 %v2385, %v2381
    %v3630 = vpack.c.b16 %v2386, %v2382
    %v3631 = vpack.c.b16 %v2387, %v2383
    %v3632 = vpack.c.b16 %v2388, %v2384
    %v3633 = vpack.c.b16 %v2393, %v2389
    %v3634 = vpack.c.b16 %v2394, %v2390
    %v3635 = vpack.c.b16 %v2395, %v2391
    %v3636 = vpack.c.b16 %v2396, %v2392
    %v3637 = vpack.c.b16 %v2401, %v2397
    %v3638 = vpack.c.b16 %v2402, %v2398
    %v3639 = vpack.c.b16 %v2403, %v2399
    %v3640 = vpack.c.b16 %v2404, %v2400
    %v3641 = vpack.c.b16 %v2409, %v2405
    %v3642 = vpack.c.b16 %v2410, %v2406
    %v3643 = vpack.c.b16 %v2411, %v2407
    %v3644 = vpack.c.b16 %v2412, %v2408
    %v3645 = vpack.c.b16 %v2417, %v2413
    %v3646 = vpack.c.b16 %v2418, %v2414
    %v3647 = vpack.c.b16 %v2419, %v2415
    %v3648 = vpack.c.b16 %v2420, %v2416
    %v3649 = vpack.c.b16 %v2425, %v2421
    %v3650 = vpack.c.b16 %v2426, %v2422
    %v3651 = vpack.c.b16 %v2427, %v2423
    %v3652 = vpack.c.b16 %v2428, %v2424
    %v3653 = vpack.c.b16 %v2433, %v2429
    %v3654 = vpack.c.b16 %v2434, %v2430
    %v3655 = vpack.c.b16 %v2435, %v2431
    %v3656 = vpack.c.b16 %v2436, %v2432
    %v3657 = vpack.c.b16 %v2441, %v2437
    %v3658 = vpack.c.b16 %v2442, %v2438
    %v3659 = vpack.c.b16 %v2443, %v2439
    %v3660 = vpack.c.b16 %v2444, %v2440
    %v3661 = vpack.c.b16 %v2449, %v2445
    %v3662 = vpack.c.b16 %v2450, %v2446
    %v3663 = vpack.c.b16 %v2451, %v2447
    %v3664 = vpack.c.b16 %v2452, %v2448
    %v3665 = vpack.c.b16 %v2457, %v2453
    %v3666 = vpack.c.b16 %v2458, %v2454
    %v3667 = vpack.c.b16 %v2459, %v2455
    %v3668 = vpack.c.b16 %v2460, %v2456
    %v3669 = vpack.c.b16 %v2465, %v2461
    %v3670 = vpack.c.b16 %v2466, %v2462
    %v3671 = vpack.c.b16 %v2467, %v2463
    %v3672 = vpack.c.b16 %v2468, %v2464
    %v3673 = vpack.c.b16 %v2473, %v2469
    %v3674 = vpack.c.b16 %v2474, %v2470
    %v3675 = vpack.c.b16 %v2475, %v2471
    %v3676 = vpack.c.b16 %v2476, %v2472
    %v3677 = vpack.c.b16 %v2481, %v2477
    %v3678 = vpack.c.b16 %v2482, %v2478
    %v3679 = vpack.c.b16 %v2483, %v2479
    %v3680 = vpack.c.b16 %v2484, %v2480
    %v3681 = vpack.c.b16 %v2489, %v2485
    %v3682 = vpack.c.b16 %v2490, %v2486
    %v3683 = vpack.c.b16 %v2491, %v2487
    %v3684 = vpack.c.b16 %v2492, %v2488
    %v3685 = vpack.c.b16 %v2497, %v2493
    %v3686 = vpack.c.b16 %v2498, %v2494
    %v3687 = vpack.c.b16 %v2499, %v2495
    %v3688 = vpack.c.b16 %v2500, %v2496
    %v3689 = vpack.c.b16 %v2505, %v2501
    %v3690 = vpack.c.b16 %v2506, %v2502
    %v3691 = vpack.c.b16 %v2507, %v2503
    %v3692 = vpack.c.b16 %v2508, %v2504
    %v3693 = vpack.c.b16 %v2513, %v2509
    %v3694 = vpack.c.b16 %v2514, %v2510
    %v3695 = vpack.c.b16 %v2515, %v2511
    %v3696 = vpack.c.b16 %v2516, %v2512
    %v3697 = vpack.c.b16 %v2521, %v2517
    %v3698 = vpack.c.b16 %v2522, %v2518
    %v3699 = vpack.c.b16 %v2523, %v2519
    %v3700 = vpack.c.b16 %v2524, %v2520
    %v3701 = vpack.c.b16 %v2529, %v2525
    %v3702 = vpack.c.b16 %v2530, %v2526
    %v3703 = vpack.c.b16 %v2531, %v2527
    %v3704 = vpack.c.b16 %v2532, %v2528
    %v3705 = vpack.c.b16 %v2537, %v2533
    %v3706 = vpack.c.b16 %v2538, %v2534
    %v3707 = vpack.c.b16 %v2539, %v2535
    %v3708 = vpack.c.b16 %v2540, %v2536
    %v3709 = vpack.c.b16 %v2545, %v2541
    %v3710 = vpack.c.b16 %v2546, %v2542
    %v3711 = vpack.c.b16 %v2547, %v2543
    %v3712 = vpack.c.b16 %v2548, %v2544
    %v3713 = vpack.c.b16 %v2553, %v2549
    %v3714 = vpack.c.b16 %v2554, %v2550
    %v3715 = vpack.c.b16 %v2555, %v2551
    %v3716 = vpack.c.b16 %v2556, %v2552
    %v3717 = vpack.c.b16 %v2561, %v2557
    %v3718 = vpack.c.b16 %v2562, %v2558
    %v3719 = vpack.c.b16 %v2563, %v2559
    %v3720 = vpack.c.b16 %v2564, %v2560
    %v3721 = vpack.c.b16 %v2569, %v2565
    %v3722 = vpack.c.b16 %v2570, %v2566
    %v3723 = vpack.c.b16 %v2571, %v2567
    %v3724 = vpack.c.b16 %v2572, %v2568
    %v3725 = vpack.c.b16 %v2577, %v2573
    %v3726 = vpack.c.b16 %v2578, %v2574
    %v3727 = vpack.c.b16 %v2579, %v2575
    %v3728 = vpack.c.b16 %v2580, %v2576
    %v3729 = vpack.c.b16 %v2585, %v2581
    %v3730 = vpack.c.b16 %v2586, %v2582
    %v3731 = vpack.c.b16 %v2587, %v2583
    %v3732 = vpack.c.b16 %v2588, %v2584
    %v3733 = vpack.c.b16 %v2593, %v2589
    %v3734 = vpack.c.b16 %v2594, %v2590
    %v3735 = vpack.c.b16 %v2595, %v2591
    %v3736 = vpack.c.b16 %v2596, %v2592
    %v3737 = vpack.c.b16 %v2601, %v2597
    %v3738 = vpack.c.b16 %v2602, %v2598
    %v3739 = vpack.c.b16 %v2603, %v2599
    %v3740 = vpack.c.b16 %v2604, %v2600
    %v3741 = vpack.c.b16 %v2609, %v2605
    %v3742 = vpack.c.b16 %v2610, %v2606
    %v3743 = vpack.c.b16 %v2611, %v2607
    %v3744 = vpack.c.b16 %v2612, %v2608
    %v3745 = vpack.c.b16 %v2617, %v2613
    %v3746 = vpack.c.b16 %v2618, %v2614
    %v3747 = vpack.c.b16 %v2619, %v2615
    %v3748 = vpack.c.b16 %v2620, %v2616
    %v3749 = vpack.c.b16 %v2625, %v2621
    %v3750 = vpack.c.b16 %v2626, %v2622
    %v3751 = vpack.c.b16 %v2627, %v2623
    %v3752 = vpack.c.b16 %v2628, %v2624
    %v3753 = vpack.c.b16 %v2633, %v2629
    %v3754 = vpack.c.b16 %v2634, %v2630
    %v3755 = vpack.c.b16 %v2635, %v2631
    %v3756 = vpack.c.b16 %v2636, %v2632
    %v3757 = vpack.c.b16 %v2641, %v2637
    %v3758 = vpack.c.b16 %v2642, %v2638
    %v3759 = vpack.c.b16 %v2643, %v2639
    %v3760 = vpack.c.b16 %v2644, %v2640
    %v3761 = vpack.c.b16 %v2649, %v2645
    %v3762 = vpack.c.b16 %v2650, %v2646
    %v3763 = vpack.c.b16 %v2651, %v2647
    %v3764 = vpack.c.b16 %v2652, %v2648
    %v3765 = vpack.c.b16 %v2657, %v2653
    %v3766 = vpack.c.b16 %v2658, %v2654
    %v3767 = vpack.c.b16 %v2659, %v2655
    %v3768 = vpack.c.b16 %v2660, %v2656
    %v3769 = vpack.c.b16 %v2665, %v2661
    %v3770 = vpack.c.b16 %v2666, %v2662
    %v3771 = vpack.c.b16 %v2667, %v2663
    %v3772 = vpack.c.b16 %v2668, %v2664
    %v3773 = vpack.c.b16 %v2673, %v2669
    %v3774 = vpack.c.b16 %v2674, %v2670
    %v3775 = vpack.c.b16 %v2675, %v2671
    %v3776 = vpack.c.b16 %v2676, %v2672
    %v3777 = vpack.c.b16 %v2681, %v2677
    %v3778 = vpack.c.b16 %v2682, %v2678
    %v3779 = vpack.c.b16 %v2683, %v2679
    %v3780 = vpack.c.b16 %v2684, %v2680
    %v3781 = vpack.c.b16 %v2689, %v2685
    %v3782 = vpack.c.b16 %v2690, %v2686
    %v3783 = vpack.c.b16 %v2691, %v2687
    %v3784 = vpack.c.b16 %v2692, %v2688
    %v3785 = vpack.c.b16 %v2697, %v2693
    %v3786 = vpack.c.b16 %v2698, %v2694
    %v3787 = vpack.c.b16 %v2699, %v2695
    %v3788 = vpack.c.b16 %v2700, %v2696
    %v3789 = vpack.c.b16 %v2705, %v2701
    %v3790 = vpack.c.b16 %v2706, %v2702
    %v3791 = vpack.c.b16 %v2707, %v2703
    %v3792 = vpack.c.b16 %v2708, %v2704
    %v3793 = vpack.c.b16 %v2713, %v2709
    %v3794 = vpack.c.b16 %v2714, %v2710
    %v3795 = vpack.c.b16 %v2715, %v2711
    %v3796 = vpack.c.b16 %v2716, %v2712
    %v3797 = vpack.c.b16 %v2721, %v2717
    %v3798 = vpack.c.b16 %v2722, %v2718
    %v3799 = vpack.c.b16 %v2723, %v2719
    %v3800 = vpack.c.b16 %v2724, %v2720
    %v3801 = vpack.c.b16 %v2729, %v2725
    %v3802 = vpack.c.b16 %v2730, %v2726
    %v3803 = vpack.c.b16 %v2731, %v2727
    %v3804 = vpack.c.b16 %v2732, %v2728
    %v3805 = vpack.c.b16 %v2737, %v2733
    %v3806 = vpack.c.b16 %v2738, %v2734
    %v3807 = vpack.c.b16 %v2739, %v2735
    %v3808 = vpack.c.b16 %v2740, %v2736
    %v3809 = vpack.c.b16 %v2745, %v2741
    %v3810 = vpack.c.b16 %v2746, %v2742
    %v3811 = vpack.c.b16 %v2747, %v2743
    %v3812 = vpack.c.b16 %v2748, %v2744
    %v3813 = vpack.c.b16 %v2753, %v2749
    %v3814 = vpack.c.b16 %v2754, %v2750
    %v3815 = vpack.c.b16 %v2755, %v2751
    %v3816 = vpack.c.b16 %v2756, %v2752
    %v3817 = vpack.c.b16 %v2761, %v2757
    %v3818 = vpack.c.b16 %v2762, %v2758
    %v3819 = vpack.c.b16 %v2763, %v2759
    %v3820 = vpack.c.b16 %v2764, %v2760
    %v3821 = vpack.c.b16 %v2769, %v2765
    %v3822 = vpack.c.b16 %v2770, %v2766
    %v3823 = vpack.c.b16 %v2771, %v2767
    %v3824 = vpack.c.b16 %v2772, %v2768
    %v3825 = vpack.c.b16 %v2777, %v2773
    %v3826 = vpack.c.b16 %v2778, %v2774
    %v3827 = vpack.c.b16 %v2779, %v2775
    %v3828 = vpack.c.b16 %v2780, %v2776
    %v3829 = vpack.c.b16 %v2785, %v2781
    %v3830 = vpack.c.b16 %v2786, %v2782
    %v3831 = vpack.c.b16 %v2787, %v2783
    %v3832 = vpack.c.b16 %v2788, %v2784
    %v3833 = vpack.c.b16 %v2793, %v2789
    %v3834 = vpack.c.b16 %v2794, %v2790
    %v3835 = vpack.c.b16 %v2795, %v2791
    %v3836 = vpack.c.b16 %v2796, %v2792
    %v3837 = vpack.c.b16 %v2801, %v2797
    %v3838 = vpack.c.b16 %v2802, %v2798
    %v3839 = vpack.c.b16 %v2803, %v2799
    %v3840 = vpack.c.b16 %v2804, %v2800
    %v3841 = vpack.c.b16 %v2809, %v2805
    %v3842 = vpack.c.b16 %v2810, %v2806
    %v3843 = vpack.c.b16 %v2811, %v2807
    %v3844 = vpack.c.b16 %v2812, %v2808
    %v3845 = vpack.c.b16 %v2817, %v2813
    %v3846 = vpack.c.b16 %v2818, %v2814
    %v3847 = vpack.c.b16 %v2819, %v2815
    %v3848 = vpack.c.b16 %v2820, %v2816
    %v3849 = vpack.c.b16 %v2825, %v2821
    %v3850 = vpack.c.b16 %v2826, %v2822
    %v3851 = vpack.c.b16 %v2827, %v2823
    %v3852 = vpack.c.b16 %v2828, %v2824
    %v3853 = vpack.c.b16 %v2833, %v2829
    %v3854 = vpack.c.b16 %v2834, %v2830
    %v3855 = vpack.c.b16 %v2835, %v2831
    %v3856 = vpack.c.b16 %v2836, %v2832
    %v3857 = vpack.c.b16 %v2841, %v2837
    %v3858 = vpack.c.b16 %v2842, %v2838
    %v3859 = vpack.c.b16 %v2843, %v2839
    %v3860 = vpack.c.b16 %v2844, %v2840
    %v3861 = vpack.c.b16 %v2849, %v2845
    %v3862 = vpack.c.b16 %v2850, %v2846
    %v3863 = vpack.c.b16 %v2851, %v2847
    %v3864 = vpack.c.b16 %v2852, %v2848
    %v3865 = vpack.c.b16 %v2857, %v2853
    %v3866 = vpack.c.b16 %v2858, %v2854
    %v3867 = vpack.c.b16 %v2859, %v2855
    %v3868 = vpack.c.b16 %v2860, %v2856
    %v3869 = vpack.c.b16 %v2865, %v2861
    %v3870 = vpack.c.b16 %v2866, %v2862
    %v3871 = vpack.c.b16 %v2867, %v2863
    %v3872 = vpack.c.b16 %v2868, %v2864
    %v3873 = vpack.c.b16 %v2873, %v2869
    %v3874 = vpack.c.b16 %v2874, %v2870
    %v3875 = vpack.c.b16 %v2875, %v2871
    %v3876 = vpack.c.b16 %v2876, %v2872
    %v3877 = vpack.c.b16 %v2881, %v2877
    %v3878 = vpack.c.b16 %v2882, %v2878
    %v3879 = vpack.c.b16 %v2883, %v2879
    %v3880 = vpack.c.b16 %v2884, %v2880
    %v3881 = vpack.c.b16 %v2889, %v2885
    %v3882 = vpack.c.b16 %v2890, %v2886
    %v3883 = vpack.c.b16 %v2891, %v2887
    %v3884 = vpack.c.b16 %v2892, %v2888
    %v3885 = vpack.c.b16 %v2897, %v2893
    %v3886 = vpack.c.b16 %v2898, %v2894
    %v3887 = vpack.c.b16 %v2899, %v2895
    %v3888 = vpack.c.b16 %v2900, %v2896
    %v3889 = vpack.c.b16 %v2905, %v2901
    %v3890 = vpack.c.b16 %v2906, %v2902
    %v3891 = vpack.c.b16 %v2907, %v2903
    %v3892 = vpack.c.b16 %v2908, %v2904
    %v3893 = vpack.c.b16 %v2913, %v2909
    %v3894 = vpack.c.b16 %v2914, %v2910
    %v3895 = vpack.c.b16 %v2915, %v2911
    %v3896 = vpack.c.b16 %v2916, %v2912
    %v3897 = vpack.c.b16 %v2921, %v2917
    %v3898 = vpack.c.b16 %v2922, %v2918
    %v3899 = vpack.c.b16 %v2923, %v2919
    %v3900 = vpack.c.b16 %v2924, %v2920
    %v3901 = vpack.c.b16 %v2929, %v2925
    %v3902 = vpack.c.b16 %v2930, %v2926
    %v3903 = vpack.c.b16 %v2931, %v2927
    %v3904 = vpack.c.b16 %v2932, %v2928
    %v3905 = vpack.c.b16 %v2937, %v2933
    %v3906 = vpack.c.b16 %v2938, %v2934
    %v3907 = vpack.c.b16 %v2939, %v2935
    %v3908 = vpack.c.b16 %v2940, %v2936
    %v3909 = vpack.c.b16 %v2945, %v2941
    %v3910 = vpack.c.b16 %v2946, %v2942
    %v3911 = vpack.c.b16 %v2947, %v2943
    %v3912 = vpack.c.b16 %v2948, %v2944
    %v3913 = vpack.c.b16 %v2953, %v2949
    %v3914 = vpack.c.b16 %v2954, %v2950
    %v3915 = vpack.c.b16 %v2955, %v2951
    %v3916 = vpack.c.b16 %v2956, %v2952
    %v3917 = vpack.c.b16 %v2961, %v2957
    %v3918 = vpack.c.b16 %v2962, %v2958
    %v3919 = vpack.c.b16 %v2963, %v2959
    %v3920 = vpack.c.b16 %v2964, %v2960
    %v3921 = vpack.c.b16 %v2969, %v2965
    %v3922 = vpack.c.b16 %v2970, %v2966
    %v3923 = vpack.c.b16 %v2971, %v2967
    %v3924 = vpack.c.b16 %v2972, %v2968
    %v3925 = vpack.c.b16 %v2977, %v2973
    %v3926 = vpack.c.b16 %v2978, %v2974
    %v3927 = vpack.c.b16 %v2979, %v2975
    %v3928 = vpack.c.b16 %v2980, %v2976
    %v3929 = vpack.c.b16 %v2985, %v2981
    %v3930 = vpack.c.b16 %v2986, %v2982
    %v3931 = vpack.c.b16 %v2987, %v2983
    %v3932 = vpack.c.b16 %v2988, %v2984
    %v3933 = vpack.c.b16 %v2993, %v2989
    %v3934 = vpack.c.b16 %v2994, %v2990
    %v3935 = vpack.c.b16 %v2995, %v2991
    %v3936 = vpack.c.b16 %v2996, %v2992
    %v3937 = vpack.c.b16 %v3001, %v2997
    %v3938 = vpack.c.b16 %v3002, %v2998
    %v3939 = vpack.c.b16 %v3003, %v2999
    %v3940 = vpack.c.b16 %v3004, %v3000
    %v3941 = vpack.c.b16 %v3009, %v3005
    %v3942 = vpack.c.b16 %v3010, %v3006
    %v3943 = vpack.c.b16 %v3011, %v3007
    %v3944 = vpack.c.b16 %v3012, %v3008
    %v3945 = vpack.c.b16 %v3017, %v3013
    %v3946 = vpack.c.b16 %v3018, %v3014
    %v3947 = vpack.c.b16 %v3019, %v3015
    %v3948 = vpack.c.b16 %v3020, %v3016
    %v3949 = vpack.c.b16 %v3025, %v3021
    %v3950 = vpack.c.b16 %v3026, %v3022
    %v3951 = vpack.c.b16 %v3027, %v3023
    %v3952 = vpack.c.b16 %v3028, %v3024
    %v3953 = vpack.c.b16 %v3033, %v3029
    %v3954 = vpack.c.b16 %v3034, %v3030
    %v3955 = vpack.c.b16 %v3035, %v3031
    %v3956 = vpack.c.b16 %v3036, %v3032
    %v3957 = vpack.c.b16 %v3041, %v3037
    %v3958 = vpack.c.b16 %v3042, %v3038
    %v3959 = vpack.c.b16 %v3043, %v3039
    %v3960 = vpack.c.b16 %v3044, %v3040
    %v3961 = vpack.c.b16 %v3049, %v3045
    %v3962 = vpack.c.b16 %v3050, %v3046
    %v3963 = vpack.c.b16 %v3051, %v3047
    %v3964 = vpack.c.b16 %v3052, %v3048
    %v3965 = vpack.c.b16 %v3057, %v3053
    %v3966 = vpack.c.b16 %v3058, %v3054
    %v3967 = vpack.c.b16 %v3059, %v3055
    %v3968 = vpack.c.b16 %v3060, %v3056
    %v3969 = vpack.c.b16 %v3065, %v3061
    %v3970 = vpack.c.b16 %v3066, %v3062
    %v3971 = vpack.c.b16 %v3067, %v3063
    %v3972 = vpack.c.b16 %v3068, %v3064
    %v3973 = vpack.c.b16 %v3073, %v3069
    %v3974 = vpack.c.b16 %v3074, %v3070
    %v3975 = vpack.c.b16 %v3075, %v3071
    %v3976 = vpack.c.b16 %v3076, %v3072
    %v3977 = vpack.c.b16 %v3081, %v3077
    %v3978 = vpack.c.b16 %v3082, %v3078
    %v3979 = vpack.c.b16 %v3083, %v3079
    %v3980 = vpack.c.b16 %v3084, %v3080
    %v3981 = vpack.c.b16 %v3089, %v3085
    %v3982 = vpack.c.b16 %v3090, %v3086
    %v3983 = vpack.c.b16 %v3091, %v3087
    %v3984 = vpack.c.b16 %v3092, %v3088
    %v3985 = vpack.c.b16 %v3097, %v3093
    %v3986 = vpack.c.b16 %v3098, %v3094
    %v3987 = vpack.c.b16 %v3099, %v3095
    %v3988 = vpack.c.b16 %v3100, %v3096
    %v3989 = vpack.c.b16 %v3105, %v3101
    %v3990 = vpack.c.b16 %v3106, %v3102
    %v3991 = vpack.c.b16 %v3107, %v3103
    %v3992 = vpack.c.b16 %v3108, %v3104
    %v3993 = vpack.c.b16 %v3113, %v3109
    %v3994 = vpack.c.b16 %v3114, %v3110
    %v3995 = vpack.c.b16 %v3115, %v3111
    %v3996 = vpack.c.b16 %v3116, %v3112
    %v3997 = vpack.c.b16 %v3121, %v3117
    %v3998 = vpack.c.b16 %v3122, %v3118
    %v3999 = vpack.c.b16 %v3123, %v3119
    %v4000 = vpack.c.b16 %v3124, %v3120
    %v4001 = vpack.c.b16 %v3129, %v3125
    %v4002 = vpack.c.b16 %v3130, %v3126
    %v4003 = vpack.c.b16 %v3131, %v3127
    %v4004 = vpack.c.b16 %v3132, %v3128
    %v4005 = vpack.c.b16 %v3137, %v3133
    %v4006 = vpack.c.b16 %v3138, %v3134
    %v4007 = vpack.c.b16 %v3139, %v3135
    %v4008 = vpack.c.b16 %v3140, %v3136
    %v4009 = vpack.c.b16 %v3145, %v3141
    %v4010 = vpack.c.b16 %v3146, %v3142
    %v4011 = vpack.c.b16 %v3147, %v3143
    %v4012 = vpack.c.b16 %v3148, %v3144
    %v4013 = vpack.c.b16 %v3153, %v3149
    %v4014 = vpack.c.b16 %v3154, %v3150
    %v4015 = vpack.c.b16 %v3155, %v3151
    %v4016 = vpack.c.b16 %v3156, %v3152
    %v4017 = vpack.c.b16 %v3161, %v3157
    %v4018 = vpack.c.b16 %v3162, %v3158
    %v4019 = vpack.c.b16 %v3163, %v3159
    %v4020 = vpack.c.b16 %v3164, %v3160
    %v4021 = vpack.c.b16 %v3169, %v3165
    %v4022 = vpack.c.b16 %v3170, %v3166
    %v4023 = vpack.c.b16 %v3171, %v3167
    %v4024 = vpack.c.b16 %v3172, %v3168
    %v4025 = vpack.c.b16 %v3177, %v3173
    %v4026 = vpack.c.b16 %v3178, %v3174
    %v4027 = vpack.c.b16 %v3179, %v3175
    %v4028 = vpack.c.b16 %v3180, %v3176
    %v4029 = vpack.c.b16 %v3185, %v3181
    %v4030 = vpack.c.b16 %v3186, %v3182
    %v4031 = vpack.c.b16 %v3187, %v3183
    %v4032 = vpack.c.b16 %v3188, %v3184
    %v4033 = vpack.c.b16 %v3193, %v3189
    %v4034 = vpack.c.b16 %v3194, %v3190
    %v4035 = vpack.c.b16 %v3195, %v3191
    %v4036 = vpack.c.b16 %v3196, %v3192
    %v4037 = vpack.c.b16 %v3201, %v3197
    %v4038 = vpack.c.b16 %v3202, %v3198
    %v4039 = vpack.c.b16 %v3203, %v3199
    %v4040 = vpack.c.b16 %v3204, %v3200
    %v4041 = vpack.c.b16 %v3209, %v3205
    %v4042 = vpack.c.b16 %v3210, %v3206
    %v4043 = vpack.c.b16 %v3211, %v3207
    %v4044 = vpack.c.b16 %v3212, %v3208
    %v4045 = vpack.c.b16 %v3217, %v3213
    %v4046 = vpack.c.b16 %v3218, %v3214
    %v4047 = vpack.c.b16 %v3219, %v3215
    %v4048 = vpack.c.b16 %v3220, %v3216
    %v4049 = vpack.c.b16 %v3225, %v3221
    %v4050 = vpack.c.b16 %v3226, %v3222
    %v4051 = vpack.c.b16 %v3227, %v3223
    %v4052 = vpack.c.b16 %v3228, %v3224
    %v4053 = vpack.c.b16 %v3233, %v3229
    %v4054 = vpack.c.b16 %v3234, %v3230
    %v4055 = vpack.c.b16 %v3235, %v3231
    %v4056 = vpack.c.b16 %v3236, %v3232
    %v4057 = vpack.c.b16 %v3241, %v3237
    %v4058 = vpack.c.b16 %v3242, %v3238
    %v4059 = vpack.c.b16 %v3243, %v3239
    %v4060 = vpack.c.b16 %v3244, %v3240
    %v4061 = vpack.c.b16 %v3249, %v3245
    %v4062 = vpack.c.b16 %v3250, %v3246
    %v4063 = vpack.c.b16 %v3251, %v3247
    %v4064 = vpack.c.b16 %v3252, %v3248
    %v4065 = vpack.c.b16 %v3257, %v3253
    %v4066 = vpack.c.b16 %v3258, %v3254
    %v4067 = vpack.c.b16 %v3259, %v3255
    %v4068 = vpack.c.b16 %v3260, %v3256
    %v4069 = vpack.c.b16 %v3265, %v3261
    %v4070 = vpack.c.b16 %v3266, %v3262
    %v4071 = vpack.c.b16 %v3267, %v3263
    %v4072 = vpack.c.b16 %v3268, %v3264
    %v4073 = vpack.c.b16 %v3273, %v3269
    %v4074 = vpack.c.b16 %v3274, %v3270
    %v4075 = vpack.c.b16 %v3275, %v3271
    %v4076 = vpack.c.b16 %v3276, %v3272
    %v4077 = vpack.c.b16 %v3281, %v3277
    %v4078 = vpack.c.b16 %v3282, %v3278
    %v4079 = vpack.c.b16 %v3283, %v3279
    %v4080 = vpack.c.b16 %v3284, %v3280
    %v4081 = vpack.c.b16 %v3289, %v3285
    %v4082 = vpack.c.b16 %v3290, %v3286
    %v4083 = vpack.c.b16 %v3291, %v3287
    %v4084 = vpack.c.b16 %v3292, %v3288
    %v4085 = vpack.c.b16 %v3297, %v3293
    %v4086 = vpack.c.b16 %v3298, %v3294
    %v4087 = vpack.c.b16 %v3299, %v3295
    %v4088 = vpack.c.b16 %v3300, %v3296
    %v4089 = vpack.c.b16 %v3305, %v3301
    %v4090 = vpack.c.b16 %v3306, %v3302
    %v4091 = vpack.c.b16 %v3307, %v3303
    %v4092 = vpack.c.b16 %v3308, %v3304
    %v4093 = vpack.c.b16 %v3313, %v3309
    %v4094 = vpack.c.b16 %v3314, %v3310
    %v4095 = vpack.c.b16 %v3315, %v3311
    %v4096 = vpack.c.b16 %v3316, %v3312
    %v4097 = vpack.c.b16 %v3321, %v3317
    %v4098 = vpack.c.b16 %v3322, %v3318
    %v4099 = vpack.c.b16 %v3323, %v3319
    %v4100 = vpack.c.b16 %v3324, %v3320
    %v4101 = vpack.c.b16 %v3329, %v3325
    %v4102 = vpack.c.b16 %v3330, %v3326
    %v4103 = vpack.c.b16 %v3331, %v3327
    %v4104 = vpack.c.b16 %v3332, %v3328
    %v4105 = vpack.c.b16 %v3337, %v3333
    %v4106 = vpack.c.b16 %v3338, %v3334
    %v4107 = vpack.c.b16 %v3339, %v3335
    %v4108 = vpack.c.b16 %v3340, %v3336
    %4877 = vmatprep.subr.bf16.mxu0 %v3370
    %4878 = vmatpush1.bf16.msra.mxu0 %v3369
    %4879 = vmatprep.subr.bf16.mxu0 %v3366
    %4880 = vmatpush1.bf16.msra.mxu0 %v3365
    %4881 = vmatprep.subr.bf16.mxu0 %v3362
    %4882 = vmatpush1.bf16.msra.mxu0 %v3361
    %4883 = vmatprep.subr.bf16.mxu0 %v3358
    %4884 = vmatpush1.bf16.msra.mxu0 %v3357
    %4885 = vmatprep.subr.bf16.mxu0 %v3354
    %4886 = vmatpush1.bf16.msra.mxu0 %v3353
    %4887 = vmatprep.subr.bf16.mxu0 %v3350
    %4888 = vmatpush1.bf16.msra.mxu0 %v3349
    %4889 = vmatprep.subr.bf16.mxu0 %v3346
    %4890 = vmatpush1.bf16.msra.mxu0 %v3345
    %4891 = vmatprep.subr.bf16.mxu0 %v3342
    %4892 = vmatpush1.bf16.msra.mxu0 %v3341
    %4893 = vmatprep.subr.bf16.mxu0 %v3402
    %4894 = vmatpush2.bf16.msra.mxu0 %v3401
    %4895 = vmatprep.subr.bf16.mxu0 %v3398
    %4896 = vmatpush2.bf16.msra.mxu0 %v3397
    %4897 = vmatprep.subr.bf16.mxu0 %v3394
    %4898 = vmatpush2.bf16.msra.mxu0 %v3393
    %4899 = vmatprep.subr.bf16.mxu0 %v3390
    %4900 = vmatpush2.bf16.msra.mxu0 %v3389
    %4901 = vmatprep.subr.bf16.mxu0 %v3386
    %4902 = vmatpush2.bf16.msra.mxu0 %v3385
    %4903 = vmatprep.subr.bf16.mxu0 %v3382
    %4904 = vmatpush2.bf16.msra.mxu0 %v3381
    %4905 = vmatprep.subr.bf16.mxu0 %v3378
    %4906 = vmatpush2.bf16.msra.mxu0 %v3377
    %4907 = vmatprep.subr.bf16.mxu0 %v3374
    %4908 = vmatpush2.bf16.msra.mxu0 %v3373
    %4909 = vmatprep.mubr.bf16.mxu0 %v990
    %4910 = vmatmul.mubr.bf16.gmra.mxu0 %v989
    %v4911 = vpop.f32.mrf.mxu0
    %v4912 = vadd.f32 %v900, %v4911
    %v4913 = vpop.f32.mrf.mxu0
    %v4914 = vadd.f32 %v904, %v4913
    %v4915 = vpop.f32.mrf.mxu0
    %v4916 = vadd.f32 %v900, %v4915
    %v4917 = vpop.f32.mrf.mxu0
    %v4918 = vadd.f32 %v904, %v4917
    %4919 = vdwg.mxu0
    %4920 = vmatprep.subr.bf16.mxu0 %v3434
    %4921 = vmatpush1.bf16.msra.mxu0 %v3433
    %4922 = vmatprep.subr.bf16.mxu0 %v3430
    %4923 = vmatpush1.bf16.msra.mxu0 %v3429
    %4924 = vmatprep.subr.bf16.mxu0 %v3426
    %4925 = vmatpush1.bf16.msra.mxu0 %v3425
    %4926 = vmatprep.subr.bf16.mxu0 %v3422
    %4927 = vmatpush1.bf16.msra.mxu0 %v3421
    %4928 = vmatprep.subr.bf16.mxu0 %v3418
    %4929 = vmatpush1.bf16.msra.mxu0 %v3417
    %4930 = vmatprep.subr.bf16.mxu0 %v3414
    %4931 = vmatpush1.bf16.msra.mxu0 %v3413
    %4932 = vmatprep.subr.bf16.mxu0 %v3410
    %4933 = vmatpush1.bf16.msra.mxu0 %v3409
    %4934 = vmatprep.subr.bf16.mxu0 %v3406
    %4935 = vmatpush1.bf16.msra.mxu0 %v3405
    %4936 = vmatprep.subr.bf16.mxu0 %v3466
    %4937 = vmatpush2.bf16.msra.mxu0 %v3465
    %4938 = vmatprep.subr.bf16.mxu0 %v3462
    %4939 = vmatpush2.bf16.msra.mxu0 %v3461
    %4940 = vmatprep.subr.bf16.mxu0 %v3458
    %4941 = vmatpush2.bf16.msra.mxu0 %v3457
    %4942 = vmatprep.subr.bf16.mxu0 %v3454
    %4943 = vmatpush2.bf16.msra.mxu0 %v3453
    %4944 = vmatprep.subr.bf16.mxu0 %v3450
    %4945 = vmatpush2.bf16.msra.mxu0 %v3449
    %4946 = vmatprep.subr.bf16.mxu0 %v3446
    %4947 = vmatpush2.bf16.msra.mxu0 %v3445
    %4948 = vmatprep.subr.bf16.mxu0 %v3442
    %4949 = vmatpush2.bf16.msra.mxu0 %v3441
    %4950 = vmatprep.subr.bf16.mxu0 %v3438
    %4951 = vmatpush2.bf16.msra.mxu0 %v3437
    %4952 = vmatprep.mubr.bf16.mxu0 %v992
    %4953 = vmatmul.mubr.bf16.gmra.mxu0 %v991
    %v4954 = vpop.f32.mrf.mxu0
    %v4955 = vadd.f32 %v4912, %v4954
    %v4956 = vpop.f32.mrf.mxu0
    %v4957 = vadd.f32 %v4914, %v4956
    %v4958 = vpop.f32.mrf.mxu0
    %v4959 = vadd.f32 %v4916, %v4958
    %v4960 = vpop.f32.mrf.mxu0
    %v4961 = vadd.f32 %v4918, %v4960
    %4962 = vdwg.mxu0
    %4963 = vmatprep.subr.bf16.mxu0 %v3498
    %4964 = vmatpush1.bf16.msra.mxu0 %v3497
    %4965 = vmatprep.subr.bf16.mxu0 %v3494
    %4966 = vmatpush1.bf16.msra.mxu0 %v3493
    %4967 = vmatprep.subr.bf16.mxu0 %v3490
    %4968 = vmatpush1.bf16.msra.mxu0 %v3489
    %4969 = vmatprep.subr.bf16.mxu0 %v3486
    %4970 = vmatpush1.bf16.msra.mxu0 %v3485
    %4971 = vmatprep.subr.bf16.mxu0 %v3482
    %4972 = vmatpush1.bf16.msra.mxu0 %v3481
    %4973 = vmatprep.subr.bf16.mxu0 %v3478
    %4974 = vmatpush1.bf16.msra.mxu0 %v3477
    %4975 = vmatprep.subr.bf16.mxu0 %v3474
    %4976 = vmatpush1.bf16.msra.mxu0 %v3473
    %4977 = vmatprep.subr.bf16.mxu0 %v3470
    %4978 = vmatpush1.bf16.msra.mxu0 %v3469
    %4979 = vmatprep.subr.bf16.mxu0 %v3530
    %4980 = vmatpush2.bf16.msra.mxu0 %v3529
    %4981 = vmatprep.subr.bf16.mxu0 %v3526
    %4982 = vmatpush2.bf16.msra.mxu0 %v3525
    %4983 = vmatprep.subr.bf16.mxu0 %v3522
    %4984 = vmatpush2.bf16.msra.mxu0 %v3521
    %4985 = vmatprep.subr.bf16.mxu0 %v3518
    %4986 = vmatpush2.bf16.msra.mxu0 %v3517
    %4987 = vmatprep.subr.bf16.mxu0 %v3514
    %4988 = vmatpush2.bf16.msra.mxu0 %v3513
    %4989 = vmatprep.subr.bf16.mxu0 %v3510
    %4990 = vmatpush2.bf16.msra.mxu0 %v3509
    %4991 = vmatprep.subr.bf16.mxu0 %v3506
    %4992 = vmatpush2.bf16.msra.mxu0 %v3505
    %4993 = vmatprep.subr.bf16.mxu0 %v3502
    %4994 = vmatpush2.bf16.msra.mxu0 %v3501
    %4995 = vmatprep.mubr.bf16.mxu0 %v994
    %4996 = vmatmul.mubr.bf16.gmra.mxu0 %v993
    %v4997 = vpop.f32.mrf.mxu0
    %v4998 = vadd.f32 %v4955, %v4997
    %v4999 = vpop.f32.mrf.mxu0
    %v5000 = vadd.f32 %v4957, %v4999
    %v5001 = vpop.f32.mrf.mxu0
    %v5002 = vadd.f32 %v4959, %v5001
    %v5003 = vpop.f32.mrf.mxu0
    %v5004 = vadd.f32 %v4961, %v5003
    %5005 = vdwg.mxu0
    %5006 = vmatprep.subr.bf16.mxu0 %v3562
    %5007 = vmatpush1.bf16.msra.mxu0 %v3561
    %5008 = vmatprep.subr.bf16.mxu0 %v3558
    %5009 = vmatpush1.bf16.msra.mxu0 %v3557
    %5010 = vmatprep.subr.bf16.mxu0 %v3554
    %5011 = vmatpush1.bf16.msra.mxu0 %v3553
    %5012 = vmatprep.subr.bf16.mxu0 %v3550
    %5013 = vmatpush1.bf16.msra.mxu0 %v3549
    %5014 = vmatprep.subr.bf16.mxu0 %v3546
    %5015 = vmatpush1.bf16.msra.mxu0 %v3545
    %5016 = vmatprep.subr.bf16.mxu0 %v3542
    %5017 = vmatpush1.bf16.msra.mxu0 %v3541
    %5018 = vmatprep.subr.bf16.mxu0 %v3538
    %5019 = vmatpush1.bf16.msra.mxu0 %v3537
    %5020 = vmatprep.subr.bf16.mxu0 %v3534
    %5021 = vmatpush1.bf16.msra.mxu0 %v3533
    %5022 = vmatprep.subr.bf16.mxu0 %v3594
    %5023 = vmatpush2.bf16.msra.mxu0 %v3593
    %5024 = vmatprep.subr.bf16.mxu0 %v3590
    %5025 = vmatpush2.bf16.msra.mxu0 %v3589
    %5026 = vmatprep.subr.bf16.mxu0 %v3586
    %5027 = vmatpush2.bf16.msra.mxu0 %v3585
    %5028 = vmatprep.subr.bf16.mxu0 %v3582
    %5029 = vmatpush2.bf16.msra.mxu0 %v3581
    %5030 = vmatprep.subr.bf16.mxu0 %v3578
    %5031 = vmatpush2.bf16.msra.mxu0 %v3577
    %5032 = vmatprep.subr.bf16.mxu0 %v3574
    %5033 = vmatpush2.bf16.msra.mxu0 %v3573
    %5034 = vmatprep.subr.bf16.mxu0 %v3570
    %5035 = vmatpush2.bf16.msra.mxu0 %v3569
    %5036 = vmatprep.subr.bf16.mxu0 %v3566
    %5037 = vmatpush2.bf16.msra.mxu0 %v3565
    %5038 = vmatprep.mubr.bf16.mxu0 %v996
    %5039 = vmatmul.mubr.bf16.gmra.mxu0 %v995
    %v5040 = vpop.f32.mrf.mxu0
    %v5041 = vadd.f32 %v4998, %v5040
    %v5042 = vpop.f32.mrf.mxu0
    %v5043 = vadd.f32 %v5000, %v5042
    %v5044 = vpop.f32.mrf.mxu0
    %v5045 = vadd.f32 %v5002, %v5044
    %v5046 = vpop.f32.mrf.mxu0
    %v5047 = vadd.f32 %v5004, %v5046
    %5048 = vdwg.mxu0
    %5049 = vmatprep.subr.bf16.mxu0 %v3626
    %5050 = vmatpush1.bf16.msra.mxu0 %v3625
    %5051 = vmatprep.subr.bf16.mxu0 %v3622
    %5052 = vmatpush1.bf16.msra.mxu0 %v3621
    %5053 = vmatprep.subr.bf16.mxu0 %v3618
    %5054 = vmatpush1.bf16.msra.mxu0 %v3617
    %5055 = vmatprep.subr.bf16.mxu0 %v3614
    %5056 = vmatpush1.bf16.msra.mxu0 %v3613
    %5057 = vmatprep.subr.bf16.mxu0 %v3610
    %5058 = vmatpush1.bf16.msra.mxu0 %v3609
    %5059 = vmatprep.subr.bf16.mxu0 %v3606
    %5060 = vmatpush1.bf16.msra.mxu0 %v3605
    %5061 = vmatprep.subr.bf16.mxu0 %v3602
    %5062 = vmatpush1.bf16.msra.mxu0 %v3601
    %5063 = vmatprep.subr.bf16.mxu0 %v3598
    %5064 = vmatpush1.bf16.msra.mxu0 %v3597
    %5065 = vmatprep.subr.bf16.mxu0 %v3658
    %5066 = vmatpush2.bf16.msra.mxu0 %v3657
    %5067 = vmatprep.subr.bf16.mxu0 %v3654
    %5068 = vmatpush2.bf16.msra.mxu0 %v3653
    %5069 = vmatprep.subr.bf16.mxu0 %v3650
    %5070 = vmatpush2.bf16.msra.mxu0 %v3649
    %5071 = vmatprep.subr.bf16.mxu0 %v3646
    %5072 = vmatpush2.bf16.msra.mxu0 %v3645
    %5073 = vmatprep.subr.bf16.mxu0 %v3642
    %5074 = vmatpush2.bf16.msra.mxu0 %v3641
    %5075 = vmatprep.subr.bf16.mxu0 %v3638
    %5076 = vmatpush2.bf16.msra.mxu0 %v3637
    %5077 = vmatprep.subr.bf16.mxu0 %v3634
    %5078 = vmatpush2.bf16.msra.mxu0 %v3633
    %5079 = vmatprep.subr.bf16.mxu0 %v3630
    %5080 = vmatpush2.bf16.msra.mxu0 %v3629
    %5081 = vmatprep.mubr.bf16.mxu0 %v998
    %5082 = vmatmul.mubr.bf16.gmra.mxu0 %v997
    %v5083 = vpop.f32.mrf.mxu0
    %v5084 = vadd.f32 %v5041, %v5083
    %v5085 = vpop.f32.mrf.mxu0
    %v5086 = vadd.f32 %v5043, %v5085
    %v5087 = vpop.f32.mrf.mxu0
    %v5088 = vadd.f32 %v5045, %v5087
    %v5089 = vpop.f32.mrf.mxu0
    %v5090 = vadd.f32 %v5047, %v5089
    %5091 = vdwg.mxu0
    %5092 = vmatprep.subr.bf16.mxu0 %v3690
    %5093 = vmatpush1.bf16.msra.mxu0 %v3689
    %5094 = vmatprep.subr.bf16.mxu0 %v3686
    %5095 = vmatpush1.bf16.msra.mxu0 %v3685
    %5096 = vmatprep.subr.bf16.mxu0 %v3682
    %5097 = vmatpush1.bf16.msra.mxu0 %v3681
    %5098 = vmatprep.subr.bf16.mxu0 %v3678
    %5099 = vmatpush1.bf16.msra.mxu0 %v3677
    %5100 = vmatprep.subr.bf16.mxu0 %v3674
    %5101 = vmatpush1.bf16.msra.mxu0 %v3673
    %5102 = vmatprep.subr.bf16.mxu0 %v3670
    %5103 = vmatpush1.bf16.msra.mxu0 %v3669
    %5104 = vmatprep.subr.bf16.mxu0 %v3666
    %5105 = vmatpush1.bf16.msra.mxu0 %v3665
    %5106 = vmatprep.subr.bf16.mxu0 %v3662
    %5107 = vmatpush1.bf16.msra.mxu0 %v3661
    %5108 = vmatprep.subr.bf16.mxu0 %v3722
    %5109 = vmatpush2.bf16.msra.mxu0 %v3721
    %5110 = vmatprep.subr.bf16.mxu0 %v3718
    %5111 = vmatpush2.bf16.msra.mxu0 %v3717
    %5112 = vmatprep.subr.bf16.mxu0 %v3714
    %5113 = vmatpush2.bf16.msra.mxu0 %v3713
    %5114 = vmatprep.subr.bf16.mxu0 %v3710
    %5115 = vmatpush2.bf16.msra.mxu0 %v3709
    %5116 = vmatprep.subr.bf16.mxu0 %v3706
    %5117 = vmatpush2.bf16.msra.mxu0 %v3705
    %5118 = vmatprep.subr.bf16.mxu0 %v3702
    %5119 = vmatpush2.bf16.msra.mxu0 %v3701
    %5120 = vmatprep.subr.bf16.mxu0 %v3698
    %5121 = vmatpush2.bf16.msra.mxu0 %v3697
    %5122 = vmatprep.subr.bf16.mxu0 %v3694
    %5123 = vmatpush2.bf16.msra.mxu0 %v3693
    %5124 = vmatprep.mubr.bf16.mxu0 %v1000
    %5125 = vmatmul.mubr.bf16.gmra.mxu0 %v999
    %v5126 = vpop.f32.mrf.mxu0
    %v5127 = vadd.f32 %v5084, %v5126
    %v5128 = vpop.f32.mrf.mxu0
    %v5129 = vadd.f32 %v5086, %v5128
    %v5130 = vpop.f32.mrf.mxu0
    %v5131 = vadd.f32 %v5088, %v5130
    %v5132 = vpop.f32.mrf.mxu0
    %v5133 = vadd.f32 %v5090, %v5132
    %5134 = vdwg.mxu0
    %5135 = vmatprep.subr.bf16.mxu0 %v3754
    %5136 = vmatpush1.bf16.msra.mxu0 %v3753
    %5137 = vmatprep.subr.bf16.mxu0 %v3750
    %5138 = vmatpush1.bf16.msra.mxu0 %v3749
    %5139 = vmatprep.subr.bf16.mxu0 %v3746
    %5140 = vmatpush1.bf16.msra.mxu0 %v3745
    %5141 = vmatprep.subr.bf16.mxu0 %v3742
    %5142 = vmatpush1.bf16.msra.mxu0 %v3741
    %5143 = vmatprep.subr.bf16.mxu0 %v3738
    %5144 = vmatpush1.bf16.msra.mxu0 %v3737
    %5145 = vmatprep.subr.bf16.mxu0 %v3734
    %5146 = vmatpush1.bf16.msra.mxu0 %v3733
    %5147 = vmatprep.subr.bf16.mxu0 %v3730
    %5148 = vmatpush1.bf16.msra.mxu0 %v3729
    %5149 = vmatprep.subr.bf16.mxu0 %v3726
    %5150 = vmatpush1.bf16.msra.mxu0 %v3725
    %5151 = vmatprep.subr.bf16.mxu0 %v3786
    %5152 = vmatpush2.bf16.msra.mxu0 %v3785
    %5153 = vmatprep.subr.bf16.mxu0 %v3782
    %5154 = vmatpush2.bf16.msra.mxu0 %v3781
    %5155 = vmatprep.subr.bf16.mxu0 %v3778
    %5156 = vmatpush2.bf16.msra.mxu0 %v3777
    %5157 = vmatprep.subr.bf16.mxu0 %v3774
    %5158 = vmatpush2.bf16.msra.mxu0 %v3773
    %5159 = vmatprep.subr.bf16.mxu0 %v3770
    %5160 = vmatpush2.bf16.msra.mxu0 %v3769
    %5161 = vmatprep.subr.bf16.mxu0 %v3766
    %5162 = vmatpush2.bf16.msra.mxu0 %v3765
    %5163 = vmatprep.subr.bf16.mxu0 %v3762
    %5164 = vmatpush2.bf16.msra.mxu0 %v3761
    %5165 = vmatprep.subr.bf16.mxu0 %v3758
    %5166 = vmatpush2.bf16.msra.mxu0 %v3757
    %5167 = vmatprep.mubr.bf16.mxu0 %v1002
    %5168 = vmatmul.mubr.bf16.gmra.mxu0 %v1001
    %v5169 = vpop.f32.mrf.mxu0
    %v5170 = vadd.f32 %v5127, %v5169
    %v5171 = vpop.f32.mrf.mxu0
    %v5172 = vadd.f32 %v5129, %v5171
    %v5173 = vpop.f32.mrf.mxu0
    %v5174 = vadd.f32 %v5131, %v5173
    %v5175 = vpop.f32.mrf.mxu0
    %v5176 = vadd.f32 %v5133, %v5175
    %5177 = vdwg.mxu0
    %5178 = vmatprep.subr.bf16.mxu0 %v3818
    %5179 = vmatpush1.bf16.msra.mxu0 %v3817
    %5180 = vmatprep.subr.bf16.mxu0 %v3814
    %5181 = vmatpush1.bf16.msra.mxu0 %v3813
    %5182 = vmatprep.subr.bf16.mxu0 %v3810
    %5183 = vmatpush1.bf16.msra.mxu0 %v3809
    %5184 = vmatprep.subr.bf16.mxu0 %v3806
    %5185 = vmatpush1.bf16.msra.mxu0 %v3805
    %5186 = vmatprep.subr.bf16.mxu0 %v3802
    %5187 = vmatpush1.bf16.msra.mxu0 %v3801
    %5188 = vmatprep.subr.bf16.mxu0 %v3798
    %5189 = vmatpush1.bf16.msra.mxu0 %v3797
    %5190 = vmatprep.subr.bf16.mxu0 %v3794
    %5191 = vmatpush1.bf16.msra.mxu0 %v3793
    %5192 = vmatprep.subr.bf16.mxu0 %v3790
    %5193 = vmatpush1.bf16.msra.mxu0 %v3789
    %5194 = vmatprep.subr.bf16.mxu0 %v3850
    %5195 = vmatpush2.bf16.msra.mxu0 %v3849
    %5196 = vmatprep.subr.bf16.mxu0 %v3846
    %5197 = vmatpush2.bf16.msra.mxu0 %v3845
    %5198 = vmatprep.subr.bf16.mxu0 %v3842
    %5199 = vmatpush2.bf16.msra.mxu0 %v3841
    %5200 = vmatprep.subr.bf16.mxu0 %v3838
    %5201 = vmatpush2.bf16.msra.mxu0 %v3837
    %5202 = vmatprep.subr.bf16.mxu0 %v3834
    %5203 = vmatpush2.bf16.msra.mxu0 %v3833
    %5204 = vmatprep.subr.bf16.mxu0 %v3830
    %5205 = vmatpush2.bf16.msra.mxu0 %v3829
    %5206 = vmatprep.subr.bf16.mxu0 %v3826
    %5207 = vmatpush2.bf16.msra.mxu0 %v3825
    %5208 = vmatprep.subr.bf16.mxu0 %v3822
    %5209 = vmatpush2.bf16.msra.mxu0 %v3821
    %5210 = vmatprep.mubr.bf16.mxu0 %v1004
    %5211 = vmatmul.mubr.bf16.gmra.mxu0 %v1003
    %v5212 = vpop.f32.mrf.mxu0
    %v5213 = vadd.f32 %v5170, %v5212
    %v5214 = vpop.f32.mrf.mxu0
    %v5215 = vadd.f32 %v5172, %v5214
    %v5216 = vpop.f32.mrf.mxu0
    %v5217 = vadd.f32 %v5174, %v5216
    %v5218 = vpop.f32.mrf.mxu0
    %v5219 = vadd.f32 %v5176, %v5218
    %5220 = vdwg.mxu0
    %5221 = vmatprep.subr.bf16.mxu0 %v3882
    %5222 = vmatpush1.bf16.msra.mxu0 %v3881
    %5223 = vmatprep.subr.bf16.mxu0 %v3878
    %5224 = vmatpush1.bf16.msra.mxu0 %v3877
    %5225 = vmatprep.subr.bf16.mxu0 %v3874
    %5226 = vmatpush1.bf16.msra.mxu0 %v3873
    %5227 = vmatprep.subr.bf16.mxu0 %v3870
    %5228 = vmatpush1.bf16.msra.mxu0 %v3869
    %5229 = vmatprep.subr.bf16.mxu0 %v3866
    %5230 = vmatpush1.bf16.msra.mxu0 %v3865
    %5231 = vmatprep.subr.bf16.mxu0 %v3862
    %5232 = vmatpush1.bf16.msra.mxu0 %v3861
    %5233 = vmatprep.subr.bf16.mxu0 %v3858
    %5234 = vmatpush1.bf16.msra.mxu0 %v3857
    %5235 = vmatprep.subr.bf16.mxu0 %v3854
    %5236 = vmatpush1.bf16.msra.mxu0 %v3853
    %5237 = vmatprep.subr.bf16.mxu0 %v3914
    %5238 = vmatpush2.bf16.msra.mxu0 %v3913
    %5239 = vmatprep.subr.bf16.mxu0 %v3910
    %5240 = vmatpush2.bf16.msra.mxu0 %v3909
    %5241 = vmatprep.subr.bf16.mxu0 %v3906
    %5242 = vmatpush2.bf16.msra.mxu0 %v3905
    %5243 = vmatprep.subr.bf16.mxu0 %v3902
    %5244 = vmatpush2.bf16.msra.mxu0 %v3901
    %5245 = vmatprep.subr.bf16.mxu0 %v3898
    %5246 = vmatpush2.bf16.msra.mxu0 %v3897
    %5247 = vmatprep.subr.bf16.mxu0 %v3894
    %5248 = vmatpush2.bf16.msra.mxu0 %v3893
    %5249 = vmatprep.subr.bf16.mxu0 %v3890
    %5250 = vmatpush2.bf16.msra.mxu0 %v3889
    %5251 = vmatprep.subr.bf16.mxu0 %v3886
    %5252 = vmatpush2.bf16.msra.mxu0 %v3885
    %5253 = vmatprep.mubr.bf16.mxu0 %v1006
    %5254 = vmatmul.mubr.bf16.gmra.mxu0 %v1005
    %v5255 = vpop.f32.mrf.mxu0
    %v5256 = vadd.f32 %v5213, %v5255
    %v5257 = vpop.f32.mrf.mxu0
    %v5258 = vadd.f32 %v5215, %v5257
    %v5259 = vpop.f32.mrf.mxu0
    %v5260 = vadd.f32 %v5217, %v5259
    %v5261 = vpop.f32.mrf.mxu0
    %v5262 = vadd.f32 %v5219, %v5261
    %5263 = vdwg.mxu0
    %5264 = vmatprep.subr.bf16.mxu0 %v3946
    %5265 = vmatpush1.bf16.msra.mxu0 %v3945
    %5266 = vmatprep.subr.bf16.mxu0 %v3942
    %5267 = vmatpush1.bf16.msra.mxu0 %v3941
    %5268 = vmatprep.subr.bf16.mxu0 %v3938
    %5269 = vmatpush1.bf16.msra.mxu0 %v3937
    %5270 = vmatprep.subr.bf16.mxu0 %v3934
    %5271 = vmatpush1.bf16.msra.mxu0 %v3933
    %5272 = vmatprep.subr.bf16.mxu0 %v3930
    %5273 = vmatpush1.bf16.msra.mxu0 %v3929
    %5274 = vmatprep.subr.bf16.mxu0 %v3926
    %5275 = vmatpush1.bf16.msra.mxu0 %v3925
    %5276 = vmatprep.subr.bf16.mxu0 %v3922
    %5277 = vmatpush1.bf16.msra.mxu0 %v3921
    %5278 = vmatprep.subr.bf16.mxu0 %v3918
    %5279 = vmatpush1.bf16.msra.mxu0 %v3917
    %5280 = vmatprep.subr.bf16.mxu0 %v3978
    %5281 = vmatpush2.bf16.msra.mxu0 %v3977
    %5282 = vmatprep.subr.bf16.mxu0 %v3974
    %5283 = vmatpush2.bf16.msra.mxu0 %v3973
    %5284 = vmatprep.subr.bf16.mxu0 %v3970
    %5285 = vmatpush2.bf16.msra.mxu0 %v3969
    %5286 = vmatprep.subr.bf16.mxu0 %v3966
    %5287 = vmatpush2.bf16.msra.mxu0 %v3965
    %5288 = vmatprep.subr.bf16.mxu0 %v3962
    %5289 = vmatpush2.bf16.msra.mxu0 %v3961
    %5290 = vmatprep.subr.bf16.mxu0 %v3958
    %5291 = vmatpush2.bf16.msra.mxu0 %v3957
    %5292 = vmatprep.subr.bf16.mxu0 %v3954
    %5293 = vmatpush2.bf16.msra.mxu0 %v3953
    %5294 = vmatprep.subr.bf16.mxu0 %v3950
    %5295 = vmatpush2.bf16.msra.mxu0 %v3949
    %5296 = vmatprep.mubr.bf16.mxu0 %v1008
    %5297 = vmatmul.mubr.bf16.gmra.mxu0 %v1007
    %v5298 = vpop.f32.mrf.mxu0
    %v5299 = vadd.f32 %v5256, %v5298
    %v5300 = vpop.f32.mrf.mxu0
    %v5301 = vadd.f32 %v5258, %v5300
    %v5302 = vpop.f32.mrf.mxu0
    %v5303 = vadd.f32 %v5260, %v5302
    %v5304 = vpop.f32.mrf.mxu0
    %v5305 = vadd.f32 %v5262, %v5304
    %5306 = vdwg.mxu0
    %5307 = vmatprep.subr.bf16.mxu0 %v4010
    %5308 = vmatpush1.bf16.msra.mxu0 %v4009
    %5309 = vmatprep.subr.bf16.mxu0 %v4006
    %5310 = vmatpush1.bf16.msra.mxu0 %v4005
    %5311 = vmatprep.subr.bf16.mxu0 %v4002
    %5312 = vmatpush1.bf16.msra.mxu0 %v4001
    %5313 = vmatprep.subr.bf16.mxu0 %v3998
    %5314 = vmatpush1.bf16.msra.mxu0 %v3997
    %5315 = vmatprep.subr.bf16.mxu0 %v3994
    %5316 = vmatpush1.bf16.msra.mxu0 %v3993
    %5317 = vmatprep.subr.bf16.mxu0 %v3990
    %5318 = vmatpush1.bf16.msra.mxu0 %v3989
    %5319 = vmatprep.subr.bf16.mxu0 %v3986
    %5320 = vmatpush1.bf16.msra.mxu0 %v3985
    %5321 = vmatprep.subr.bf16.mxu0 %v3982
    %5322 = vmatpush1.bf16.msra.mxu0 %v3981
    %5323 = vmatprep.subr.bf16.mxu0 %v4042
    %5324 = vmatpush2.bf16.msra.mxu0 %v4041
    %5325 = vmatprep.subr.bf16.mxu0 %v4038
    %5326 = vmatpush2.bf16.msra.mxu0 %v4037
    %5327 = vmatprep.subr.bf16.mxu0 %v4034
    %5328 = vmatpush2.bf16.msra.mxu0 %v4033
    %5329 = vmatprep.subr.bf16.mxu0 %v4030
    %5330 = vmatpush2.bf16.msra.mxu0 %v4029
    %5331 = vmatprep.subr.bf16.mxu0 %v4026
    %5332 = vmatpush2.bf16.msra.mxu0 %v4025
    %5333 = vmatprep.subr.bf16.mxu0 %v4022
    %5334 = vmatpush2.bf16.msra.mxu0 %v4021
    %5335 = vmatprep.subr.bf16.mxu0 %v4018
    %5336 = vmatpush2.bf16.msra.mxu0 %v4017
    %5337 = vmatprep.subr.bf16.mxu0 %v4014
    %5338 = vmatpush2.bf16.msra.mxu0 %v4013
    %5339 = vmatprep.mubr.bf16.mxu0 %v1010
    %5340 = vmatmul.mubr.bf16.gmra.mxu0 %v1009
    %v5341 = vpop.f32.mrf.mxu0
    %v5342 = vadd.f32 %v5299, %v5341
    %v5343 = vpop.f32.mrf.mxu0
    %v5344 = vadd.f32 %v5301, %v5343
    %v5345 = vpop.f32.mrf.mxu0
    %v5346 = vadd.f32 %v5303, %v5345
    %v5347 = vpop.f32.mrf.mxu0
    %v5348 = vadd.f32 %v5305, %v5347
    %5349 = vdwg.mxu0
    %5350 = vmatprep.subr.bf16.mxu0 %v4074
    %5351 = vmatpush1.bf16.msra.mxu0 %v4073
    %5352 = vmatprep.subr.bf16.mxu0 %v4070
    %5353 = vmatpush1.bf16.msra.mxu0 %v4069
    %5354 = vmatprep.subr.bf16.mxu0 %v4066
    %5355 = vmatpush1.bf16.msra.mxu0 %v4065
    %5356 = vmatprep.subr.bf16.mxu0 %v4062
    %5357 = vmatpush1.bf16.msra.mxu0 %v4061
    %5358 = vmatprep.subr.bf16.mxu0 %v4058
    %5359 = vmatpush1.bf16.msra.mxu0 %v4057
    %5360 = vmatprep.subr.bf16.mxu0 %v4054
    %5361 = vmatpush1.bf16.msra.mxu0 %v4053
    %5362 = vmatprep.subr.bf16.mxu0 %v4050
    %5363 = vmatpush1.bf16.msra.mxu0 %v4049
    %5364 = vmatprep.subr.bf16.mxu0 %v4046
    %5365 = vmatpush1.bf16.msra.mxu0 %v4045
    %5366 = vmatprep.subr.bf16.mxu0 %v4106
    %5367 = vmatpush2.bf16.msra.mxu0 %v4105
    %5368 = vmatprep.subr.bf16.mxu0 %v4102
    %5369 = vmatpush2.bf16.msra.mxu0 %v4101
    %5370 = vmatprep.subr.bf16.mxu0 %v4098
    %5371 = vmatpush2.bf16.msra.mxu0 %v4097
    %5372 = vmatprep.subr.bf16.mxu0 %v4094
    %5373 = vmatpush2.bf16.msra.mxu0 %v4093
    %5374 = vmatprep.subr.bf16.mxu0 %v4090
    %5375 = vmatpush2.bf16.msra.mxu0 %v4089
    %5376 = vmatprep.subr.bf16.mxu0 %v4086
    %5377 = vmatpush2.bf16.msra.mxu0 %v4085
    %5378 = vmatprep.subr.bf16.mxu0 %v4082
    %5379 = vmatpush2.bf16.msra.mxu0 %v4081
    %5380 = vmatprep.subr.bf16.mxu0 %v4078
    %5381 = vmatpush2.bf16.msra.mxu0 %v4077
    %5382 = vmatprep.mubr.bf16.mxu0 %v1012
    %5383 = vmatmul.mubr.bf16.gmra.mxu0 %v1011
    %v5384 = vpop.f32.mrf.mxu0
    %v5385 = vadd.f32 %v5342, %v5384
    %v5386 = vpop.f32.mrf.mxu0
    %v5387 = vadd.f32 %v5344, %v5386
    %v5388 = vpop.f32.mrf.mxu0
    %v5389 = vadd.f32 %v5346, %v5388
    %v5390 = vpop.f32.mrf.mxu0
    %v5391 = vadd.f32 %v5348, %v5390
    %5392 = vdwg.mxu0
    %5393 = vmatprep.subr.bf16.mxu0 %v3372
    %5394 = vmatpush1.bf16.msra.mxu0 %v3371
    %5395 = vmatprep.subr.bf16.mxu0 %v3368
    %5396 = vmatpush1.bf16.msra.mxu0 %v3367
    %5397 = vmatprep.subr.bf16.mxu0 %v3364
    %5398 = vmatpush1.bf16.msra.mxu0 %v3363
    %5399 = vmatprep.subr.bf16.mxu0 %v3360
    %5400 = vmatpush1.bf16.msra.mxu0 %v3359
    %5401 = vmatprep.subr.bf16.mxu0 %v3356
    %5402 = vmatpush1.bf16.msra.mxu0 %v3355
    %5403 = vmatprep.subr.bf16.mxu0 %v3352
    %5404 = vmatpush1.bf16.msra.mxu0 %v3351
    %5405 = vmatprep.subr.bf16.mxu0 %v3348
    %5406 = vmatpush1.bf16.msra.mxu0 %v3347
    %5407 = vmatprep.subr.bf16.mxu0 %v3344
    %5408 = vmatpush1.bf16.msra.mxu0 %v3343
    %5409 = vmatprep.subr.bf16.mxu0 %v3404
    %5410 = vmatpush2.bf16.msra.mxu0 %v3403
    %5411 = vmatprep.subr.bf16.mxu0 %v3400
    %5412 = vmatpush2.bf16.msra.mxu0 %v3399
    %5413 = vmatprep.subr.bf16.mxu0 %v3396
    %5414 = vmatpush2.bf16.msra.mxu0 %v3395
    %5415 = vmatprep.subr.bf16.mxu0 %v3392
    %5416 = vmatpush2.bf16.msra.mxu0 %v3391
    %5417 = vmatprep.subr.bf16.mxu0 %v3388
    %5418 = vmatpush2.bf16.msra.mxu0 %v3387
    %5419 = vmatprep.subr.bf16.mxu0 %v3384
    %5420 = vmatpush2.bf16.msra.mxu0 %v3383
    %5421 = vmatprep.subr.bf16.mxu0 %v3380
    %5422 = vmatpush2.bf16.msra.mxu0 %v3379
    %5423 = vmatprep.subr.bf16.mxu0 %v3376
    %5424 = vmatpush2.bf16.msra.mxu0 %v3375
    %5425 = vmatprep.mubr.bf16.mxu0 %v990
    %5426 = vmatmul.mubr.bf16.gmra.mxu0 %v989
    %v5427 = vpop.f32.mrf.mxu0
    %v5428 = vadd.f32 %v908, %v5427
    %v5429 = vpop.f32.mrf.mxu0
    %v5430 = vadd.f32 %v912, %v5429
    %v5431 = vpop.f32.mrf.mxu0
    %v5432 = vadd.f32 %v908, %v5431
    %v5433 = vpop.f32.mrf.mxu0
    %v5434 = vadd.f32 %v912, %v5433
    %5435 = vdwg.mxu0
    %5436 = vmatprep.subr.bf16.mxu0 %v3436
    %5437 = vmatpush1.bf16.msra.mxu0 %v3435
    %5438 = vmatprep.subr.bf16.mxu0 %v3432
    %5439 = vmatpush1.bf16.msra.mxu0 %v3431
    %5440 = vmatprep.subr.bf16.mxu0 %v3428
    %5441 = vmatpush1.bf16.msra.mxu0 %v3427
    %5442 = vmatprep.subr.bf16.mxu0 %v3424
    %5443 = vmatpush1.bf16.msra.mxu0 %v3423
    %5444 = vmatprep.subr.bf16.mxu0 %v3420
    %5445 = vmatpush1.bf16.msra.mxu0 %v3419
    %5446 = vmatprep.subr.bf16.mxu0 %v3416
    %5447 = vmatpush1.bf16.msra.mxu0 %v3415
    %5448 = vmatprep.subr.bf16.mxu0 %v3412
    %5449 = vmatpush1.bf16.msra.mxu0 %v3411
    %5450 = vmatprep.subr.bf16.mxu0 %v3408
    %5451 = vmatpush1.bf16.msra.mxu0 %v3407
    %5452 = vmatprep.subr.bf16.mxu0 %v3468
    %5453 = vmatpush2.bf16.msra.mxu0 %v3467
    %5454 = vmatprep.subr.bf16.mxu0 %v3464
    %5455 = vmatpush2.bf16.msra.mxu0 %v3463
    %5456 = vmatprep.subr.bf16.mxu0 %v3460
    %5457 = vmatpush2.bf16.msra.mxu0 %v3459
    %5458 = vmatprep.subr.bf16.mxu0 %v3456
    %5459 = vmatpush2.bf16.msra.mxu0 %v3455
    %5460 = vmatprep.subr.bf16.mxu0 %v3452
    %5461 = vmatpush2.bf16.msra.mxu0 %v3451
    %5462 = vmatprep.subr.bf16.mxu0 %v3448
    %5463 = vmatpush2.bf16.msra.mxu0 %v3447
    %5464 = vmatprep.subr.bf16.mxu0 %v3444
    %5465 = vmatpush2.bf16.msra.mxu0 %v3443
    %5466 = vmatprep.subr.bf16.mxu0 %v3440
    %5467 = vmatpush2.bf16.msra.mxu0 %v3439
    %5468 = vmatprep.mubr.bf16.mxu0 %v992
    %5469 = vmatmul.mubr.bf16.gmra.mxu0 %v991
    %v5470 = vpop.f32.mrf.mxu0
    %v5471 = vadd.f32 %v5428, %v5470
    %v5472 = vpop.f32.mrf.mxu0
    %v5473 = vadd.f32 %v5430, %v5472
    %v5474 = vpop.f32.mrf.mxu0
    %v5475 = vadd.f32 %v5432, %v5474
    %v5476 = vpop.f32.mrf.mxu0
    %v5477 = vadd.f32 %v5434, %v5476
    %5478 = vdwg.mxu0
    %5479 = vmatprep.subr.bf16.mxu0 %v3500
    %5480 = vmatpush1.bf16.msra.mxu0 %v3499
    %5481 = vmatprep.subr.bf16.mxu0 %v3496
    %5482 = vmatpush1.bf16.msra.mxu0 %v3495
    %5483 = vmatprep.subr.bf16.mxu0 %v3492
    %5484 = vmatpush1.bf16.msra.mxu0 %v3491
    %5485 = vmatprep.subr.bf16.mxu0 %v3488
    %5486 = vmatpush1.bf16.msra.mxu0 %v3487
    %5487 = vmatprep.subr.bf16.mxu0 %v3484
    %5488 = vmatpush1.bf16.msra.mxu0 %v3483
    %5489 = vmatprep.subr.bf16.mxu0 %v3480
    %5490 = vmatpush1.bf16.msra.mxu0 %v3479
    %5491 = vmatprep.subr.bf16.mxu0 %v3476
    %5492 = vmatpush1.bf16.msra.mxu0 %v3475
    %5493 = vmatprep.subr.bf16.mxu0 %v3472
    %5494 = vmatpush1.bf16.msra.mxu0 %v3471
    %5495 = vmatprep.subr.bf16.mxu0 %v3532
    %5496 = vmatpush2.bf16.msra.mxu0 %v3531
    %5497 = vmatprep.subr.bf16.mxu0 %v3528
    %5498 = vmatpush2.bf16.msra.mxu0 %v3527
    %5499 = vmatprep.subr.bf16.mxu0 %v3524
    %5500 = vmatpush2.bf16.msra.mxu0 %v3523
    %5501 = vmatprep.subr.bf16.mxu0 %v3520
    %5502 = vmatpush2.bf16.msra.mxu0 %v3519
    %5503 = vmatprep.subr.bf16.mxu0 %v3516
    %5504 = vmatpush2.bf16.msra.mxu0 %v3515
    %5505 = vmatprep.subr.bf16.mxu0 %v3512
    %5506 = vmatpush2.bf16.msra.mxu0 %v3511
    %5507 = vmatprep.subr.bf16.mxu0 %v3508
    %5508 = vmatpush2.bf16.msra.mxu0 %v3507
    %5509 = vmatprep.subr.bf16.mxu0 %v3504
    %5510 = vmatpush2.bf16.msra.mxu0 %v3503
    %5511 = vmatprep.mubr.bf16.mxu0 %v994
    %5512 = vmatmul.mubr.bf16.gmra.mxu0 %v993
    %v5513 = vpop.f32.mrf.mxu0
    %v5514 = vadd.f32 %v5471, %v5513
    %v5515 = vpop.f32.mrf.mxu0
    %v5516 = vadd.f32 %v5473, %v5515
    %v5517 = vpop.f32.mrf.mxu0
    %v5518 = vadd.f32 %v5475, %v5517
    %v5519 = vpop.f32.mrf.mxu0
    %v5520 = vadd.f32 %v5477, %v5519
    %5521 = vdwg.mxu0
    %5522 = vmatprep.subr.bf16.mxu0 %v3564
    %5523 = vmatpush1.bf16.msra.mxu0 %v3563
    %5524 = vmatprep.subr.bf16.mxu0 %v3560
    %5525 = vmatpush1.bf16.msra.mxu0 %v3559
    %5526 = vmatprep.subr.bf16.mxu0 %v3556
    %5527 = vmatpush1.bf16.msra.mxu0 %v3555
    %5528 = vmatprep.subr.bf16.mxu0 %v3552
    %5529 = vmatpush1.bf16.msra.mxu0 %v3551
    %5530 = vmatprep.subr.bf16.mxu0 %v3548
    %5531 = vmatpush1.bf16.msra.mxu0 %v3547
    %5532 = vmatprep.subr.bf16.mxu0 %v3544
    %5533 = vmatpush1.bf16.msra.mxu0 %v3543
    %5534 = vmatprep.subr.bf16.mxu0 %v3540
    %5535 = vmatpush1.bf16.msra.mxu0 %v3539
    %5536 = vmatprep.subr.bf16.mxu0 %v3536
    %5537 = vmatpush1.bf16.msra.mxu0 %v3535
    %5538 = vmatprep.subr.bf16.mxu0 %v3596
    %5539 = vmatpush2.bf16.msra.mxu0 %v3595
    %5540 = vmatprep.subr.bf16.mxu0 %v3592
    %5541 = vmatpush2.bf16.msra.mxu0 %v3591
    %5542 = vmatprep.subr.bf16.mxu0 %v3588
    %5543 = vmatpush2.bf16.msra.mxu0 %v3587
    %5544 = vmatprep.subr.bf16.mxu0 %v3584
    %5545 = vmatpush2.bf16.msra.mxu0 %v3583
    %5546 = vmatprep.subr.bf16.mxu0 %v3580
    %5547 = vmatpush2.bf16.msra.mxu0 %v3579
    %5548 = vmatprep.subr.bf16.mxu0 %v3576
    %5549 = vmatpush2.bf16.msra.mxu0 %v3575
    %5550 = vmatprep.subr.bf16.mxu0 %v3572
    %5551 = vmatpush2.bf16.msra.mxu0 %v3571
    %5552 = vmatprep.subr.bf16.mxu0 %v3568
    %5553 = vmatpush2.bf16.msra.mxu0 %v3567
    %5554 = vmatprep.mubr.bf16.mxu0 %v996
    %5555 = vmatmul.mubr.bf16.gmra.mxu0 %v995
    %v5556 = vpop.f32.mrf.mxu0
    %v5557 = vadd.f32 %v5514, %v5556
    %v5558 = vpop.f32.mrf.mxu0
    %v5559 = vadd.f32 %v5516, %v5558
    %v5560 = vpop.f32.mrf.mxu0
    %v5561 = vadd.f32 %v5518, %v5560
    %v5562 = vpop.f32.mrf.mxu0
    %v5563 = vadd.f32 %v5520, %v5562
    %5564 = vdwg.mxu0
    %5565 = vmatprep.subr.bf16.mxu0 %v3628
    %5566 = vmatpush1.bf16.msra.mxu0 %v3627
    %5567 = vmatprep.subr.bf16.mxu0 %v3624
    %5568 = vmatpush1.bf16.msra.mxu0 %v3623
    %5569 = vmatprep.subr.bf16.mxu0 %v3620
    %5570 = vmatpush1.bf16.msra.mxu0 %v3619
    %5571 = vmatprep.subr.bf16.mxu0 %v3616
    %5572 = vmatpush1.bf16.msra.mxu0 %v3615
    %5573 = vmatprep.subr.bf16.mxu0 %v3612
    %5574 = vmatpush1.bf16.msra.mxu0 %v3611
    %5575 = vmatprep.subr.bf16.mxu0 %v3608
    %5576 = vmatpush1.bf16.msra.mxu0 %v3607
    %5577 = vmatprep.subr.bf16.mxu0 %v3604
    %5578 = vmatpush1.bf16.msra.mxu0 %v3603
    %5579 = vmatprep.subr.bf16.mxu0 %v3600
    %5580 = vmatpush1.bf16.msra.mxu0 %v3599
    %5581 = vmatprep.subr.bf16.mxu0 %v3660
    %5582 = vmatpush2.bf16.msra.mxu0 %v3659
    %5583 = vmatprep.subr.bf16.mxu0 %v3656
    %5584 = vmatpush2.bf16.msra.mxu0 %v3655
    %5585 = vmatprep.subr.bf16.mxu0 %v3652
    %5586 = vmatpush2.bf16.msra.mxu0 %v3651
    %5587 = vmatprep.subr.bf16.mxu0 %v3648
    %5588 = vmatpush2.bf16.msra.mxu0 %v3647
    %5589 = vmatprep.subr.bf16.mxu0 %v3644
    %5590 = vmatpush2.bf16.msra.mxu0 %v3643
    %5591 = vmatprep.subr.bf16.mxu0 %v3640
    %5592 = vmatpush2.bf16.msra.mxu0 %v3639
    %5593 = vmatprep.subr.bf16.mxu0 %v3636
    %5594 = vmatpush2.bf16.msra.mxu0 %v3635
    %5595 = vmatprep.subr.bf16.mxu0 %v3632
    %5596 = vmatpush2.bf16.msra.mxu0 %v3631
    %5597 = vmatprep.mubr.bf16.mxu0 %v998
    %5598 = vmatmul.mubr.bf16.gmra.mxu0 %v997
    %v5599 = vpop.f32.mrf.mxu0
    %v5600 = vadd.f32 %v5557, %v5599
    %v5601 = vpop.f32.mrf.mxu0
    %v5602 = vadd.f32 %v5559, %v5601
    %v5603 = vpop.f32.mrf.mxu0
    %v5604 = vadd.f32 %v5561, %v5603
    %v5605 = vpop.f32.mrf.mxu0
    %v5606 = vadd.f32 %v5563, %v5605
    %5607 = vdwg.mxu0
    %5608 = vmatprep.subr.bf16.mxu0 %v3692
    %5609 = vmatpush1.bf16.msra.mxu0 %v3691
    %5610 = vmatprep.subr.bf16.mxu0 %v3688
    %5611 = vmatpush1.bf16.msra.mxu0 %v3687
    %5612 = vmatprep.subr.bf16.mxu0 %v3684
    %5613 = vmatpush1.bf16.msra.mxu0 %v3683
    %5614 = vmatprep.subr.bf16.mxu0 %v3680
    %5615 = vmatpush1.bf16.msra.mxu0 %v3679
    %5616 = vmatprep.subr.bf16.mxu0 %v3676
    %5617 = vmatpush1.bf16.msra.mxu0 %v3675
    %5618 = vmatprep.subr.bf16.mxu0 %v3672
    %5619 = vmatpush1.bf16.msra.mxu0 %v3671
    %5620 = vmatprep.subr.bf16.mxu0 %v3668
    %5621 = vmatpush1.bf16.msra.mxu0 %v3667
    %5622 = vmatprep.subr.bf16.mxu0 %v3664
    %5623 = vmatpush1.bf16.msra.mxu0 %v3663
    %5624 = vmatprep.subr.bf16.mxu0 %v3724
    %5625 = vmatpush2.bf16.msra.mxu0 %v3723
    %5626 = vmatprep.subr.bf16.mxu0 %v3720
    %5627 = vmatpush2.bf16.msra.mxu0 %v3719
    %5628 = vmatprep.subr.bf16.mxu0 %v3716
    %5629 = vmatpush2.bf16.msra.mxu0 %v3715
    %5630 = vmatprep.subr.bf16.mxu0 %v3712
    %5631 = vmatpush2.bf16.msra.mxu0 %v3711
    %5632 = vmatprep.subr.bf16.mxu0 %v3708
    %5633 = vmatpush2.bf16.msra.mxu0 %v3707
    %5634 = vmatprep.subr.bf16.mxu0 %v3704
    %5635 = vmatpush2.bf16.msra.mxu0 %v3703
    %5636 = vmatprep.subr.bf16.mxu0 %v3700
    %5637 = vmatpush2.bf16.msra.mxu0 %v3699
    %5638 = vmatprep.subr.bf16.mxu0 %v3696
    %5639 = vmatpush2.bf16.msra.mxu0 %v3695
    %5640 = vmatprep.mubr.bf16.mxu0 %v1000
    %5641 = vmatmul.mubr.bf16.gmra.mxu0 %v999
    %v5642 = vpop.f32.mrf.mxu0
    %v5643 = vadd.f32 %v5600, %v5642
    %v5644 = vpop.f32.mrf.mxu0
    %v5645 = vadd.f32 %v5602, %v5644
    %v5646 = vpop.f32.mrf.mxu0
    %v5647 = vadd.f32 %v5604, %v5646
    %v5648 = vpop.f32.mrf.mxu0
    %v5649 = vadd.f32 %v5606, %v5648
    %5650 = vdwg.mxu0
    %5651 = vmatprep.subr.bf16.mxu0 %v3756
    %5652 = vmatpush1.bf16.msra.mxu0 %v3755
    %5653 = vmatprep.subr.bf16.mxu0 %v3752
    %5654 = vmatpush1.bf16.msra.mxu0 %v3751
    %5655 = vmatprep.subr.bf16.mxu0 %v3748
    %5656 = vmatpush1.bf16.msra.mxu0 %v3747
    %5657 = vmatprep.subr.bf16.mxu0 %v3744
    %5658 = vmatpush1.bf16.msra.mxu0 %v3743
    %5659 = vmatprep.subr.bf16.mxu0 %v3740
    %5660 = vmatpush1.bf16.msra.mxu0 %v3739
    %5661 = vmatprep.subr.bf16.mxu0 %v3736
    %5662 = vmatpush1.bf16.msra.mxu0 %v3735
    %5663 = vmatprep.subr.bf16.mxu0 %v3732
    %5664 = vmatpush1.bf16.msra.mxu0 %v3731
    %5665 = vmatprep.subr.bf16.mxu0 %v3728
    %5666 = vmatpush1.bf16.msra.mxu0 %v3727
    %5667 = vmatprep.subr.bf16.mxu0 %v3788
    %5668 = vmatpush2.bf16.msra.mxu0 %v3787
    %5669 = vmatprep.subr.bf16.mxu0 %v3784
    %5670 = vmatpush2.bf16.msra.mxu0 %v3783
    %5671 = vmatprep.subr.bf16.mxu0 %v3780
    %5672 = vmatpush2.bf16.msra.mxu0 %v3779
    %5673 = vmatprep.subr.bf16.mxu0 %v3776
    %5674 = vmatpush2.bf16.msra.mxu0 %v3775
    %5675 = vmatprep.subr.bf16.mxu0 %v3772
    %5676 = vmatpush2.bf16.msra.mxu0 %v3771
    %5677 = vmatprep.subr.bf16.mxu0 %v3768
    %5678 = vmatpush2.bf16.msra.mxu0 %v3767
    %5679 = vmatprep.subr.bf16.mxu0 %v3764
    %5680 = vmatpush2.bf16.msra.mxu0 %v3763
    %5681 = vmatprep.subr.bf16.mxu0 %v3760
    %5682 = vmatpush2.bf16.msra.mxu0 %v3759
    %5683 = vmatprep.mubr.bf16.mxu0 %v1002
    %5684 = vmatmul.mubr.bf16.gmra.mxu0 %v1001
    %v5685 = vpop.f32.mrf.mxu0
    %v5686 = vadd.f32 %v5643, %v5685
    %v5687 = vpop.f32.mrf.mxu0
    %v5688 = vadd.f32 %v5645, %v5687
    %v5689 = vpop.f32.mrf.mxu0
    %v5690 = vadd.f32 %v5647, %v5689
    %v5691 = vpop.f32.mrf.mxu0
    %v5692 = vadd.f32 %v5649, %v5691
    %5693 = vdwg.mxu0
    %5694 = vmatprep.subr.bf16.mxu0 %v3820
    %5695 = vmatpush1.bf16.msra.mxu0 %v3819
    %5696 = vmatprep.subr.bf16.mxu0 %v3816
    %5697 = vmatpush1.bf16.msra.mxu0 %v3815
    %5698 = vmatprep.subr.bf16.mxu0 %v3812
    %5699 = vmatpush1.bf16.msra.mxu0 %v3811
    %5700 = vmatprep.subr.bf16.mxu0 %v3808
    %5701 = vmatpush1.bf16.msra.mxu0 %v3807
    %5702 = vmatprep.subr.bf16.mxu0 %v3804
    %5703 = vmatpush1.bf16.msra.mxu0 %v3803
    %5704 = vmatprep.subr.bf16.mxu0 %v3800
    %5705 = vmatpush1.bf16.msra.mxu0 %v3799
    %5706 = vmatprep.subr.bf16.mxu0 %v3796
    %5707 = vmatpush1.bf16.msra.mxu0 %v3795
    %5708 = vmatprep.subr.bf16.mxu0 %v3792
    %5709 = vmatpush1.bf16.msra.mxu0 %v3791
    %5710 = vmatprep.subr.bf16.mxu0 %v3852
    %5711 = vmatpush2.bf16.msra.mxu0 %v3851
    %5712 = vmatprep.subr.bf16.mxu0 %v3848
    %5713 = vmatpush2.bf16.msra.mxu0 %v3847
    %5714 = vmatprep.subr.bf16.mxu0 %v3844
    %5715 = vmatpush2.bf16.msra.mxu0 %v3843
    %5716 = vmatprep.subr.bf16.mxu0 %v3840
    %5717 = vmatpush2.bf16.msra.mxu0 %v3839
    %5718 = vmatprep.subr.bf16.mxu0 %v3836
    %5719 = vmatpush2.bf16.msra.mxu0 %v3835
    %5720 = vmatprep.subr.bf16.mxu0 %v3832
    %5721 = vmatpush2.bf16.msra.mxu0 %v3831
    %5722 = vmatprep.subr.bf16.mxu0 %v3828
    %5723 = vmatpush2.bf16.msra.mxu0 %v3827
    %5724 = vmatprep.subr.bf16.mxu0 %v3824
    %5725 = vmatpush2.bf16.msra.mxu0 %v3823
    %5726 = vmatprep.mubr.bf16.mxu0 %v1004
    %5727 = vmatmul.mubr.bf16.gmra.mxu0 %v1003
    %v5728 = vpop.f32.mrf.mxu0
    %v5729 = vadd.f32 %v5686, %v5728
    %v5730 = vpop.f32.mrf.mxu0
    %v5731 = vadd.f32 %v5688, %v5730
    %v5732 = vpop.f32.mrf.mxu0
    %v5733 = vadd.f32 %v5690, %v5732
    %v5734 = vpop.f32.mrf.mxu0
    %v5735 = vadd.f32 %v5692, %v5734
    %5736 = vdwg.mxu0
    %5737 = vmatprep.subr.bf16.mxu0 %v3884
    %5738 = vmatpush1.bf16.msra.mxu0 %v3883
    %5739 = vmatprep.subr.bf16.mxu0 %v3880
    %5740 = vmatpush1.bf16.msra.mxu0 %v3879
    %5741 = vmatprep.subr.bf16.mxu0 %v3876
    %5742 = vmatpush1.bf16.msra.mxu0 %v3875
    %5743 = vmatprep.subr.bf16.mxu0 %v3872
    %5744 = vmatpush1.bf16.msra.mxu0 %v3871
    %5745 = vmatprep.subr.bf16.mxu0 %v3868
    %5746 = vmatpush1.bf16.msra.mxu0 %v3867
    %5747 = vmatprep.subr.bf16.mxu0 %v3864
    %5748 = vmatpush1.bf16.msra.mxu0 %v3863
    %5749 = vmatprep.subr.bf16.mxu0 %v3860
    %5750 = vmatpush1.bf16.msra.mxu0 %v3859
    %5751 = vmatprep.subr.bf16.mxu0 %v3856
    %5752 = vmatpush1.bf16.msra.mxu0 %v3855
    %5753 = vmatprep.subr.bf16.mxu0 %v3916
    %5754 = vmatpush2.bf16.msra.mxu0 %v3915
    %5755 = vmatprep.subr.bf16.mxu0 %v3912
    %5756 = vmatpush2.bf16.msra.mxu0 %v3911
    %5757 = vmatprep.subr.bf16.mxu0 %v3908
    %5758 = vmatpush2.bf16.msra.mxu0 %v3907
    %5759 = vmatprep.subr.bf16.mxu0 %v3904
    %5760 = vmatpush2.bf16.msra.mxu0 %v3903
    %5761 = vmatprep.subr.bf16.mxu0 %v3900
    %5762 = vmatpush2.bf16.msra.mxu0 %v3899
    %5763 = vmatprep.subr.bf16.mxu0 %v3896
    %5764 = vmatpush2.bf16.msra.mxu0 %v3895
    %5765 = vmatprep.subr.bf16.mxu0 %v3892
    %5766 = vmatpush2.bf16.msra.mxu0 %v3891
    %5767 = vmatprep.subr.bf16.mxu0 %v3888
    %5768 = vmatpush2.bf16.msra.mxu0 %v3887
    %5769 = vmatprep.mubr.bf16.mxu0 %v1006
    %5770 = vmatmul.mubr.bf16.gmra.mxu0 %v1005
    %v5771 = vpop.f32.mrf.mxu0
    %v5772 = vadd.f32 %v5729, %v5771
    %v5773 = vpop.f32.mrf.mxu0
    %v5774 = vadd.f32 %v5731, %v5773
    %v5775 = vpop.f32.mrf.mxu0
    %v5776 = vadd.f32 %v5733, %v5775
    %v5777 = vpop.f32.mrf.mxu0
    %v5778 = vadd.f32 %v5735, %v5777
    %5779 = vdwg.mxu0
    %5780 = vmatprep.subr.bf16.mxu0 %v3948
    %5781 = vmatpush1.bf16.msra.mxu0 %v3947
    %5782 = vmatprep.subr.bf16.mxu0 %v3944
    %5783 = vmatpush1.bf16.msra.mxu0 %v3943
    %5784 = vmatprep.subr.bf16.mxu0 %v3940
    %5785 = vmatpush1.bf16.msra.mxu0 %v3939
    %5786 = vmatprep.subr.bf16.mxu0 %v3936
    %5787 = vmatpush1.bf16.msra.mxu0 %v3935
    %5788 = vmatprep.subr.bf16.mxu0 %v3932
    %5789 = vmatpush1.bf16.msra.mxu0 %v3931
    %5790 = vmatprep.subr.bf16.mxu0 %v3928
    %5791 = vmatpush1.bf16.msra.mxu0 %v3927
    %5792 = vmatprep.subr.bf16.mxu0 %v3924
    %5793 = vmatpush1.bf16.msra.mxu0 %v3923
    %5794 = vmatprep.subr.bf16.mxu0 %v3920
    %5795 = vmatpush1.bf16.msra.mxu0 %v3919
    %5796 = vmatprep.subr.bf16.mxu0 %v3980
    %5797 = vmatpush2.bf16.msra.mxu0 %v3979
    %5798 = vmatprep.subr.bf16.mxu0 %v3976
    %5799 = vmatpush2.bf16.msra.mxu0 %v3975
    %5800 = vmatprep.subr.bf16.mxu0 %v3972
    %5801 = vmatpush2.bf16.msra.mxu0 %v3971
    %5802 = vmatprep.subr.bf16.mxu0 %v3968
    %5803 = vmatpush2.bf16.msra.mxu0 %v3967
    %5804 = vmatprep.subr.bf16.mxu0 %v3964
    %5805 = vmatpush2.bf16.msra.mxu0 %v3963
    %5806 = vmatprep.subr.bf16.mxu0 %v3960
    %5807 = vmatpush2.bf16.msra.mxu0 %v3959
    %5808 = vmatprep.subr.bf16.mxu0 %v3956
    %5809 = vmatpush2.bf16.msra.mxu0 %v3955
    %5810 = vmatprep.subr.bf16.mxu0 %v3952
    %5811 = vmatpush2.bf16.msra.mxu0 %v3951
    %5812 = vmatprep.mubr.bf16.mxu0 %v1008
    %5813 = vmatmul.mubr.bf16.gmra.mxu0 %v1007
    %v5814 = vpop.f32.mrf.mxu0
    %v5815 = vadd.f32 %v5772, %v5814
    %v5816 = vpop.f32.mrf.mxu0
    %v5817 = vadd.f32 %v5774, %v5816
    %v5818 = vpop.f32.mrf.mxu0
    %v5819 = vadd.f32 %v5776, %v5818
    %v5820 = vpop.f32.mrf.mxu0
    %v5821 = vadd.f32 %v5778, %v5820
    %5822 = vdwg.mxu0
    %5823 = vmatprep.subr.bf16.mxu0 %v4012
    %5824 = vmatpush1.bf16.msra.mxu0 %v4011
    %5825 = vmatprep.subr.bf16.mxu0 %v4008
    %5826 = vmatpush1.bf16.msra.mxu0 %v4007
    %5827 = vmatprep.subr.bf16.mxu0 %v4004
    %5828 = vmatpush1.bf16.msra.mxu0 %v4003
    %5829 = vmatprep.subr.bf16.mxu0 %v4000
    %5830 = vmatpush1.bf16.msra.mxu0 %v3999
    %5831 = vmatprep.subr.bf16.mxu0 %v3996
    %5832 = vmatpush1.bf16.msra.mxu0 %v3995
    %5833 = vmatprep.subr.bf16.mxu0 %v3992
    %5834 = vmatpush1.bf16.msra.mxu0 %v3991
    %5835 = vmatprep.subr.bf16.mxu0 %v3988
    %5836 = vmatpush1.bf16.msra.mxu0 %v3987
    %5837 = vmatprep.subr.bf16.mxu0 %v3984
    %5838 = vmatpush1.bf16.msra.mxu0 %v3983
    %5839 = vmatprep.subr.bf16.mxu0 %v4044
    %5840 = vmatpush2.bf16.msra.mxu0 %v4043
    %5841 = vmatprep.subr.bf16.mxu0 %v4040
    %5842 = vmatpush2.bf16.msra.mxu0 %v4039
    %5843 = vmatprep.subr.bf16.mxu0 %v4036
    %5844 = vmatpush2.bf16.msra.mxu0 %v4035
    %5845 = vmatprep.subr.bf16.mxu0 %v4032
    %5846 = vmatpush2.bf16.msra.mxu0 %v4031
    %5847 = vmatprep.subr.bf16.mxu0 %v4028
    %5848 = vmatpush2.bf16.msra.mxu0 %v4027
    %5849 = vmatprep.subr.bf16.mxu0 %v4024
    %5850 = vmatpush2.bf16.msra.mxu0 %v4023
    %5851 = vmatprep.subr.bf16.mxu0 %v4020
    %5852 = vmatpush2.bf16.msra.mxu0 %v4019
    %5853 = vmatprep.subr.bf16.mxu0 %v4016
    %5854 = vmatpush2.bf16.msra.mxu0 %v4015
    %5855 = vmatprep.mubr.bf16.mxu0 %v1010
    %5856 = vmatmul.mubr.bf16.gmra.mxu0 %v1009
    %v5857 = vpop.f32.mrf.mxu0
    %v5858 = vadd.f32 %v5815, %v5857
    %v5859 = vpop.f32.mrf.mxu0
    %v5860 = vadd.f32 %v5817, %v5859
    %v5861 = vpop.f32.mrf.mxu0
    %v5862 = vadd.f32 %v5819, %v5861
    %v5863 = vpop.f32.mrf.mxu0
    %v5864 = vadd.f32 %v5821, %v5863
    %5865 = vdwg.mxu0
    %5866 = vmatprep.subr.bf16.mxu0 %v4076
    %5867 = vmatpush1.bf16.msra.mxu0 %v4075
    %5868 = vmatprep.subr.bf16.mxu0 %v4072
    %5869 = vmatpush1.bf16.msra.mxu0 %v4071
    %5870 = vmatprep.subr.bf16.mxu0 %v4068
    %5871 = vmatpush1.bf16.msra.mxu0 %v4067
    %5872 = vmatprep.subr.bf16.mxu0 %v4064
    %5873 = vmatpush1.bf16.msra.mxu0 %v4063
    %5874 = vmatprep.subr.bf16.mxu0 %v4060
    %5875 = vmatpush1.bf16.msra.mxu0 %v4059
    %5876 = vmatprep.subr.bf16.mxu0 %v4056
    %5877 = vmatpush1.bf16.msra.mxu0 %v4055
    %5878 = vmatprep.subr.bf16.mxu0 %v4052
    %5879 = vmatpush1.bf16.msra.mxu0 %v4051
    %5880 = vmatprep.subr.bf16.mxu0 %v4048
    %5881 = vmatpush1.bf16.msra.mxu0 %v4047
    %5882 = vmatprep.subr.bf16.mxu0 %v4108
    %5883 = vmatpush2.bf16.msra.mxu0 %v4107
    %5884 = vmatprep.subr.bf16.mxu0 %v4104
    %5885 = vmatpush2.bf16.msra.mxu0 %v4103
    %5886 = vmatprep.subr.bf16.mxu0 %v4100
    %5887 = vmatpush2.bf16.msra.mxu0 %v4099
    %5888 = vmatprep.subr.bf16.mxu0 %v4096
    %5889 = vmatpush2.bf16.msra.mxu0 %v4095
    %5890 = vmatprep.subr.bf16.mxu0 %v4092
    %5891 = vmatpush2.bf16.msra.mxu0 %v4091
    %5892 = vmatprep.subr.bf16.mxu0 %v4088
    %5893 = vmatpush2.bf16.msra.mxu0 %v4087
    %5894 = vmatprep.subr.bf16.mxu0 %v4084
    %5895 = vmatpush2.bf16.msra.mxu0 %v4083
    %5896 = vmatprep.subr.bf16.mxu0 %v4080
    %5897 = vmatpush2.bf16.msra.mxu0 %v4079
    %5898 = vmatprep.mubr.bf16.mxu0 %v1012
    %5899 = vmatmul.mubr.bf16.gmra.mxu0 %v1011
    %v5900 = vpop.f32.mrf.mxu0
    %v5901 = vadd.f32 %v5858, %v5900
    %v5902 = vpop.f32.mrf.mxu0
    %v5903 = vadd.f32 %v5860, %v5902
    %v5904 = vpop.f32.mrf.mxu0
    %v5905 = vadd.f32 %v5862, %v5904
    %v5906 = vpop.f32.mrf.mxu0
    %v5907 = vadd.f32 %v5864, %v5906
    %5908 = vdwg.mxu0
    %v5909 = vmax.f32 %v5385, 0.0
    %v5910 = vmax.f32 %v5387, 0.0
    %v5911 = vmax.f32 %v5901, 0.0
    %v5912 = vmax.f32 %v5903, 0.0
    %v5913 = vmax.f32 %v5389, 0.0
    %v5914 = vmax.f32 %v5391, 0.0
    %v5915 = vmax.f32 %v5905, 0.0
    %v5916 = vmax.f32 %v5907, 0.0
    %v5917 = vpack.c.bf16 %v5913, %v5909
    %v5918 = vpack.c.bf16 %v5914, %v5910
    %v5919 = vpack.c.bf16 %v5915, %v5911
    %v5920 = vpack.c.bf16 %v5916, %v5912
    %v5921 = vld [vmem:[#allocation6] sm:$0xff]
    %v5922 = vld [vmem:[#allocation6 + $0x8] sm:$0xff]
    %v5923 = vld [vmem:[#allocation6 + $0x10] sm:$0xff]
    %v5924 = vld [vmem:[#allocation6 + $0x18] sm:$0xff]
    %v5925 = vld [vmem:[#allocation6 + $0x20] sm:$0xff]
    %v5926 = vld [vmem:[#allocation6 + $0x28] sm:$0xff]
    %v5927 = vld [vmem:[#allocation6 + $0x30] sm:$0xff]
    %v5928 = vld [vmem:[#allocation6 + $0x38] sm:$0xff]
    %v5929 = vld [vmem:[#allocation6 + $0x40] sm:$0xff]
    %v5930 = vld [vmem:[#allocation6 + $0x48] sm:$0xff]
    %v5931 = vld [vmem:[#allocation6 + $0x50] sm:$0xff]
    %v5932 = vld [vmem:[#allocation6 + $0x58] sm:$0xff]
    %v5933 = vld [vmem:[#allocation6 + $0x60] sm:$0xff]
    %v5934 = vld [vmem:[#allocation6 + $0x68] sm:$0xff]
    %v5935 = vld [vmem:[#allocation6 + $0x70] sm:$0xff]
    %v5936 = vld [vmem:[#allocation6 + $0x78] sm:$0xff]
    %v5937 = vld [vmem:[#allocation6 + $0x80] sm:$0xff]
    %v5938 = vld [vmem:[#allocation6 + $0x88] sm:$0xff]
    %v5939 = vld [vmem:[#allocation6 + $0x90] sm:$0xff]
    %v5940 = vld [vmem:[#allocation6 + $0x98] sm:$0xff]
    %v5941 = vld [vmem:[#allocation6 + $0xa0] sm:$0xff]
    %v5942 = vld [vmem:[#allocation6 + $0xa8] sm:$0xff]
    %v5943 = vld [vmem:[#allocation6 + $0xb0] sm:$0xff]
    %v5944 = vld [vmem:[#allocation6 + $0xb8] sm:$0xff]
    %v5945 = vld [vmem:[#allocation6 + $0xc0] sm:$0xff]
    %v5946 = vld [vmem:[#allocation6 + $0xc8] sm:$0xff]
    %v5947 = vld [vmem:[#allocation6 + $0xd0] sm:$0xff]
    %v5948 = vld [vmem:[#allocation6 + $0xd8] sm:$0xff]
    %v5949 = vld [vmem:[#allocation6 + $0xe0] sm:$0xff]
    %v5950 = vld [vmem:[#allocation6 + $0xe8] sm:$0xff]
    %v5951 = vld [vmem:[#allocation6 + $0xf0] sm:$0xff]
    %v5952 = vld [vmem:[#allocation6 + $0xf8] sm:$0xff]
    %v5953 = vld [vmem:[#allocation6 + $0x100] sm:$0xff]
    %v5954 = vld [vmem:[#allocation6 + $0x108] sm:$0xff]
    %v5955 = vld [vmem:[#allocation6 + $0x110] sm:$0xff]
    %v5956 = vld [vmem:[#allocation6 + $0x118] sm:$0xff]
    %v5957 = vld [vmem:[#allocation6 + $0x120] sm:$0xff]
    %v5958 = vld [vmem:[#allocation6 + $0x128] sm:$0xff]
    %v5959 = vld [vmem:[#allocation6 + $0x130] sm:$0xff]
    %v5960 = vld [vmem:[#allocation6 + $0x138] sm:$0xff]
    %v5961 = vld [vmem:[#allocation6 + $0x140] sm:$0xff]
    %v5962 = vld [vmem:[#allocation6 + $0x148] sm:$0xff]
    %v5963 = vld [vmem:[#allocation6 + $0x150] sm:$0xff]
    %v5964 = vld [vmem:[#allocation6 + $0x158] sm:$0xff]
    %v5965 = vld [vmem:[#allocation6 + $0x160] sm:$0xff]
    %v5966 = vld [vmem:[#allocation6 + $0x168] sm:$0xff]
    %v5967 = vld [vmem:[#allocation6 + $0x170] sm:$0xff]
    %v5968 = vld [vmem:[#allocation6 + $0x178] sm:$0xff]
    %v5969 = vld [vmem:[#allocation6 + $0x180] sm:$0xff]
    %v5970 = vld [vmem:[#allocation6 + $0x188] sm:$0xff]
    %v5971 = vld [vmem:[#allocation6 + $0x190] sm:$0xff]
    %v5972 = vld [vmem:[#allocation6 + $0x198] sm:$0xff]
    %v5973 = vld [vmem:[#allocation6 + $0x1a0] sm:$0xff]
    %v5974 = vld [vmem:[#allocation6 + $0x1a8] sm:$0xff]
    %v5975 = vld [vmem:[#allocation6 + $0x1b0] sm:$0xff]
    %v5976 = vld [vmem:[#allocation6 + $0x1b8] sm:$0xff]
    %v5977 = vld [vmem:[#allocation6 + $0x1c0] sm:$0xff]
    %v5978 = vld [vmem:[#allocation6 + $0x1c8] sm:$0xff]
    %v5979 = vld [vmem:[#allocation6 + $0x1d0] sm:$0xff]
    %v5980 = vld [vmem:[#allocation6 + $0x1d8] sm:$0xff]
    %v5981 = vld [vmem:[#allocation6 + $0x1e0] sm:$0xff]
    %v5982 = vld [vmem:[#allocation6 + $0x1e8] sm:$0xff]
    %v5983 = vld [vmem:[#allocation6 + $0x1f0] sm:$0xff]
    %v5984 = vld [vmem:[#allocation6 + $0x1f8] sm:$0xff]
    %v5985 = vld [vmem:[#allocation7] sm:$0x3]
    %v5987 = vlaneseq
    %v5988 = vshrl.u32 %v5987, 7
    %v5989 = vsub.s32 0, %v5988
    %v5990 = vrot.slane %v5985, %v5989
    %v5991 = vlaneseq
    %v5992 = vshrl.u32 %v5991, 7
    %v5993 = vsub.s32 1, %v5992
    %v5994 = vrot.slane %v5985, %v5993
    %v6061 = vunpack.c.l.b16 %v5921
    %v6062 = vunpack.c.h.b16 %v5921
    %v6063 = vunpack.c.l.b16 %v5922
    %v6064 = vunpack.c.h.b16 %v5922
    %v6065 = vunpack.c.l.b16 %v5923
    %v6066 = vunpack.c.h.b16 %v5923
    %v6067 = vunpack.c.l.b16 %v5924
    %v6068 = vunpack.c.h.b16 %v5924
    %v6069 = vunpack.c.l.b16 %v5925
    %v6070 = vunpack.c.h.b16 %v5925
    %v6071 = vunpack.c.l.b16 %v5926
    %v6072 = vunpack.c.h.b16 %v5926
    %v6073 = vunpack.c.l.b16 %v5927
    %v6074 = vunpack.c.h.b16 %v5927
    %v6075 = vunpack.c.l.b16 %v5928
    %v6076 = vunpack.c.h.b16 %v5928
    %v6077 = vunpack.c.l.b16 %v5929
    %v6078 = vunpack.c.h.b16 %v5929
    %v6079 = vunpack.c.l.b16 %v5930
    %v6080 = vunpack.c.h.b16 %v5930
    %v6081 = vunpack.c.l.b16 %v5931
    %v6082 = vunpack.c.h.b16 %v5931
    %v6083 = vunpack.c.l.b16 %v5932
    %v6084 = vunpack.c.h.b16 %v5932
    %v6085 = vunpack.c.l.b16 %v5933
    %v6086 = vunpack.c.h.b16 %v5933
    %v6087 = vunpack.c.l.b16 %v5934
    %v6088 = vunpack.c.h.b16 %v5934
    %v6089 = vunpack.c.l.b16 %v5935
    %v6090 = vunpack.c.h.b16 %v5935
    %v6091 = vunpack.c.l.b16 %v5936
    %v6092 = vunpack.c.h.b16 %v5936
    %v6093 = vunpack.c.l.b16 %v5937
    %v6094 = vunpack.c.h.b16 %v5937
    %v6095 = vunpack.c.l.b16 %v5938
    %v6096 = vunpack.c.h.b16 %v5938
    %v6097 = vunpack.c.l.b16 %v5939
    %v6098 = vunpack.c.h.b16 %v5939
    %v6099 = vunpack.c.l.b16 %v5940
    %v6100 = vunpack.c.h.b16 %v5940
    %v6101 = vunpack.c.l.b16 %v5941
    %v6102 = vunpack.c.h.b16 %v5941
    %v6103 = vunpack.c.l.b16 %v5942
    %v6104 = vunpack.c.h.b16 %v5942
    %v6105 = vunpack.c.l.b16 %v5943
    %v6106 = vunpack.c.h.b16 %v5943
    %v6107 = vunpack.c.l.b16 %v5944
    %v6108 = vunpack.c.h.b16 %v5944
    %v6109 = vunpack.c.l.b16 %v5945
    %v6110 = vunpack.c.h.b16 %v5945
    %v6111 = vunpack.c.l.b16 %v5946
    %v6112 = vunpack.c.h.b16 %v5946
    %v6113 = vunpack.c.l.b16 %v5947
    %v6114 = vunpack.c.h.b16 %v5947
    %v6115 = vunpack.c.l.b16 %v5948
    %v6116 = vunpack.c.h.b16 %v5948
    %v6117 = vunpack.c.l.b16 %v5949
    %v6118 = vunpack.c.h.b16 %v5949
    %v6119 = vunpack.c.l.b16 %v5950
    %v6120 = vunpack.c.h.b16 %v5950
    %v6121 = vunpack.c.l.b16 %v5951
    %v6122 = vunpack.c.h.b16 %v5951
    %v6123 = vunpack.c.l.b16 %v5952
    %v6124 = vunpack.c.h.b16 %v5952
    %v6125 = vunpack.c.l.b16 %v5953
    %v6126 = vunpack.c.h.b16 %v5953
    %v6127 = vunpack.c.l.b16 %v5954
    %v6128 = vunpack.c.h.b16 %v5954
    %v6129 = vunpack.c.l.b16 %v5955
    %v6130 = vunpack.c.h.b16 %v5955
    %v6131 = vunpack.c.l.b16 %v5956
    %v6132 = vunpack.c.h.b16 %v5956
    %v6133 = vunpack.c.l.b16 %v5957
    %v6134 = vunpack.c.h.b16 %v5957
    %v6135 = vunpack.c.l.b16 %v5958
    %v6136 = vunpack.c.h.b16 %v5958
    %v6137 = vunpack.c.l.b16 %v5959
    %v6138 = vunpack.c.h.b16 %v5959
    %v6139 = vunpack.c.l.b16 %v5960
    %v6140 = vunpack.c.h.b16 %v5960
    %v6141 = vunpack.c.l.b16 %v5961
    %v6142 = vunpack.c.h.b16 %v5961
    %v6143 = vunpack.c.l.b16 %v5962
    %v6144 = vunpack.c.h.b16 %v5962
    %v6145 = vunpack.c.l.b16 %v5963
    %v6146 = vunpack.c.h.b16 %v5963
    %v6147 = vunpack.c.l.b16 %v5964
    %v6148 = vunpack.c.h.b16 %v5964
    %v6149 = vunpack.c.l.b16 %v5965
    %v6150 = vunpack.c.h.b16 %v5965
    %v6151 = vunpack.c.l.b16 %v5966
    %v6152 = vunpack.c.h.b16 %v5966
    %v6153 = vunpack.c.l.b16 %v5967
    %v6154 = vunpack.c.h.b16 %v5967
    %v6155 = vunpack.c.l.b16 %v5968
    %v6156 = vunpack.c.h.b16 %v5968
    %v6157 = vunpack.c.l.b16 %v5969
    %v6158 = vunpack.c.h.b16 %v5969
    %v6159 = vunpack.c.l.b16 %v5970
    %v6160 = vunpack.c.h.b16 %v5970
    %v6161 = vunpack.c.l.b16 %v5971
    %v6162 = vunpack.c.h.b16 %v5971
    %v6163 = vunpack.c.l.b16 %v5972
    %v6164 = vunpack.c.h.b16 %v5972
    %v6165 = vunpack.c.l.b16 %v5973
    %v6166 = vunpack.c.h.b16 %v5973
    %v6167 = vunpack.c.l.b16 %v5974
    %v6168 = vunpack.c.h.b16 %v5974
    %v6169 = vunpack.c.l.b16 %v5975
    %v6170 = vunpack.c.h.b16 %v5975
    %v6171 = vunpack.c.l.b16 %v5976
    %v6172 = vunpack.c.h.b16 %v5976
    %v6173 = vunpack.c.l.b16 %v5977
    %v6174 = vunpack.c.h.b16 %v5977
    %v6175 = vunpack.c.l.b16 %v5978
    %v6176 = vunpack.c.h.b16 %v5978
    %v6177 = vunpack.c.l.b16 %v5979
    %v6178 = vunpack.c.h.b16 %v5979
    %v6179 = vunpack.c.l.b16 %v5980
    %v6180 = vunpack.c.h.b16 %v5980
    %v6181 = vunpack.c.l.b16 %v5981
    %v6182 = vunpack.c.h.b16 %v5981
    %v6183 = vunpack.c.l.b16 %v5982
    %v6184 = vunpack.c.h.b16 %v5982
    %v6185 = vunpack.c.l.b16 %v5983
    %v6186 = vunpack.c.h.b16 %v5983
    %v6187 = vunpack.c.l.b16 %v5984
    %v6188 = vunpack.c.h.b16 %v5984
    %v6189 = vpack.c.b16 %v6063, %v6061
    %v6190 = vpack.c.b16 %v6064, %v6062
    %v6191 = vpack.c.b16 %v6067, %v6065
    %v6192 = vpack.c.b16 %v6068, %v6066
    %v6193 = vpack.c.b16 %v6071, %v6069
    %v6194 = vpack.c.b16 %v6072, %v6070
    %v6195 = vpack.c.b16 %v6075, %v6073
    %v6196 = vpack.c.b16 %v6076, %v6074
    %v6197 = vpack.c.b16 %v6079, %v6077
    %v6198 = vpack.c.b16 %v6080, %v6078
    %v6199 = vpack.c.b16 %v6083, %v6081
    %v6200 = vpack.c.b16 %v6084, %v6082
    %v6201 = vpack.c.b16 %v6087, %v6085
    %v6202 = vpack.c.b16 %v6088, %v6086
    %v6203 = vpack.c.b16 %v6091, %v6089
    %v6204 = vpack.c.b16 %v6092, %v6090
    %v6205 = vpack.c.b16 %v6095, %v6093
    %v6206 = vpack.c.b16 %v6096, %v6094
    %v6207 = vpack.c.b16 %v6099, %v6097
    %v6208 = vpack.c.b16 %v6100, %v6098
    %v6209 = vpack.c.b16 %v6103, %v6101
    %v6210 = vpack.c.b16 %v6104, %v6102
    %v6211 = vpack.c.b16 %v6107, %v6105
    %v6212 = vpack.c.b16 %v6108, %v6106
    %v6213 = vpack.c.b16 %v6111, %v6109
    %v6214 = vpack.c.b16 %v6112, %v6110
    %v6215 = vpack.c.b16 %v6115, %v6113
    %v6216 = vpack.c.b16 %v6116, %v6114
    %v6217 = vpack.c.b16 %v6119, %v6117
    %v6218 = vpack.c.b16 %v6120, %v6118
    %v6219 = vpack.c.b16 %v6123, %v6121
    %v6220 = vpack.c.b16 %v6124, %v6122
    %v6221 = vpack.c.b16 %v6127, %v6125
    %v6222 = vpack.c.b16 %v6128, %v6126
    %v6223 = vpack.c.b16 %v6131, %v6129
    %v6224 = vpack.c.b16 %v6132, %v6130
    %v6225 = vpack.c.b16 %v6135, %v6133
    %v6226 = vpack.c.b16 %v6136, %v6134
    %v6227 = vpack.c.b16 %v6139, %v6137
    %v6228 = vpack.c.b16 %v6140, %v6138
    %v6229 = vpack.c.b16 %v6143, %v6141
    %v6230 = vpack.c.b16 %v6144, %v6142
    %v6231 = vpack.c.b16 %v6147, %v6145
    %v6232 = vpack.c.b16 %v6148, %v6146
    %v6233 = vpack.c.b16 %v6151, %v6149
    %v6234 = vpack.c.b16 %v6152, %v6150
    %v6235 = vpack.c.b16 %v6155, %v6153
    %v6236 = vpack.c.b16 %v6156, %v6154
    %v6237 = vpack.c.b16 %v6159, %v6157
    %v6238 = vpack.c.b16 %v6160, %v6158
    %v6239 = vpack.c.b16 %v6163, %v6161
    %v6240 = vpack.c.b16 %v6164, %v6162
    %v6241 = vpack.c.b16 %v6167, %v6165
    %v6242 = vpack.c.b16 %v6168, %v6166
    %v6243 = vpack.c.b16 %v6171, %v6169
    %v6244 = vpack.c.b16 %v6172, %v6170
    %v6245 = vpack.c.b16 %v6175, %v6173
    %v6246 = vpack.c.b16 %v6176, %v6174
    %v6247 = vpack.c.b16 %v6179, %v6177
    %v6248 = vpack.c.b16 %v6180, %v6178
    %v6249 = vpack.c.b16 %v6183, %v6181
    %v6250 = vpack.c.b16 %v6184, %v6182
    %v6251 = vpack.c.b16 %v6187, %v6185
    %v6252 = vpack.c.b16 %v6188, %v6186
    %6317 = vmatprep.subr.bf16.mxu0 %v6204
    %6318 = vmatpush1.bf16.msra.mxu0 %v6203
    %6319 = vmatprep.subr.bf16.mxu0 %v6202
    %6320 = vmatpush1.bf16.msra.mxu0 %v6201
    %6321 = vmatprep.subr.bf16.mxu0 %v6200
    %6322 = vmatpush1.bf16.msra.mxu0 %v6199
    %6323 = vmatprep.subr.bf16.mxu0 %v6198
    %6324 = vmatpush1.bf16.msra.mxu0 %v6197
    %6325 = vmatprep.subr.bf16.mxu0 %v6196
    %6326 = vmatpush1.bf16.msra.mxu0 %v6195
    %6327 = vmatprep.subr.bf16.mxu0 %v6194
    %6328 = vmatpush1.bf16.msra.mxu0 %v6193
    %6329 = vmatprep.subr.bf16.mxu0 %v6192
    %6330 = vmatpush1.bf16.msra.mxu0 %v6191
    %6331 = vmatprep.subr.bf16.mxu0 %v6190
    %6332 = vmatpush1.bf16.msra.mxu0 %v6189
    %6333 = vmatprep.subr.bf16.mxu0 %v6220
    %6334 = vmatpush2.bf16.msra.mxu0 %v6219
    %6335 = vmatprep.subr.bf16.mxu0 %v6218
    %6336 = vmatpush2.bf16.msra.mxu0 %v6217
    %6337 = vmatprep.subr.bf16.mxu0 %v6216
    %6338 = vmatpush2.bf16.msra.mxu0 %v6215
    %6339 = vmatprep.subr.bf16.mxu0 %v6214
    %6340 = vmatpush2.bf16.msra.mxu0 %v6213
    %6341 = vmatprep.subr.bf16.mxu0 %v6212
    %6342 = vmatpush2.bf16.msra.mxu0 %v6211
    %6343 = vmatprep.subr.bf16.mxu0 %v6210
    %6344 = vmatpush2.bf16.msra.mxu0 %v6209
    %6345 = vmatprep.subr.bf16.mxu0 %v6208
    %6346 = vmatpush2.bf16.msra.mxu0 %v6207
    %6347 = vmatprep.subr.bf16.mxu0 %v6206
    %6348 = vmatpush2.bf16.msra.mxu0 %v6205
    %6349 = vmatprep.mubr.bf16.mxu0 %v5918
    %6350 = vmatmul.mubr.bf16.gmra.mxu0 %v5917
    %v6351 = vpop.f32.mrf.mxu0
    %v6352 = vadd.f32 %v5990, %v6351
    %v6353 = vpop.f32.mrf.mxu0
    %v6354 = vadd.f32 %v5994, %v6353
    %v6355 = vpop.f32.mrf.mxu0
    %v6356 = vadd.f32 %v5990, %v6355
    %v6357 = vpop.f32.mrf.mxu0
    %v6358 = vadd.f32 %v5994, %v6357
    %6359 = vdwg.mxu0
    %6360 = vmatprep.subr.bf16.mxu0 %v6236
    %6361 = vmatpush1.bf16.msra.mxu0 %v6235
    %6362 = vmatprep.subr.bf16.mxu0 %v6234
    %6363 = vmatpush1.bf16.msra.mxu0 %v6233
    %6364 = vmatprep.subr.bf16.mxu0 %v6232
    %6365 = vmatpush1.bf16.msra.mxu0 %v6231
    %6366 = vmatprep.subr.bf16.mxu0 %v6230
    %6367 = vmatpush1.bf16.msra.mxu0 %v6229
    %6368 = vmatprep.subr.bf16.mxu0 %v6228
    %6369 = vmatpush1.bf16.msra.mxu0 %v6227
    %6370 = vmatprep.subr.bf16.mxu0 %v6226
    %6371 = vmatpush1.bf16.msra.mxu0 %v6225
    %6372 = vmatprep.subr.bf16.mxu0 %v6224
    %6373 = vmatpush1.bf16.msra.mxu0 %v6223
    %6374 = vmatprep.subr.bf16.mxu0 %v6222
    %6375 = vmatpush1.bf16.msra.mxu0 %v6221
    %6376 = vmatprep.subr.bf16.mxu0 %v6252
    %6377 = vmatpush2.bf16.msra.mxu0 %v6251
    %6378 = vmatprep.subr.bf16.mxu0 %v6250
    %6379 = vmatpush2.bf16.msra.mxu0 %v6249
    %6380 = vmatprep.subr.bf16.mxu0 %v6248
    %6381 = vmatpush2.bf16.msra.mxu0 %v6247
    %6382 = vmatprep.subr.bf16.mxu0 %v6246
    %6383 = vmatpush2.bf16.msra.mxu0 %v6245
    %6384 = vmatprep.subr.bf16.mxu0 %v6244
    %6385 = vmatpush2.bf16.msra.mxu0 %v6243
    %6386 = vmatprep.subr.bf16.mxu0 %v6242
    %6387 = vmatpush2.bf16.msra.mxu0 %v6241
    %6388 = vmatprep.subr.bf16.mxu0 %v6240
    %6389 = vmatpush2.bf16.msra.mxu0 %v6239
    %6390 = vmatprep.subr.bf16.mxu0 %v6238
    %6391 = vmatpush2.bf16.msra.mxu0 %v6237
    %6392 = vmatprep.mubr.bf16.mxu0 %v5920
    %6393 = vmatmul.mubr.bf16.gmra.mxu0 %v5919
    %v6394 = vpop.f32.mrf.mxu0
    %v6395 = vadd.f32 %v6352, %v6394
    %v6396 = vpop.f32.mrf.mxu0
    %v6397 = vadd.f32 %v6354, %v6396
    %v6398 = vpop.f32.mrf.mxu0
    %v6399 = vadd.f32 %v6356, %v6398
    %v6400 = vpop.f32.mrf.mxu0
    %v6401 = vadd.f32 %v6358, %v6400
    %6402 = vdwg.mxu0
    %v6403 = vmax.f32 %v6395, 0.0
    %v6404 = vmax.f32 %v6397, 0.0
    %v6405 = vmax.f32 %v6399, 0.0
    %v6406 = vmax.f32 %v6401, 0.0
    %v6407 = vpack.c.bf16 %v6405, %v6403
    %v6408 = vpack.c.bf16 %v6406, %v6404
    %v6409 = vld [vmem:[#allocation9] sm:$0xf]
    %v6410 = vld [vmem:[#allocation9 + $0x4] sm:$0xf]
    %v6411 = vld [vmem:[#allocation9 + $0x8] sm:$0xf]
    %v6412 = vld [vmem:[#allocation9 + $0xc] sm:$0xf]
    %v6413 = vld [vmem:[#allocation9 + $0x10] sm:$0xf]
    %v6414 = vld [vmem:[#allocation9 + $0x14] sm:$0xf]
    %v6415 = vld [vmem:[#allocation9 + $0x18] sm:$0xf]
    %v6416 = vld [vmem:[#allocation9 + $0x1c] sm:$0xf]
    %v6417 = vld [vmem:[#allocation9 + $0x20] sm:$0xf]
    %v6418 = vld [vmem:[#allocation9 + $0x24] sm:$0xf]
    %v6419 = vld [vmem:[#allocation9 + $0x28] sm:$0xf]
    %v6420 = vld [vmem:[#allocation9 + $0x2c] sm:$0xf]
    %v6421 = vld [vmem:[#allocation9 + $0x30] sm:$0xf]
    %v6422 = vld [vmem:[#allocation9 + $0x34] sm:$0xf]
    %v6423 = vld [vmem:[#allocation9 + $0x38] sm:$0xf]
    %v6424 = vld [vmem:[#allocation9 + $0x3c] sm:$0xf]
    %v6425 = vld [vmem:[#allocation9 + $0x40] sm:$0xf]
    %v6426 = vld [vmem:[#allocation9 + $0x44] sm:$0xf]
    %v6427 = vld [vmem:[#allocation9 + $0x48] sm:$0xf]
    %v6428 = vld [vmem:[#allocation9 + $0x4c] sm:$0xf]
    %v6429 = vld [vmem:[#allocation9 + $0x50] sm:$0xf]
    %v6430 = vld [vmem:[#allocation9 + $0x54] sm:$0xf]
    %v6431 = vld [vmem:[#allocation9 + $0x58] sm:$0xf]
    %v6432 = vld [vmem:[#allocation9 + $0x5c] sm:$0xf]
    %v6433 = vld [vmem:[#allocation9 + $0x60] sm:$0xf]
    %v6434 = vld [vmem:[#allocation9 + $0x64] sm:$0xf]
    %v6435 = vld [vmem:[#allocation9 + $0x68] sm:$0xf]
    %v6436 = vld [vmem:[#allocation9 + $0x6c] sm:$0xf]
    %v6437 = vld [vmem:[#allocation9 + $0x70] sm:$0xf]
    %v6438 = vld [vmem:[#allocation9 + $0x74] sm:$0xf]
    %v6439 = vld [vmem:[#allocation9 + $0x78] sm:$0xf]
    %v6440 = vld [vmem:[#allocation9 + $0x7c] sm:$0xf]
    %v6441 = vld [vmem:[#allocation10] sm:$0x1]
    %v6443 = vlaneseq
    %v6444 = vshrl.u32 %v6443, 7
    %v6445 = vsub.s32 0, %v6444
    %v6446 = vrot.slane %v6441, %v6445
    %v6480 = vunpack.c.l.b16 %v6409
    %v6481 = vunpack.c.l.b16 %v6410
    %v6482 = vunpack.c.l.b16 %v6411
    %v6483 = vunpack.c.l.b16 %v6412
    %v6484 = vunpack.c.l.b16 %v6413
    %v6485 = vunpack.c.l.b16 %v6414
    %v6486 = vunpack.c.l.b16 %v6415
    %v6487 = vunpack.c.l.b16 %v6416
    %v6488 = vunpack.c.l.b16 %v6417
    %v6489 = vunpack.c.l.b16 %v6418
    %v6490 = vunpack.c.l.b16 %v6419
    %v6491 = vunpack.c.l.b16 %v6420
    %v6492 = vunpack.c.l.b16 %v6421
    %v6493 = vunpack.c.l.b16 %v6422
    %v6494 = vunpack.c.l.b16 %v6423
    %v6495 = vunpack.c.l.b16 %v6424
    %v6496 = vunpack.c.l.b16 %v6425
    %v6497 = vunpack.c.l.b16 %v6426
    %v6498 = vunpack.c.l.b16 %v6427
    %v6499 = vunpack.c.l.b16 %v6428
    %v6500 = vunpack.c.l.b16 %v6429
    %v6501 = vunpack.c.l.b16 %v6430
    %v6502 = vunpack.c.l.b16 %v6431
    %v6503 = vunpack.c.l.b16 %v6432
    %v6504 = vunpack.c.l.b16 %v6433
    %v6505 = vunpack.c.l.b16 %v6434
    %v6506 = vunpack.c.l.b16 %v6435
    %v6507 = vunpack.c.l.b16 %v6436
    %v6508 = vunpack.c.l.b16 %v6437
    %v6509 = vunpack.c.l.b16 %v6438
    %v6510 = vunpack.c.l.b16 %v6439
    %v6511 = vunpack.c.l.b16 %v6440
    %v6512 = vpack.c.b16 %v6481, %v6480
    %v6513 = vpack.c.b16 %v6483, %v6482
    %v6514 = vpack.c.b16 %v6485, %v6484
    %v6515 = vpack.c.b16 %v6487, %v6486
    %v6516 = vpack.c.b16 %v6489, %v6488
    %v6517 = vpack.c.b16 %v6491, %v6490
    %v6518 = vpack.c.b16 %v6493, %v6492
    %v6519 = vpack.c.b16 %v6495, %v6494
    %v6520 = vpack.c.b16 %v6497, %v6496
    %v6521 = vpack.c.b16 %v6499, %v6498
    %v6522 = vpack.c.b16 %v6501, %v6500
    %v6523 = vpack.c.b16 %v6503, %v6502
    %v6524 = vpack.c.b16 %v6505, %v6504
    %v6525 = vpack.c.b16 %v6507, %v6506
    %v6526 = vpack.c.b16 %v6509, %v6508
    %v6527 = vpack.c.b16 %v6511, %v6510
    %6544 = vmatprep.subr.bf16.mxu0 0
    %6545 = vmatpush1.bf16.msra.mxu0 %v6519
    %6546 = vmatprep.subr.bf16.mxu0 0
    %6547 = vmatpush1.bf16.msra.mxu0 %v6518
    %6548 = vmatprep.subr.bf16.mxu0 0
    %6549 = vmatpush1.bf16.msra.mxu0 %v6517
    %6550 = vmatprep.subr.bf16.mxu0 0
    %6551 = vmatpush1.bf16.msra.mxu0 %v6516
    %6552 = vmatprep.subr.bf16.mxu0 0
    %6553 = vmatpush1.bf16.msra.mxu0 %v6515
    %6554 = vmatprep.subr.bf16.mxu0 0
    %6555 = vmatpush1.bf16.msra.mxu0 %v6514
    %6556 = vmatprep.subr.bf16.mxu0 0
    %6557 = vmatpush1.bf16.msra.mxu0 %v6513
    %6558 = vmatprep.subr.bf16.mxu0 0
    %6559 = vmatpush1.bf16.msra.mxu0 %v6512
    %6560 = vmatprep.subr.bf16.mxu0 0
    %6561 = vmatpush2.bf16.msra.mxu0 %v6527
    %6562 = vmatprep.subr.bf16.mxu0 0
    %6563 = vmatpush2.bf16.msra.mxu0 %v6526
    %6564 = vmatprep.subr.bf16.mxu0 0
    %6565 = vmatpush2.bf16.msra.mxu0 %v6525
    %6566 = vmatprep.subr.bf16.mxu0 0
    %6567 = vmatpush2.bf16.msra.mxu0 %v6524
    %6568 = vmatprep.subr.bf16.mxu0 0
    %6569 = vmatpush2.bf16.msra.mxu0 %v6523
    %6570 = vmatprep.subr.bf16.mxu0 0
    %6571 = vmatpush2.bf16.msra.mxu0 %v6522
    %6572 = vmatprep.subr.bf16.mxu0 0
    %6573 = vmatpush2.bf16.msra.mxu0 %v6521
    %6574 = vmatprep.subr.bf16.mxu0 0
    %6575 = vmatpush2.bf16.msra.mxu0 %v6520
    %6576 = vmatprep.mubr.bf16.mxu0 %v6408
    %6577 = vmatmul.mubr.bf16.gmra.mxu0 %v6407
    %v6578 = vpop.f32.mrf.mxu0
    %v6579 = vadd.f32 %v6446, %v6578
    %v6580 = vpop.f32.mrf.mxu0
    %v6581 = vpop.f32.mrf.mxu0
    %v6582 = vadd.f32 %v6446, %v6581
    %v6583 = vpop.f32.mrf.mxu0
    %6584 = vdwg.mxu0
    %6585 = vst [vmem:[%s7] sm:$0xff] %v6579
    %6586 = vst [vmem:[%s7 + $0x8] sm:$0xff] %v6582
    // Predicated region
    $region54: #{rbf_classifier_forward.1} parent=1 // pred_check
      _
    $region55: #{rbf_classifier_forward.1} parent=1 // pred_check_branch
      %6588 = sbr.rel (0) target = $region57
    $region56: #{rbf_classifier_forward.1} parent=1 // pred_region
      _
    $region57: #{rbf_classifier_forward.1} parent=1 // pred_fallthru
      _
    // Predicated region
    $region58: #{rbf_classifier_forward.1} parent=1 // pred_check
      _
    $region59: #{rbf_classifier_forward.1} parent=1 // pred_check_branch
      %6590 = sbr.rel (0) target = $region61
    $region60: #{rbf_classifier_forward.1} parent=1 // pred_region
      _
    $region61: #{rbf_classifier_forward.1} parent=1 // pred_fallthru
      _
    %6591 = vsyncpa [#allocation3], 1
    %6592 = vsyncpa [#allocation5], 1
    %6593 = vsyncpa [#allocation8], 1
    %6594 = vsyncpa [#allocation11], 1

</llo_original>
